<compile_context>
chip_gen: v5e
topology: v5e:2x2
jax: 0.10.0
libtpu: 0.0.40
codegen_flags: <defaults>
</compile_context>

<pallas_src>
import jax
import jax.numpy as jnp
from jax import lax
from jax.experimental import pallas as pl
from jax.experimental.pallas import tpu as pltpu

NEG_SLOPE = 0.2
B_TILE = 8          # images per grid step


def _leaky_relu(x):
    return jnp.where(x >= 0, x, NEG_SLOPE * x)


# ---------------------------- Pallas kernel ----------------------------

def fused_disc_kernel(p_ref, w1_ref, b1_ref, w2_ref, b2_ref, wf_ref, bf_ref, o_ref):
    """Whole Discriminator forward for one batch tile.

    p_ref : (B_TILE*49, 16)  -- 4x4 input blocks, one row per conv2 output pixel
    w1_ref: (16, 256)        -- conv1 weight, block-diagonal x4 (emits im2col of conv2)
    b1_ref: (1, 256)         -- conv1 bias tiled x4
    w2_ref: (256, 128), b2_ref: (1, 128)
    wf_ref: (1152, 1), bf_ref: (1, 1)  -- FC weight pre-permuted for (oy, ox, c) order
    o_ref : (B_TILE, 1)
    """
    bt = o_ref.shape[0]

    # conv1 (k=2, s=2) + LeakyReLU.  Output columns are ordered
    # (dy2, dx2, c) == exactly the im2col layout conv2 needs.
    h1 = jnp.dot(p_ref[...], w1_ref[...], preferred_element_type=jnp.float32)
    h1 = _leaky_relu(h1 + b1_ref[...])                       # (bt*49, 256)

    # conv2 (k=2, s=2) + LeakyReLU -- one big MXU matmul per tile.
    y2 = jnp.dot(h1, w2_ref[...], preferred_element_type=jnp.float32)
    y2 = _leaky_relu(y2 + b2_ref[...])                       # (bt*49, 128)
    y2r = y2.reshape(bt, 7, 7, 128)                          # (b, i, j, c)

    # MaxPool2d(3, 3, stride=2): separable, on lane-dense (bt, 7, 128) slabs.
    wp = []
    for ox in range(3):                                      # pool along width
        m = jnp.maximum(y2r[:, :, 2 * ox, :], y2r[:, :, 2 * ox + 1, :])
        wp.append(jnp.maximum(m, y2r[:, :, 2 * ox + 2, :]))  # (bt, 7, 128)
    pooled = []
    for oy in range(3):                                      # pool along height
        for ox in range(3):
            col = wp[ox]
            m = jnp.maximum(col[:, 2 * oy, :], col[:, 2 * oy + 1, :])
            pooled.append(jnp.maximum(m, col[:, 2 * oy + 2, :]))   # (bt, 128)

    # Flatten in (oy, ox, c) order (FC weight was permuted to match) + FC + sigmoid.
    flat = jnp.concatenate(pooled, axis=-1)                  # (bt, 1152)
    logit = jnp.dot(flat, wf_ref[...], preferred_element_type=jnp.float32) + bf_ref[...]
    o_ref[...] = 1.0 / (1.0 + jnp.exp(-logit))


# ------------------------------ JAX glue ------------------------------

def init_params(key):
    k = jax.random.split(key, 6)
    return {
        "w1": jax.random.normal(k[0], (64, 1, 2, 2), jnp.float32) * 0.10,    # Conv2d(1, 64, 2, s=2)
        "b1": jax.random.normal(k[1], (64,), jnp.float32) * 0.10,
        "w2": jax.random.normal(k[2], (128, 64, 2, 2), jnp.float32) * 0.05,  # Conv2d(64, 128, 2, s=2)
        "b2": jax.random.normal(k[3], (128,), jnp.float32) * 0.05,
        "wf": jax.random.normal(k[4], (1, 1152), jnp.float32) * 0.02,        # Linear(1152, 1)
        "bf": jax.random.normal(k[5], (1,), jnp.float32) * 0.02,
    }


@jax.jit
def discriminator_forward(images, params):
    """images: (N, 1, 28, 28) float32, NCHW like the PyTorch module (eval mode)."""
    n = images.shape[0]
    x = images.reshape(n, 28, 28)                            # single input channel

    # One row per conv2 output pixel (i, j): the 4x4 input block at (4i, 4j),
    # column order (dy2, dx2, dy1, dx1).
    p = x.reshape(n, 7, 2, 2, 7, 2, 2)                       # (n, i, dy2, dy1, j, dx2, dx1)
    p = p.transpose(0, 1, 4, 2, 5, 3, 6)                     # (n, i, j, dy2, dx2, dy1, dx1)
    p16 = p.reshape(n * 49, 16)

    # conv1 weight as (dy1, dx1) x c_out, embedded block-diagonally so its output
    # columns come out in (dy2, dx2, c) order == conv2 im2col order.
    w1_mat = params["w1"].transpose(2, 3, 1, 0).reshape(4, 64)
    w1_blk = jnp.zeros((16, 256), jnp.float32)
    for s in range(4):
        w1_blk = w1_blk.at[s * 4:(s + 1) * 4, s * 64:(s + 1) * 64].set(w1_mat)
    b1t = jnp.tile(params["b1"].reshape(1, 64), (1, 4))      # (1, 256)

    w2_mat = params["w2"].transpose(2, 3, 1, 0).reshape(256, 128)
    b2 = params["b2"].reshape(1, 128)

    # Fold the PyTorch NCHW-flatten permutation into the FC weight (free at trace time).
    wf_perm = params["wf"].reshape(128, 3, 3).transpose(1, 2, 0).reshape(1152, 1)
    bf = params["bf"].reshape(1, 1)

    # TODO(synk): Dropout(p=0.2) is implemented as eval-mode identity (inference path).

    n_tiles = pl.cdiv(n, B_TILE)
    n_pad = n_tiles * B_TILE
    if n_pad != n:
        p16 = jnp.pad(p16, ((0, (n_pad - n) * 49), (0, 0)))

    out = pl.pallas_call(
        fused_disc_kernel,
        out_shape=jax.ShapeDtypeStruct((n_pad, 1), jnp.float32),
        grid=(n_tiles,),
        in_specs=[
            pl.BlockSpec((B_TILE * 49, 16), lambda b: (b, 0)),
            pl.BlockSpec((16, 256), lambda b: (0, 0)),
            pl.BlockSpec((1, 256), lambda b: (0, 0)),
            pl.BlockSpec((256, 128), lambda b: (0, 0)),
            pl.BlockSpec((1, 128), lambda b: (0, 0)),
            pl.BlockSpec((1152, 1), lambda b: (0, 0)),
            pl.BlockSpec((1, 1), lambda b: (0, 0)),
        ],
        out_specs=pl.BlockSpec((B_TILE, 1), lambda b: (b, 0)),
        compiler_params=pltpu.CompilerParams(dimension_semantics=("parallel",)),
    )(p16, w1_blk, b1t, w2_mat, b2, wf_perm, bf)

    # Matches .squeeze() for N > 1 (for N == 1 PyTorch would return a 0-d tensor).
    return out[:n].reshape(n)


def reference_forward(images, params):
    """Pure-JAX (XLA conv) reference of the PyTorch forward, eval mode."""
    dn = ("NCHW", "OIHW", "NCHW")
    y = lax.conv_general_dilated(images, params["w1"], (2, 2), "VALID",
                                 dimension_numbers=dn, precision=lax.Precision.HIGHEST)
    y = _leaky_relu(y + params["b1"].reshape(1, 64, 1, 1))
    y = lax.conv_general_dilated(y, params["w2"], (2, 2), "VALID",
                                 dimension_numbers=dn, precision=lax.Precision.HIGHEST)
    y = _leaky_relu(y + params["b2"].reshape(1, 128, 1, 1))
    y = lax.reduce_window(y, -jnp.inf, lax.max, (1, 1, 3, 3), (1, 1, 2, 2), "VALID")
    flat = y.reshape(y.shape[0], -1)
    out = jnp.dot(flat, params["wf"].T, precision=lax.Precision.HIGHEST) + params["bf"]
    return jax.nn.sigmoid(out).reshape(-1)


if __name__ == "__main__":
    img_size_in = 28   # forced by nn.Linear(1152, 1): 128 * 3 * 3 == 1152
    batch = 12         # non-multiple of B_TILE: exercises padding + a 2-step grid
    key = jax.random.PRNGKey(0)
    pkey, xkey = jax.random.split(key)
    params = init_params(pkey)
    images = jax.random.normal(xkey, (batch, 1, img_size_in, img_size_in), jnp.float32)

    out = discriminator_forward(images, params)
    out = jax.block_until_ready(out)

    ref = reference_forward(images, params)
    assert out.shape == (batch,), out.shape
    if not jnp.allclose(out, ref, atol=1e-3, rtol=1e-3):
        raise AssertionError(f"Pallas/reference mismatch:\n{out}\nvs\n{ref}")
    print("KERNEL_OK")
</pallas_src>

<mosaic_0001>
module attributes {stable_mosaic.version = 11 : i64} {
  func.func @fused_disc_kernel(%arg0: i32, %arg1: memref<392x16xf32, #tpu.memory_space<vmem>>, %arg2: memref<16x256xf32, #tpu.memory_space<vmem>>, %arg3: memref<1x256xf32, #tpu.memory_space<vmem>>, %arg4: memref<256x128xf32, #tpu.memory_space<vmem>>, %arg5: memref<1x128xf32, #tpu.memory_space<vmem>>, %arg6: memref<1152x1xf32, #tpu.memory_space<vmem>>, %arg7: memref<1x1xf32, #tpu.memory_space<vmem>>, %arg8: memref<8x1xf32, #tpu.memory_space<vmem>>) attributes {dimension_semantics = [#tpu.dimension_semantics<parallel>], iteration_bounds = array<i64: 2>, scalar_prefetch = 0 : i64, scratch_operands = 0 : i64, tpu.core_type = #tpu.core_type<tc>, window_params = [{transform_indices = @transform_0, window_bounds = array<i64: 392, 16>}, {pipeline_mode = #tpu.pipeline_mode<synchronous>, transform_indices = @transform_1, window_bounds = array<i64: 16, 256>}, {pipeline_mode = #tpu.pipeline_mode<synchronous>, transform_indices = @transform_2, window_bounds = array<i64: 1, 256>}, {pipeline_mode = #tpu.pipeline_mode<synchronous>, transform_indices = @transform_3, window_bounds = array<i64: 256, 128>}, {pipeline_mode = #tpu.pipeline_mode<synchronous>, transform_indices = @transform_4, window_bounds = array<i64: 1, 128>}, {pipeline_mode = #tpu.pipeline_mode<synchronous>, transform_indices = @transform_5, window_bounds = array<i64: 1152, 1>}, {pipeline_mode = #tpu.pipeline_mode<synchronous>, transform_indices = @transform_6, window_bounds = array<i64: 1, 1>}, {transform_indices = @transform_7, window_bounds = array<i64: 8, 1>}]} {
    %c0 = arith.constant 0 : index
    %c0_0 = arith.constant 0 : index
    %0 = vector.load %arg1[%c0, %c0_0] : memref<392x16xf32, #tpu.memory_space<vmem>>, vector<392x16xf32>
    %c0_1 = arith.constant 0 : index
    %c0_2 = arith.constant 0 : index
    %1 = vector.load %arg2[%c0_1, %c0_2] : memref<16x256xf32, #tpu.memory_space<vmem>>, vector<16x256xf32>
    %cst = arith.constant dense<0.000000e+00> : vector<392x256xf32>
    %2 = tpu.matmul %0, %1, %cst {dimension_numbers = #tpu.dot_dimension_numbers<[1], [0], [0], [1], [0, 0, 1, 1], [], []>} : vector<392x16xf32>, vector<16x256xf32>, vector<392x256xf32> -> vector<392x256xf32>
    %c0_3 = arith.constant 0 : index
    %c0_4 = arith.constant 0 : index
    %3 = vector.load %arg3[%c0_3, %c0_4] : memref<1x256xf32, #tpu.memory_space<vmem>>, vector<1x256xf32>
    %4 = vector.broadcast %3 : vector<1x256xf32> to vector<392x256xf32>
    %5 = arith.addf %2, %4 : vector<392x256xf32>
    %cst_5 = arith.constant 0.000000e+00 : f32
    %6 = vector.broadcast %cst_5 : f32 to vector<392x256xf32>
    %7 = arith.cmpf oge, %5, %6 : vector<392x256xf32>
    %cst_6 = arith.constant 2.000000e-01 : f32
    %8 = vector.broadcast %cst_6 : f32 to vector<392x256xf32>
    %9 = arith.mulf %8, %5 : vector<392x256xf32>
    %10 = arith.select %7, %5, %9 : vector<392x256xi1>, vector<392x256xf32>
    %c0_7 = arith.constant 0 : index
    %c0_8 = arith.constant 0 : index
    %11 = vector.load %arg4[%c0_7, %c0_8] : memref<256x128xf32, #tpu.memory_space<vmem>>, vector<256x128xf32>
    %cst_9 = arith.constant dense<0.000000e+00> : vector<392x128xf32>
    %12 = tpu.matmul %10, %11, %cst_9 {dimension_numbers = #tpu.dot_dimension_numbers<[1], [0], [0], [1], [0, 0, 1, 1], [], []>} : vector<392x256xf32>, vector<256x128xf32>, vector<392x128xf32> -> vector<392x128xf32>
    %c0_10 = arith.constant 0 : index
    %c0_11 = arith.constant 0 : index
    %13 = vector.load %arg5[%c0_10, %c0_11] : memref<1x128xf32, #tpu.memory_space<vmem>>, vector<1x128xf32>
    %14 = vector.broadcast %13 : vector<1x128xf32> to vector<392x128xf32>
    %15 = arith.addf %12, %14 : vector<392x128xf32>
    %cst_12 = arith.constant 0.000000e+00 : f32
    %16 = vector.broadcast %cst_12 : f32 to vector<392x128xf32>
    %17 = arith.cmpf oge, %15, %16 : vector<392x128xf32>
    %cst_13 = arith.constant 2.000000e-01 : f32
    %18 = vector.broadcast %cst_13 : f32 to vector<392x128xf32>
    %19 = arith.mulf %18, %15 : vector<392x128xf32>
    %20 = arith.select %17, %15, %19 : vector<392x128xi1>, vector<392x128xf32>
    %21 = vector.shape_cast %20 : vector<392x128xf32> to vector<8x7x7x128xf32>
    %22 = vector.extract_strided_slice %21 {offsets = [0, 0, 0, 0], sizes = [8, 7, 1, 128], strides = [1, 1, 1, 1]} : vector<8x7x7x128xf32> to vector<8x7x1x128xf32>
    %23 = vector.shape_cast %22 : vector<8x7x1x128xf32> to vector<8x7x128xf32>
    %24 = vector.extract_strided_slice %21 {offsets = [0, 0, 1, 0], sizes = [8, 7, 1, 128], strides = [1, 1, 1, 1]} : vector<8x7x7x128xf32> to vector<8x7x1x128xf32>
    %25 = vector.shape_cast %24 : vector<8x7x1x128xf32> to vector<8x7x128xf32>
    %26 = arith.maximumf %23, %25 : vector<8x7x128xf32>
    %27 = vector.extract_strided_slice %21 {offsets = [0, 0, 2, 0], sizes = [8, 7, 1, 128], strides = [1, 1, 1, 1]} : vector<8x7x7x128xf32> to vector<8x7x1x128xf32>
    %28 = vector.shape_cast %27 : vector<8x7x1x128xf32> to vector<8x7x128xf32>
    %29 = arith.maximumf %26, %28 : vector<8x7x128xf32>
    %30 = vector.extract_strided_slice %21 {offsets = [0, 0, 2, 0], sizes = [8, 7, 1, 128], strides = [1, 1, 1, 1]} : vector<8x7x7x128xf32> to vector<8x7x1x128xf32>
    %31 = vector.shape_cast %30 : vector<8x7x1x128xf32> to vector<8x7x128xf32>
    %32 = vector.extract_strided_slice %21 {offsets = [0, 0, 3, 0], sizes = [8, 7, 1, 128], strides = [1, 1, 1, 1]} : vector<8x7x7x128xf32> to vector<8x7x1x128xf32>
    %33 = vector.shape_cast %32 : vector<8x7x1x128xf32> to vector<8x7x128xf32>
    %34 = arith.maximumf %31, %33 : vector<8x7x128xf32>
    %35 = vector.extract_strided_slice %21 {offsets = [0, 0, 4, 0], sizes = [8, 7, 1, 128], strides = [1, 1, 1, 1]} : vector<8x7x7x128xf32> to vector<8x7x1x128xf32>
    %36 = vector.shape_cast %35 : vector<8x7x1x128xf32> to vector<8x7x128xf32>
    %37 = arith.maximumf %34, %36 : vector<8x7x128xf32>
    %38 = vector.extract_strided_slice %21 {offsets = [0, 0, 4, 0], sizes = [8, 7, 1, 128], strides = [1, 1, 1, 1]} : vector<8x7x7x128xf32> to vector<8x7x1x128xf32>
    %39 = vector.shape_cast %38 : vector<8x7x1x128xf32> to vector<8x7x128xf32>
    %40 = vector.extract_strided_slice %21 {offsets = [0, 0, 5, 0], sizes = [8, 7, 1, 128], strides = [1, 1, 1, 1]} : vector<8x7x7x128xf32> to vector<8x7x1x128xf32>
    %41 = vector.shape_cast %40 : vector<8x7x1x128xf32> to vector<8x7x128xf32>
    %42 = arith.maximumf %39, %41 : vector<8x7x128xf32>
    %43 = vector.extract_strided_slice %21 {offsets = [0, 0, 6, 0], sizes = [8, 7, 1, 128], strides = [1, 1, 1, 1]} : vector<8x7x7x128xf32> to vector<8x7x1x128xf32>
    %44 = vector.shape_cast %43 : vector<8x7x1x128xf32> to vector<8x7x128xf32>
    %45 = arith.maximumf %42, %44 : vector<8x7x128xf32>
    %46 = vector.extract_strided_slice %29 {offsets = [0, 0, 0], sizes = [8, 1, 128], strides = [1, 1, 1]} : vector<8x7x128xf32> to vector<8x1x128xf32>
    %47 = vector.shape_cast %46 : vector<8x1x128xf32> to vector<8x128xf32>
    %48 = vector.extract_strided_slice %29 {offsets = [0, 1, 0], sizes = [8, 1, 128], strides = [1, 1, 1]} : vector<8x7x128xf32> to vector<8x1x128xf32>
    %49 = vector.shape_cast %48 : vector<8x1x128xf32> to vector<8x128xf32>
    %50 = arith.maximumf %47, %49 : vector<8x128xf32>
    %51 = vector.extract_strided_slice %29 {offsets = [0, 2, 0], sizes = [8, 1, 128], strides = [1, 1, 1]} : vector<8x7x128xf32> to vector<8x1x128xf32>
    %52 = vector.shape_cast %51 : vector<8x1x128xf32> to vector<8x128xf32>
    %53 = arith.maximumf %50, %52 : vector<8x128xf32>
    %54 = vector.extract_strided_slice %37 {offsets = [0, 0, 0], sizes = [8, 1, 128], strides = [1, 1, 1]} : vector<8x7x128xf32> to vector<8x1x128xf32>
    %55 = vector.shape_cast %54 : vector<8x1x128xf32> to vector<8x128xf32>
    %56 = vector.extract_strided_slice %37 {offsets = [0, 1, 0], sizes = [8, 1, 128], strides = [1, 1, 1]} : vector<8x7x128xf32> to vector<8x1x128xf32>
    %57 = vector.shape_cast %56 : vector<8x1x128xf32> to vector<8x128xf32>
    %58 = arith.maximumf %55, %57 : vector<8x128xf32>
    %59 = vector.extract_strided_slice %37 {offsets = [0, 2, 0], sizes = [8, 1, 128], strides = [1, 1, 1]} : vector<8x7x128xf32> to vector<8x1x128xf32>
    %60 = vector.shape_cast %59 : vector<8x1x128xf32> to vector<8x128xf32>
    %61 = arith.maximumf %58, %60 : vector<8x128xf32>
    %62 = vector.extract_strided_slice %45 {offsets = [0, 0, 0], sizes = [8, 1, 128], strides = [1, 1, 1]} : vector<8x7x128xf32> to vector<8x1x128xf32>
    %63 = vector.shape_cast %62 : vector<8x1x128xf32> to vector<8x128xf32>
    %64 = vector.extract_strided_slice %45 {offsets = [0, 1, 0], sizes = [8, 1, 128], strides = [1, 1, 1]} : vector<8x7x128xf32> to vector<8x1x128xf32>
    %65 = vector.shape_cast %64 : vector<8x1x128xf32> to vector<8x128xf32>
    %66 = arith.maximumf %63, %65 : vector<8x128xf32>
    %67 = vector.extract_strided_slice %45 {offsets = [0, 2, 0], sizes = [8, 1, 128], strides = [1, 1, 1]} : vector<8x7x128xf32> to vector<8x1x128xf32>
    %68 = vector.shape_cast %67 : vector<8x1x128xf32> to vector<8x128xf32>
    %69 = arith.maximumf %66, %68 : vector<8x128xf32>
    %70 = vector.extract_strided_slice %29 {offsets = [0, 2, 0], sizes = [8, 1, 128], strides = [1, 1, 1]} : vector<8x7x128xf32> to vector<8x1x128xf32>
    %71 = vector.shape_cast %70 : vector<8x1x128xf32> to vector<8x128xf32>
    %72 = vector.extract_strided_slice %29 {offsets = [0, 3, 0], sizes = [8, 1, 128], strides = [1, 1, 1]} : vector<8x7x128xf32> to vector<8x1x128xf32>
    %73 = vector.shape_cast %72 : vector<8x1x128xf32> to vector<8x128xf32>
    %74 = arith.maximumf %71, %73 : vector<8x128xf32>
    %75 = vector.extract_strided_slice %29 {offsets = [0, 4, 0], sizes = [8, 1, 128], strides = [1, 1, 1]} : vector<8x7x128xf32> to vector<8x1x128xf32>
    %76 = vector.shape_cast %75 : vector<8x1x128xf32> to vector<8x128xf32>
    %77 = arith.maximumf %74, %76 : vector<8x128xf32>
    %78 = vector.extract_strided_slice %37 {offsets = [0, 2, 0], sizes = [8, 1, 128], strides = [1, 1, 1]} : vector<8x7x128xf32> to vector<8x1x128xf32>
    %79 = vector.shape_cast %78 : vector<8x1x128xf32> to vector<8x128xf32>
    %80 = vector.extract_strided_slice %37 {offsets = [0, 3, 0], sizes = [8, 1, 128], strides = [1, 1, 1]} : vector<8x7x128xf32> to vector<8x1x128xf32>
    %81 = vector.shape_cast %80 : vector<8x1x128xf32> to vector<8x128xf32>
    %82 = arith.maximumf %79, %81 : vector<8x128xf32>
    %83 = vector.extract_strided_slice %37 {offsets = [0, 4, 0], sizes = [8, 1, 128], strides = [1, 1, 1]} : vector<8x7x128xf32> to vector<8x1x128xf32>
    %84 = vector.shape_cast %83 : vector<8x1x128xf32> to vector<8x128xf32>
    %85 = arith.maximumf %82, %84 : vector<8x128xf32>
    %86 = vector.extract_strided_slice %45 {offsets = [0, 2, 0], sizes = [8, 1, 128], strides = [1, 1, 1]} : vector<8x7x128xf32> to vector<8x1x128xf32>
    %87 = vector.shape_cast %86 : vector<8x1x128xf32> to vector<8x128xf32>
    %88 = vector.extract_strided_slice %45 {offsets = [0, 3, 0], sizes = [8, 1, 128], strides = [1, 1, 1]} : vector<8x7x128xf32> to vector<8x1x128xf32>
    %89 = vector.shape_cast %88 : vector<8x1x128xf32> to vector<8x128xf32>
    %90 = arith.maximumf %87, %89 : vector<8x128xf32>
    %91 = vector.extract_strided_slice %45 {offsets = [0, 4, 0], sizes = [8, 1, 128], strides = [1, 1, 1]} : vector<8x7x128xf32> to vector<8x1x128xf32>
    %92 = vector.shape_cast %91 : vector<8x1x128xf32> to vector<8x128xf32>
    %93 = arith.maximumf %90, %92 : vector<8x128xf32>
    %94 = vector.extract_strided_slice %29 {offsets = [0, 4, 0], sizes = [8, 1, 128], strides = [1, 1, 1]} : vector<8x7x128xf32> to vector<8x1x128xf32>
    %95 = vector.shape_cast %94 : vector<8x1x128xf32> to vector<8x128xf32>
    %96 = vector.extract_strided_slice %29 {offsets = [0, 5, 0], sizes = [8, 1, 128], strides = [1, 1, 1]} : vector<8x7x128xf32> to vector<8x1x128xf32>
    %97 = vector.shape_cast %96 : vector<8x1x128xf32> to vector<8x128xf32>
    %98 = arith.maximumf %95, %97 : vector<8x128xf32>
    %99 = vector.extract_strided_slice %29 {offsets = [0, 6, 0], sizes = [8, 1, 128], strides = [1, 1, 1]} : vector<8x7x128xf32> to vector<8x1x128xf32>
    %100 = vector.shape_cast %99 : vector<8x1x128xf32> to vector<8x128xf32>
    %101 = arith.maximumf %98, %100 : vector<8x128xf32>
    %102 = vector.extract_strided_slice %37 {offsets = [0, 4, 0], sizes = [8, 1, 128], strides = [1, 1, 1]} : vector<8x7x128xf32> to vector<8x1x128xf32>
    %103 = vector.shape_cast %102 : vector<8x1x128xf32> to vector<8x128xf32>
    %104 = vector.extract_strided_slice %37 {offsets = [0, 5, 0], sizes = [8, 1, 128], strides = [1, 1, 1]} : vector<8x7x128xf32> to vector<8x1x128xf32>
    %105 = vector.shape_cast %104 : vector<8x1x128xf32> to vector<8x128xf32>
    %106 = arith.maximumf %103, %105 : vector<8x128xf32>
    %107 = vector.extract_strided_slice %37 {offsets = [0, 6, 0], sizes = [8, 1, 128], strides = [1, 1, 1]} : vector<8x7x128xf32> to vector<8x1x128xf32>
    %108 = vector.shape_cast %107 : vector<8x1x128xf32> to vector<8x128xf32>
    %109 = arith.maximumf %106, %108 : vector<8x128xf32>
    %110 = vector.extract_strided_slice %45 {offsets = [0, 4, 0], sizes = [8, 1, 128], strides = [1, 1, 1]} : vector<8x7x128xf32> to vector<8x1x128xf32>
    %111 = vector.shape_cast %110 : vector<8x1x128xf32> to vector<8x128xf32>
    %112 = vector.extract_strided_slice %45 {offsets = [0, 5, 0], sizes = [8, 1, 128], strides = [1, 1, 1]} : vector<8x7x128xf32> to vector<8x1x128xf32>
    %113 = vector.shape_cast %112 : vector<8x1x128xf32> to vector<8x128xf32>
    %114 = arith.maximumf %111, %113 : vector<8x128xf32>
    %115 = vector.extract_strided_slice %45 {offsets = [0, 6, 0], sizes = [8, 1, 128], strides = [1, 1, 1]} : vector<8x7x128xf32> to vector<8x1x128xf32>
    %116 = vector.shape_cast %115 : vector<8x1x128xf32> to vector<8x128xf32>
    %117 = arith.maximumf %114, %116 : vector<8x128xf32>
    %118 = tpu.concatenate %53, %61, %69, %77, %85, %93, %101, %109, %117 in 1 : vector<8x128xf32>, vector<8x128xf32>, vector<8x128xf32>, vector<8x128xf32>, vector<8x128xf32>, vector<8x128xf32>, vector<8x128xf32>, vector<8x128xf32>, vector<8x128xf32> -> vector<8x1152xf32>
    %c0_14 = arith.constant 0 : index
    %c0_15 = arith.constant 0 : index
    %119 = vector.load %arg6[%c0_14, %c0_15] : memref<1152x1xf32, #tpu.memory_space<vmem>>, vector<1152x1xf32>
    %cst_16 = arith.constant dense<0.000000e+00> : vector<8x1xf32>
    %120 = tpu.matmul %118, %119, %cst_16 {dimension_numbers = #tpu.dot_dimension_numbers<[1], [0], [0], [1], [0, 0, 1, 1], [], []>} : vector<8x1152xf32>, vector<1152x1xf32>, vector<8x1xf32> -> vector<8x1xf32>
    %c0_17 = arith.constant 0 : index
    %c0_18 = arith.constant 0 : index
    %121 = vector.load %arg7[%c0_17, %c0_18] : memref<1x1xf32, #tpu.memory_space<vmem>>, vector<1x1xf32>
    %122 = vector.broadcast %121 : vector<1x1xf32> to vector<8x1xf32>
    %123 = arith.addf %120, %122 : vector<8x1xf32>
    %cst_19 = arith.constant 0.000000e+00 : f32
    %124 = vector.broadcast %cst_19 : f32 to vector<8x1xf32>
    %125 = arith.subf %124, %123 : vector<8x1xf32>
    %126 = math.exp %125 : vector<8x1xf32>
    %cst_20 = arith.constant 1.000000e+00 : f32
    %127 = vector.broadcast %cst_20 : f32 to vector<8x1xf32>
    %128 = arith.addf %127, %126 : vector<8x1xf32>
    %cst_21 = arith.constant 1.000000e+00 : f32
    %129 = vector.broadcast %cst_21 : f32 to vector<8x1xf32>
    %130 = arith.divf %129, %128 : vector<8x1xf32>
    %c0_22 = arith.constant 0 : index
    %c0_23 = arith.constant 0 : index
    %131 = vector.load %arg8[%c0_22, %c0_23] : memref<8x1xf32, #tpu.memory_space<vmem>>, vector<8x1xf32>
    tpu.vector_store %arg8[%c0_22, %c0_23], %130 {strides = array<i32>} : memref<8x1xf32, #tpu.memory_space<vmem>>, vector<8x1xf32>,
    return
  }
  func.func @transform_0(%arg0: i32) -> (i32, i32) {
    %c0_i32 = arith.constant 0 : i32
    %c0_i32_0 = arith.constant 0 : i32
    return %arg0, %c0_i32 : i32, i32
  }
  func.func @transform_1(%arg0: i32) -> (i32, i32) {
    %c0_i32 = arith.constant 0 : i32
    %c0_i32_0 = arith.constant 0 : i32
    %c0_i32_1 = arith.constant 0 : i32
    return %c0_i32, %c0_i32_0 : i32, i32
  }
  func.func @transform_2(%arg0: i32) -> (i32, i32) {
    %c0_i32 = arith.constant 0 : i32
    %c0_i32_0 = arith.constant 0 : i32
    %c0_i32_1 = arith.constant 0 : i32
    return %c0_i32, %c0_i32_0 : i32, i32
  }
  func.func @transform_3(%arg0: i32) -> (i32, i32) {
    %c0_i32 = arith.constant 0 : i32
    %c0_i32_0 = arith.constant 0 : i32
    %c0_i32_1 = arith.constant 0 : i32
    return %c0_i32, %c0_i32_0 : i32, i32
  }
  func.func @transform_4(%arg0: i32) -> (i32, i32) {
    %c0_i32 = arith.constant 0 : i32
    %c0_i32_0 = arith.constant 0 : i32
    %c0_i32_1 = arith.constant 0 : i32
    return %c0_i32, %c0_i32_0 : i32, i32
  }
  func.func @transform_5(%arg0: i32) -> (i32, i32) {
    %c0_i32 = arith.constant 0 : i32
    %c0_i32_0 = arith.constant 0 : i32
    %c0_i32_1 = arith.constant 0 : i32
    return %c0_i32, %c0_i32_0 : i32, i32
  }
  func.func @transform_6(%arg0: i32) -> (i32, i32) {
    %c0_i32 = arith.constant 0 : i32
    %c0_i32_0 = arith.constant 0 : i32
    %c0_i32_1 = arith.constant 0 : i32
    return %c0_i32, %c0_i32_0 : i32, i32
  }
  func.func @transform_7(%arg0: i32) -> (i32, i32) {
    %c0_i32 = arith.constant 0 : i32
    %c0_i32_0 = arith.constant 0 : i32
    return %arg0, %c0_i32 : i32, i32
  }
}

</mosaic_0001>

<llo_original>
// kernel: discriminator_forward.1
$region0: #{discriminator_forward.1}
  #allocation0 [shape = 'u32[]', space=smem, size = 0x4, offset = 0x4, fixed_abs, tag = 'smem constant byte address 0x4 - core index']
  #allocation1 [shape = 'u32[72,128]{1,0:T(1,128)}', space=vmem, size = 0x9000, scoped, tag = 'internal scratch']
  #allocation2 [shape = 'f32[1,1]{1,0:T(1,128)S(1)}', space=vmem, size = 0x200, scoped, tag = 'scoped memory for discriminator_forward.1']
  %s0 = inlined_call_operand.vmem [shape: f32[784,16], index: 0, kind: input, shape index: {}]
  %s1 = inlined_call_operand.vmem [shape: f32[16,256], index: 1, kind: input, shape index: {}]
  %s2 = inlined_call_operand.vmem [shape: f32[1,256], index: 2, kind: input, shape index: {}]
  %s3 = inlined_call_operand.vmem [shape: f32[256,128], index: 3, kind: input, shape index: {}]
  %s4 = inlined_call_operand.vmem [shape: f32[1,128], index: 4, kind: input, shape index: {}]
  %s5 = inlined_call_operand.vmem [shape: f32[1152,1], index: 5, kind: input, shape index: {}]
  %s6 = inlined_call_operand.<no memory space> [shape: f32[1,1], index: 6, kind: input, shape index: {}]
  %s7 = inlined_call_operand.vmem [shape: f32[16,1], index: 7, kind: output, shape index: {}]
  %s8 = sld [smem:[#allocation0]]
  $region61: #{discriminator_forward.1} parent=0
    _
  %s10 = ssub.s32 1, %s8
  %s11 = scalar_select 0, %s10, %s8
  %v12 = vstv %s6
  %13 = vst [vmem:[#allocation2] sm:$0x1] %v12
  loop: start=0, step=1, limit=4
  $region2: #{discriminator_forward.1} parent=0 // loop_pre_header
    _
  $region3: #{discriminator_forward.1} parent=0 // loop_header
    %s15 = sphi 0, %s19
    %p16 = scmp.ge.s32.totalorder %s15, 4
    %s25 = sphi 0, %s27
    %s28 = sphi 0, %s25
    %s29 = sphi 0, %s28
    %s45 = sphi 0, %s29
    %s49 = sphi 0, %s49
    %s51 = sphi 0, %s49
    %s52 = sphi 0, %s51
    %s66 = sphi 0, %s52
    %s70 = sphi 0, %s70
    %s72 = sphi 0, %s70
    %s73 = sphi 0, %s72
    %s87 = sphi 0, %s73
    %s91 = sphi 0, %s91
    %s93 = sphi 0, %s91
    %s94 = sphi 0, %s93
    %s108 = sphi 0, %s94
    %s112 = sphi 0, %s112
    %s114 = sphi 0, %s112
    %s115 = sphi 0, %s114
    %s129 = sphi 0, %s115
    %s133 = sphi 0, %s133
    %s135 = sphi 0, %s133
    %s136 = sphi 0, %s135
    %s150 = sphi 0, %s136
    %s154 = sphi 0, %s154
    %s156 = sphi 0, %s154
    %s157 = sphi 0, %s156
    %s171 = sphi 0, %s157
    %s177 = sphi 0, %s179
    %s180 = sphi 0, %s177
    %s181 = sphi 0, %s180
    %s197 = sphi 0, %s181
  $region4: #{discriminator_forward.1} parent=0 // loop_header_branch
    %18 = sbr.rel (%p16) target = $region8
  $region5: #{discriminator_forward.1} parent=0 // loop_body
    %s20 = ssub.s32 %s15, 1
    %s21 = ssub.s32 %s15, 2
    %s22 = sadd.s32 %s15, 1
    %s23 = ssub.s32 %s15, %s22
    %p24 = scmp.eq.s32.totalorder %s23, 0
    %s26 = sadd.s32 %s25, 1
    %s27 = scalar_select %p24, %s25, %s26
    %p30 = pneg %p24
    %p31 = scmp.eq.s32.totalorder %s15, 1
    %p32 = por %p30, %p31
    %p33 = scmp.ne.s32.totalorder %s25, %s28
    %p34 = scmp.eq.s32.totalorder %s15, 0
    %p35 = por %p33, %p34
    %p36 = scmp.ne.s32.totalorder %s25, %s28
    %p37 = scmp.eq.s32.totalorder %s20, 1
    %p38 = por %p36, %p37
    %p39 = scmp.ne.s32.totalorder %s28, %s29
    %p40 = scmp.eq.s32.totalorder %s20, 0
    %p41 = por %p39, %p40
    %p42 = scmp.ne.s32.totalorder %s28, %s29
    %p43 = scmp.eq.s32.totalorder %s21, 1
    %p44 = por %p42, %p43
    %p46 = scmp.ne.s32.totalorder %s29, %s45
    %p47 = scmp.eq.s32.totalorder %s21, 0
    %p48 = por %p46, %p47
    %s50 = sadd.s32 %s49, 1
    %p53 = scmp.eq.s32.totalorder %s15, 1
    %p54 = scmp.ne.s32.totalorder %s49, %s51
    %p55 = scmp.eq.s32.totalorder %s15, 0
    %p56 = por %p54, %p55
    %p57 = scmp.ne.s32.totalorder %s49, %s51
    %p58 = scmp.eq.s32.totalorder %s20, 1
    %p59 = por %p57, %p58
    %p60 = scmp.ne.s32.totalorder %s51, %s52
    %p61 = scmp.eq.s32.totalorder %s20, 0
    %p62 = por %p60, %p61
    %p63 = scmp.ne.s32.totalorder %s51, %s52
    %p64 = scmp.eq.s32.totalorder %s21, 1
    %p65 = por %p63, %p64
    %p67 = scmp.ne.s32.totalorder %s52, %s66
    %p68 = scmp.eq.s32.totalorder %s21, 0
    %p69 = por %p67, %p68
    %s71 = sadd.s32 %s70, 1
    %p74 = scmp.eq.s32.totalorder %s15, 1
    %p75 = scmp.ne.s32.totalorder %s70, %s72
    %p76 = scmp.eq.s32.totalorder %s15, 0
    %p77 = por %p75, %p76
    %p78 = scmp.ne.s32.totalorder %s70, %s72
    %p79 = scmp.eq.s32.totalorder %s20, 1
    %p80 = por %p78, %p79
    %p81 = scmp.ne.s32.totalorder %s72, %s73
    %p82 = scmp.eq.s32.totalorder %s20, 0
    %p83 = por %p81, %p82
    %p84 = scmp.ne.s32.totalorder %s72, %s73
    %p85 = scmp.eq.s32.totalorder %s21, 1
    %p86 = por %p84, %p85
    %p88 = scmp.ne.s32.totalorder %s73, %s87
    %p89 = scmp.eq.s32.totalorder %s21, 0
    %p90 = por %p88, %p89
    %s92 = sadd.s32 %s91, 1
    %p95 = scmp.eq.s32.totalorder %s15, 1
    %p96 = scmp.ne.s32.totalorder %s91, %s93
    %p97 = scmp.eq.s32.totalorder %s15, 0
    %p98 = por %p96, %p97
    %p99 = scmp.ne.s32.totalorder %s91, %s93
    %p100 = scmp.eq.s32.totalorder %s20, 1
    %p101 = por %p99, %p100
    %p102 = scmp.ne.s32.totalorder %s93, %s94
    %p103 = scmp.eq.s32.totalorder %s20, 0
    %p104 = por %p102, %p103
    %p105 = scmp.ne.s32.totalorder %s93, %s94
    %p106 = scmp.eq.s32.totalorder %s21, 1
    %p107 = por %p105, %p106
    %p109 = scmp.ne.s32.totalorder %s94, %s108
    %p110 = scmp.eq.s32.totalorder %s21, 0
    %p111 = por %p109, %p110
    %s113 = sadd.s32 %s112, 1
    %p116 = scmp.eq.s32.totalorder %s15, 1
    %p117 = scmp.ne.s32.totalorder %s112, %s114
    %p118 = scmp.eq.s32.totalorder %s15, 0
    %p119 = por %p117, %p118
    %p120 = scmp.ne.s32.totalorder %s112, %s114
    %p121 = scmp.eq.s32.totalorder %s20, 1
    %p122 = por %p120, %p121
    %p123 = scmp.ne.s32.totalorder %s114, %s115
    %p124 = scmp.eq.s32.totalorder %s20, 0
    %p125 = por %p123, %p124
    %p126 = scmp.ne.s32.totalorder %s114, %s115
    %p127 = scmp.eq.s32.totalorder %s21, 1
    %p128 = por %p126, %p127
    %p130 = scmp.ne.s32.totalorder %s115, %s129
    %p131 = scmp.eq.s32.totalorder %s21, 0
    %p132 = por %p130, %p131
    %s134 = sadd.s32 %s133, 1
    %p137 = scmp.eq.s32.totalorder %s15, 1
    %p138 = scmp.ne.s32.totalorder %s133, %s135
    %p139 = scmp.eq.s32.totalorder %s15, 0
    %p140 = por %p138, %p139
    %p141 = scmp.ne.s32.totalorder %s133, %s135
    %p142 = scmp.eq.s32.totalorder %s20, 1
    %p143 = por %p141, %p142
    %p144 = scmp.ne.s32.totalorder %s135, %s136
    %p145 = scmp.eq.s32.totalorder %s20, 0
    %p146 = por %p144, %p145
    %p147 = scmp.ne.s32.totalorder %s135, %s136
    %p148 = scmp.eq.s32.totalorder %s21, 1
    %p149 = por %p147, %p148
    %p151 = scmp.ne.s32.totalorder %s136, %s150
    %p152 = scmp.eq.s32.totalorder %s21, 0
    %p153 = por %p151, %p152
    %s155 = sadd.s32 %s154, 1
    %p158 = scmp.eq.s32.totalorder %s15, 1
    %p159 = scmp.ne.s32.totalorder %s154, %s156
    %p160 = scmp.eq.s32.totalorder %s15, 0
    %p161 = por %p159, %p160
    %p162 = scmp.ne.s32.totalorder %s154, %s156
    %p163 = scmp.eq.s32.totalorder %s20, 1
    %p164 = por %p162, %p163
    %p165 = scmp.ne.s32.totalorder %s156, %s157
    %p166 = scmp.eq.s32.totalorder %s20, 0
    %p167 = por %p165, %p166
    %p168 = scmp.ne.s32.totalorder %s156, %s157
    %p169 = scmp.eq.s32.totalorder %s21, 1
    %p170 = por %p168, %p169
    %p172 = scmp.ne.s32.totalorder %s157, %s171
    %p173 = scmp.eq.s32.totalorder %s21, 0
    %p174 = por %p172, %p173
    %s175 = ssub.s32 %s15, %s22
    %p176 = scmp.eq.s32.totalorder %s175, 0
    %s178 = sadd.s32 %s177, 1
    %s179 = scalar_select %p176, %s177, %s178
    %p182 = pneg %p176
    %p183 = scmp.eq.s32.totalorder %s15, 1
    %p184 = por %p182, %p183
    %p185 = scmp.ne.s32.totalorder %s177, %s180
    %p186 = scmp.eq.s32.totalorder %s15, 0
    %p187 = por %p185, %p186
    %p188 = scmp.ne.s32.totalorder %s177, %s180
    %p189 = scmp.eq.s32.totalorder %s20, 1
    %p190 = por %p188, %p189
    %p191 = scmp.ne.s32.totalorder %s180, %s181
    %p192 = scmp.eq.s32.totalorder %s20, 0
    %p193 = por %p191, %p192
    %p194 = scmp.ne.s32.totalorder %s180, %s181
    %p195 = scmp.eq.s32.totalorder %s21, 1
    %p196 = por %p194, %p195
    %p198 = scmp.ne.s32.totalorder %s181, %s197
    %p199 = scmp.eq.s32.totalorder %s21, 0
    %p200 = por %p198, %p199
    %p201 = scmp.le.s32.totalorder 1, %s15
    %p202 = scmp.lt.s32.totalorder %s15, 3
    %p203 = pnand %p201, %p202
    %p204 = pneg %p203
    // Predicated region
    $region9: #{discriminator_forward.1} parent=5 // pred_check
      _
    $region10: #{discriminator_forward.1} parent=5 // pred_check_branch
      %206 = sbr.rel (%p203) target = $region12
    $region11: #{discriminator_forward.1} parent=5 // pred_region
      %s207 = ssub.s32 %s15, 1
      // Predicated region
      $region13: #{discriminator_forward.1} parent=11 // pred_check
        %p208 = pneg %p62
      $region14: #{discriminator_forward.1} parent=11 // pred_check_branch
        %210 = sbr.rel (%p208) target = $region16
      $region15: #{discriminator_forward.1} parent=11 // pred_region
        _
      $region16: #{discriminator_forward.1} parent=11 // pred_fallthru
        _
      // Predicated region
      $region17: #{discriminator_forward.1} parent=11 // pred_check
        %p211 = pneg %p83
      $region18: #{discriminator_forward.1} parent=11 // pred_check_branch
        %213 = sbr.rel (%p211) target = $region20
      $region19: #{discriminator_forward.1} parent=11 // pred_region
        _
      $region20: #{discriminator_forward.1} parent=11 // pred_fallthru
        _
      // Predicated region
      $region21: #{discriminator_forward.1} parent=11 // pred_check
        %p214 = pneg %p104
      $region22: #{discriminator_forward.1} parent=11 // pred_check_branch
        %216 = sbr.rel (%p214) target = $region24
      $region23: #{discriminator_forward.1} parent=11 // pred_region
        _
      $region24: #{discriminator_forward.1} parent=11 // pred_fallthru
        _
      // Predicated region
      $region25: #{discriminator_forward.1} parent=11 // pred_check
        %p217 = pneg %p125
      $region26: #{discriminator_forward.1} parent=11 // pred_check_branch
        %219 = sbr.rel (%p217) target = $region28
      $region27: #{discriminator_forward.1} parent=11 // pred_region
        _
      $region28: #{discriminator_forward.1} parent=11 // pred_fallthru
        _
      // Predicated region
      $region29: #{discriminator_forward.1} parent=11 // pred_check
        %p220 = pneg %p146
      $region30: #{discriminator_forward.1} parent=11 // pred_check_branch
        %222 = sbr.rel (%p220) target = $region32
      $region31: #{discriminator_forward.1} parent=11 // pred_region
        _
      $region32: #{discriminator_forward.1} parent=11 // pred_fallthru
        _
      // Predicated region
      $region33: #{discriminator_forward.1} parent=11 // pred_check
        %p223 = pneg %p167
      $region34: #{discriminator_forward.1} parent=11 // pred_check_branch
        %225 = sbr.rel (%p223) target = $region36
      $region35: #{discriminator_forward.1} parent=11 // pred_region
        _
      $region36: #{discriminator_forward.1} parent=11 // pred_fallthru
        _
    $region12: #{discriminator_forward.1} parent=5 // pred_fallthru
      _
    %p226 = scmp.lt.s32.totalorder %s15, 2
    // Predicated region
    $region37: #{discriminator_forward.1} parent=5 // pred_check
      %p227 = pneg %p226
    $region38: #{discriminator_forward.1} parent=5 // pred_check_branch
      %229 = sbr.rel (%p227) target = $region40
    $region39: #{discriminator_forward.1} parent=5 // pred_region
      // Predicated region
      $region41: #{discriminator_forward.1} parent=39 // pred_check
        %p230 = pneg %p35
      $region42: #{discriminator_forward.1} parent=39 // pred_check_branch
        %232 = sbr.rel (%p230) target = $region44
      $region43: #{discriminator_forward.1} parent=39 // pred_region
        %s233 = smul.u32 49, %s15
        %p234 = scmp.lt.s32.totalorder %s233, 97
        %s235 = scalar_select %p234, %s233, 97
        %s236 = smul.addr %s235, 8
        %s237 = scalar_lea.vmem %s0, %s236
        %s238 = smul.u32 49, %s15
      $region44: #{discriminator_forward.1} parent=39 // pred_fallthru
        _
    $region40: #{discriminator_forward.1} parent=5 // pred_fallthru
      _
    %p239 = scmp.le.s32.totalorder 1, %s15
    %p240 = scmp.lt.s32.totalorder %s15, 3
    %p241 = pnand %p239, %p240
    %p242 = pneg %p241
    // Predicated region
    $region45: #{discriminator_forward.1} parent=5 // pred_check
      _
    $region46: #{discriminator_forward.1} parent=5 // pred_check_branch
      %244 = sbr.rel (%p241) target = $region48
    $region47: #{discriminator_forward.1} parent=5 // pred_region
      %s245 = ssub.s32 %s15, 1
      %s246 = smul.u32 49, %s20
      %p247 = scmp.lt.s32.totalorder %s246, 97
      %s248 = scalar_select %p247, %s246, 97
      %s249 = smul.addr %s248, 8
      %s250 = scalar_lea.vmem %s0, %s249
      %p251 = pneg %p41
      %p252 = pneg %p38
      %p253 = pneg %p62
      %p254 = pneg %p59
      %p255 = pneg %p83
      %p256 = pneg %p80
      %p257 = pneg %p104
      %p258 = pneg %p101
      %p259 = pneg %p125
      %p260 = pneg %p122
      %p261 = pneg %p146
      %p262 = pneg %p143
      %p263 = pneg %p167
      %p264 = pneg %p164
      %p265 = pneg %p193
      %p266 = pneg %p190
      %p267 = scmp.lt.s32.totalorder %s20, 1
      %s268 = scalar_select %p267, %s20, 1
      %s269 = smul.addr %s268, 8
      %s270 = scalar_lea.vmem %s7, %s269
      %s271 = smul.u32 49, %s20
      %p272 = scmp.lt.s32.totalorder %s271, 97
      %s273 = scalar_select %p272, %s271, 97
      %s274 = smul.addr %s273, 8
      %s275 = scalar_lea.vmem %s0, %s274
      %s276 = smul.u32 49, %s20
      %p277 = scmp.lt.s32.totalorder %s20, 1
      %s278 = scalar_select %p277, %s20, 1
      %s279 = smul.addr %s278, 8
      %s280 = scalar_lea.vmem %s7, %s279
      %v281 = vld [vmem:[%s275] sm:$0xff]
      %v282 = vld [vmem:[%s275 + $0x8] sm:$0xff]
      %v283 = vld [vmem:[%s275 + $0x10] sm:$0xff]
      %v284 = vld [vmem:[%s275 + $0x18] sm:$0xff]
      %v285 = vld [vmem:[%s275 + $0x20] sm:$0xff]
      %v286 = vld [vmem:[%s275 + $0x28] sm:$0xff]
      %v287 = vld [vmem:[%s275 + $0x30] sm:$0xff]
      %v288 = vld [vmem:[%s275 + $0x38] sm:$0xff]
      %v289 = vld [vmem:[%s275 + $0x40] sm:$0xff]
      %v290 = vld [vmem:[%s275 + $0x48] sm:$0xff]
      %v291 = vld [vmem:[%s275 + $0x50] sm:$0xff]
      %v292 = vld [vmem:[%s275 + $0x58] sm:$0xff]
      %v293 = vld [vmem:[%s275 + $0x60] sm:$0xff]
      %v294 = vld [vmem:[%s275 + $0x68] sm:$0xff]
      %v295 = vld [vmem:[%s275 + $0x70] sm:$0xff]
      %v296 = vld [vmem:[%s275 + $0x78] sm:$0xff]
      %v297 = vld [vmem:[%s275 + $0x80] sm:$0xff]
      %v298 = vld [vmem:[%s275 + $0x88] sm:$0xff]
      %v299 = vld [vmem:[%s275 + $0x90] sm:$0xff]
      %v300 = vld [vmem:[%s275 + $0x98] sm:$0xff]
      %v301 = vld [vmem:[%s275 + $0xa0] sm:$0xff]
      %v302 = vld [vmem:[%s275 + $0xa8] sm:$0xff]
      %v303 = vld [vmem:[%s275 + $0xb0] sm:$0xff]
      %v304 = vld [vmem:[%s275 + $0xb8] sm:$0xff]
      %v305 = vld [vmem:[%s275 + $0xc0] sm:$0xff]
      %v306 = vld [vmem:[%s275 + $0xc8] sm:$0xff]
      %v307 = vld [vmem:[%s275 + $0xd0] sm:$0xff]
      %v308 = vld [vmem:[%s275 + $0xd8] sm:$0xff]
      %v309 = vld [vmem:[%s275 + $0xe0] sm:$0xff]
      %v310 = vld [vmem:[%s275 + $0xe8] sm:$0xff]
      %v311 = vld [vmem:[%s275 + $0xf0] sm:$0xff]
      %v312 = vld [vmem:[%s275 + $0xf8] sm:$0xff]
      %v313 = vld [vmem:[%s275 + $0x100] sm:$0xff]
      %v314 = vld [vmem:[%s275 + $0x108] sm:$0xff]
      %v315 = vld [vmem:[%s275 + $0x110] sm:$0xff]
      %v316 = vld [vmem:[%s275 + $0x118] sm:$0xff]
      %v317 = vld [vmem:[%s275 + $0x120] sm:$0xff]
      %v318 = vld [vmem:[%s275 + $0x128] sm:$0xff]
      %v319 = vld [vmem:[%s275 + $0x130] sm:$0xff]
      %v320 = vld [vmem:[%s275 + $0x138] sm:$0xff]
      %v321 = vld [vmem:[%s275 + $0x140] sm:$0xff]
      %v322 = vld [vmem:[%s275 + $0x148] sm:$0xff]
      %v323 = vld [vmem:[%s275 + $0x150] sm:$0xff]
      %v324 = vld [vmem:[%s275 + $0x158] sm:$0xff]
      %v325 = vld [vmem:[%s275 + $0x160] sm:$0xff]
      %v326 = vld [vmem:[%s275 + $0x168] sm:$0xff]
      %v327 = vld [vmem:[%s275 + $0x170] sm:$0xff]
      %v328 = vld [vmem:[%s275 + $0x178] sm:$0xff]
      %v329 = vld [vmem:[%s275 + $0x180] sm:$0xff]
      %v330 = vld [vmem:[%s1] sm:$0xff]
      %v331 = vld [vmem:[%s1 + $0x8] sm:$0xff]
      %v332 = vld [vmem:[%s1 + $0x10] sm:$0xff]
      %v333 = vld [vmem:[%s1 + $0x18] sm:$0xff]
      %v334 = vld [vmem:[%s2] sm:$0x3]
      %v336 = vperm.slane %v334, 0
      %v337 = vperm.slane %v334, 1
      %vm340 = vcmask 130048
      %v342 = vsel %vm340, %v281, 0
      %v345 = vsel %vm340, %v282, 0
      %v348 = vsel %vm340, %v283, 0
      %v351 = vsel %vm340, %v284, 0
      %v354 = vsel %vm340, %v285, 0
      %v357 = vsel %vm340, %v286, 0
      %v360 = vsel %vm340, %v287, 0
      %v363 = vsel %vm340, %v288, 0
      %v366 = vsel %vm340, %v289, 0
      %v369 = vsel %vm340, %v290, 0
      %v372 = vsel %vm340, %v291, 0
      %v375 = vsel %vm340, %v292, 0
      %v378 = vsel %vm340, %v293, 0
      %v381 = vsel %vm340, %v294, 0
      %v384 = vsel %vm340, %v295, 0
      %v387 = vsel %vm340, %v296, 0
      %v390 = vsel %vm340, %v297, 0
      %v393 = vsel %vm340, %v298, 0
      %v396 = vsel %vm340, %v299, 0
      %v399 = vsel %vm340, %v300, 0
      %v402 = vsel %vm340, %v301, 0
      %v405 = vsel %vm340, %v302, 0
      %v408 = vsel %vm340, %v303, 0
      %v411 = vsel %vm340, %v304, 0
      %v414 = vsel %vm340, %v305, 0
      %v417 = vsel %vm340, %v306, 0
      %v420 = vsel %vm340, %v307, 0
      %v423 = vsel %vm340, %v308, 0
      %v426 = vsel %vm340, %v309, 0
      %v429 = vsel %vm340, %v310, 0
      %v432 = vsel %vm340, %v311, 0
      %v435 = vsel %vm340, %v312, 0
      %v438 = vsel %vm340, %v313, 0
      %v441 = vsel %vm340, %v314, 0
      %v444 = vsel %vm340, %v315, 0
      %v447 = vsel %vm340, %v316, 0
      %v450 = vsel %vm340, %v317, 0
      %v453 = vsel %vm340, %v318, 0
      %v456 = vsel %vm340, %v319, 0
      %v459 = vsel %vm340, %v320, 0
      %v462 = vsel %vm340, %v321, 0
      %v465 = vsel %vm340, %v322, 0
      %v468 = vsel %vm340, %v323, 0
      %v471 = vsel %vm340, %v324, 0
      %v474 = vsel %vm340, %v325, 0
      %v477 = vsel %vm340, %v326, 0
      %v480 = vsel %vm340, %v327, 0
      %v483 = vsel %vm340, %v328, 0
      %v486 = vsel %vm340, %v329, 0
      %488 = vmatpush.msra.mxu0 0.0
      %489 = vmatpush.msra.mxu0 0.0
      %490 = vmatpush.msra.mxu0 0.0
      %491 = vmatpush.msra.mxu0 0.0
      %492 = vmatpush.msra.mxu0 0.0
      %493 = vmatpush.msra.mxu0 0.0
      %494 = vmatpush.msra.mxu0 0.0
      %495 = vmatpush.msra.mxu0 0.0
      %496 = vmatpush.msra.mxu0 0.0
      %497 = vmatpush.msra.mxu0 0.0
      %498 = vmatpush.msra.mxu0 0.0
      %499 = vmatpush.msra.mxu0 0.0
      %500 = vmatpush.msra.mxu0 0.0
      %501 = vmatpush.msra.mxu0 0.0
      %502 = vmatpush.msra.mxu0 %v332
      %503 = vmatpush.msra.mxu0 %v330
      %504 = vmatmul.f32.gmra.mxu0 %v342
      %v505 = vpop.f32.mrf.mxu0
      %v506 = vadd.f32 %v336, %v505
      %507 = vmatmul.f32.gmra.mxu0 %v345
      %v508 = vpop.f32.mrf.mxu0
      %v509 = vadd.f32 %v336, %v508
      %510 = vmatmul.f32.gmra.mxu0 %v348
      %v511 = vpop.f32.mrf.mxu0
      %v512 = vadd.f32 %v336, %v511
      %513 = vmatmul.f32.gmra.mxu0 %v351
      %v514 = vpop.f32.mrf.mxu0
      %v515 = vadd.f32 %v336, %v514
      %516 = vmatmul.f32.gmra.mxu0 %v354
      %v517 = vpop.f32.mrf.mxu0
      %v518 = vadd.f32 %v336, %v517
      %519 = vmatmul.f32.gmra.mxu0 %v357
      %v520 = vpop.f32.mrf.mxu0
      %v521 = vadd.f32 %v336, %v520
      %522 = vmatmul.f32.gmra.mxu0 %v360
      %v523 = vpop.f32.mrf.mxu0
      %v524 = vadd.f32 %v336, %v523
      %525 = vmatmul.f32.gmra.mxu0 %v363
      %v526 = vpop.f32.mrf.mxu0
      %v527 = vadd.f32 %v336, %v526
      %528 = vmatmul.f32.gmra.mxu0 %v366
      %v529 = vpop.f32.mrf.mxu0
      %v530 = vadd.f32 %v336, %v529
      %531 = vmatmul.f32.gmra.mxu0 %v369
      %v532 = vpop.f32.mrf.mxu0
      %v533 = vadd.f32 %v336, %v532
      %534 = vmatmul.f32.gmra.mxu0 %v372
      %v535 = vpop.f32.mrf.mxu0
      %v536 = vadd.f32 %v336, %v535
      %537 = vmatmul.f32.gmra.mxu0 %v375
      %v538 = vpop.f32.mrf.mxu0
      %v539 = vadd.f32 %v336, %v538
      %540 = vmatmul.f32.gmra.mxu0 %v378
      %v541 = vpop.f32.mrf.mxu0
      %v542 = vadd.f32 %v336, %v541
      %543 = vmatmul.f32.gmra.mxu0 %v381
      %v544 = vpop.f32.mrf.mxu0
      %v545 = vadd.f32 %v336, %v544
      %546 = vmatmul.f32.gmra.mxu0 %v384
      %v547 = vpop.f32.mrf.mxu0
      %v548 = vadd.f32 %v336, %v547
      %549 = vmatmul.f32.gmra.mxu0 %v387
      %v550 = vpop.f32.mrf.mxu0
      %v551 = vadd.f32 %v336, %v550
      %552 = vmatmul.f32.gmra.mxu0 %v390
      %v553 = vpop.f32.mrf.mxu0
      %v554 = vadd.f32 %v336, %v553
      %555 = vmatmul.f32.gmra.mxu0 %v393
      %v556 = vpop.f32.mrf.mxu0
      %v557 = vadd.f32 %v336, %v556
      %558 = vmatmul.f32.gmra.mxu0 %v396
      %v559 = vpop.f32.mrf.mxu0
      %v560 = vadd.f32 %v336, %v559
      %561 = vmatmul.f32.gmra.mxu0 %v399
      %v562 = vpop.f32.mrf.mxu0
      %v563 = vadd.f32 %v336, %v562
      %564 = vmatmul.f32.gmra.mxu0 %v402
      %v565 = vpop.f32.mrf.mxu0
      %v566 = vadd.f32 %v336, %v565
      %567 = vmatmul.f32.gmra.mxu0 %v405
      %v568 = vpop.f32.mrf.mxu0
      %v569 = vadd.f32 %v336, %v568
      %570 = vmatmul.f32.gmra.mxu0 %v408
      %v571 = vpop.f32.mrf.mxu0
      %v572 = vadd.f32 %v336, %v571
      %573 = vmatmul.f32.gmra.mxu0 %v411
      %v574 = vpop.f32.mrf.mxu0
      %v575 = vadd.f32 %v336, %v574
      %576 = vmatmul.f32.gmra.mxu0 %v414
      %v577 = vpop.f32.mrf.mxu0
      %v578 = vadd.f32 %v336, %v577
      %579 = vmatmul.f32.gmra.mxu0 %v417
      %v580 = vpop.f32.mrf.mxu0
      %v581 = vadd.f32 %v336, %v580
      %582 = vmatmul.f32.gmra.mxu0 %v420
      %v583 = vpop.f32.mrf.mxu0
      %v584 = vadd.f32 %v336, %v583
      %585 = vmatmul.f32.gmra.mxu0 %v423
      %v586 = vpop.f32.mrf.mxu0
      %v587 = vadd.f32 %v336, %v586
      %588 = vmatmul.f32.gmra.mxu0 %v426
      %v589 = vpop.f32.mrf.mxu0
      %v590 = vadd.f32 %v336, %v589
      %591 = vmatmul.f32.gmra.mxu0 %v429
      %v592 = vpop.f32.mrf.mxu0
      %v593 = vadd.f32 %v336, %v592
      %594 = vmatmul.f32.gmra.mxu0 %v432
      %v595 = vpop.f32.mrf.mxu0
      %v596 = vadd.f32 %v336, %v595
      %597 = vmatmul.f32.gmra.mxu0 %v435
      %v598 = vpop.f32.mrf.mxu0
      %v599 = vadd.f32 %v336, %v598
      %600 = vmatmul.f32.gmra.mxu0 %v438
      %v601 = vpop.f32.mrf.mxu0
      %v602 = vadd.f32 %v336, %v601
      %603 = vmatmul.f32.gmra.mxu0 %v441
      %v604 = vpop.f32.mrf.mxu0
      %v605 = vadd.f32 %v336, %v604
      %606 = vmatmul.f32.gmra.mxu0 %v444
      %v607 = vpop.f32.mrf.mxu0
      %v608 = vadd.f32 %v336, %v607
      %609 = vmatmul.f32.gmra.mxu0 %v447
      %v610 = vpop.f32.mrf.mxu0
      %v611 = vadd.f32 %v336, %v610
      %612 = vmatmul.f32.gmra.mxu0 %v450
      %v613 = vpop.f32.mrf.mxu0
      %v614 = vadd.f32 %v336, %v613
      %615 = vmatmul.f32.gmra.mxu0 %v453
      %v616 = vpop.f32.mrf.mxu0
      %v617 = vadd.f32 %v336, %v616
      %618 = vmatmul.f32.gmra.mxu0 %v456
      %v619 = vpop.f32.mrf.mxu0
      %v620 = vadd.f32 %v336, %v619
      %621 = vmatmul.f32.gmra.mxu0 %v459
      %v622 = vpop.f32.mrf.mxu0
      %v623 = vadd.f32 %v336, %v622
      %624 = vmatmul.f32.gmra.mxu0 %v462
      %v625 = vpop.f32.mrf.mxu0
      %v626 = vadd.f32 %v336, %v625
      %627 = vmatmul.f32.gmra.mxu0 %v465
      %v628 = vpop.f32.mrf.mxu0
      %v629 = vadd.f32 %v336, %v628
      %630 = vmatmul.f32.gmra.mxu0 %v468
      %v631 = vpop.f32.mrf.mxu0
      %v632 = vadd.f32 %v336, %v631
      %633 = vmatmul.f32.gmra.mxu0 %v471
      %v634 = vpop.f32.mrf.mxu0
      %v635 = vadd.f32 %v336, %v634
      %636 = vmatmul.f32.gmra.mxu0 %v474
      %v637 = vpop.f32.mrf.mxu0
      %v638 = vadd.f32 %v336, %v637
      %639 = vmatmul.f32.gmra.mxu0 %v477
      %v640 = vpop.f32.mrf.mxu0
      %v641 = vadd.f32 %v336, %v640
      %642 = vmatmul.f32.gmra.mxu0 %v480
      %v643 = vpop.f32.mrf.mxu0
      %v644 = vadd.f32 %v336, %v643
      %645 = vmatmul.f32.gmra.mxu0 %v483
      %v646 = vpop.f32.mrf.mxu0
      %v647 = vadd.f32 %v336, %v646
      %648 = vmatmul.f32.gmra.mxu0 %v486
      %v649 = vpop.f32.mrf.mxu0
      %v650 = vadd.f32 %v336, %v649
      %651 = vdwg.mxu0
      %652 = vmatpush.msra.mxu0 0.0
      %653 = vmatpush.msra.mxu0 0.0
      %654 = vmatpush.msra.mxu0 0.0
      %655 = vmatpush.msra.mxu0 0.0
      %656 = vmatpush.msra.mxu0 0.0
      %657 = vmatpush.msra.mxu0 0.0
      %658 = vmatpush.msra.mxu0 0.0
      %659 = vmatpush.msra.mxu0 0.0
      %660 = vmatpush.msra.mxu0 0.0
      %661 = vmatpush.msra.mxu0 0.0
      %662 = vmatpush.msra.mxu0 0.0
      %663 = vmatpush.msra.mxu0 0.0
      %664 = vmatpush.msra.mxu0 0.0
      %665 = vmatpush.msra.mxu0 0.0
      %666 = vmatpush.msra.mxu0 %v333
      %667 = vmatpush.msra.mxu0 %v331
      %668 = vmatmul.f32.gmra.mxu0 %v342
      %v669 = vpop.f32.mrf.mxu0
      %v670 = vadd.f32 %v337, %v669
      %671 = vmatmul.f32.gmra.mxu0 %v345
      %v672 = vpop.f32.mrf.mxu0
      %v673 = vadd.f32 %v337, %v672
      %674 = vmatmul.f32.gmra.mxu0 %v348
      %v675 = vpop.f32.mrf.mxu0
      %v676 = vadd.f32 %v337, %v675
      %677 = vmatmul.f32.gmra.mxu0 %v351
      %v678 = vpop.f32.mrf.mxu0
      %v679 = vadd.f32 %v337, %v678
      %680 = vmatmul.f32.gmra.mxu0 %v354
      %v681 = vpop.f32.mrf.mxu0
      %v682 = vadd.f32 %v337, %v681
      %683 = vmatmul.f32.gmra.mxu0 %v357
      %v684 = vpop.f32.mrf.mxu0
      %v685 = vadd.f32 %v337, %v684
      %686 = vmatmul.f32.gmra.mxu0 %v360
      %v687 = vpop.f32.mrf.mxu0
      %v688 = vadd.f32 %v337, %v687
      %689 = vmatmul.f32.gmra.mxu0 %v363
      %v690 = vpop.f32.mrf.mxu0
      %v691 = vadd.f32 %v337, %v690
      %692 = vmatmul.f32.gmra.mxu0 %v366
      %v693 = vpop.f32.mrf.mxu0
      %v694 = vadd.f32 %v337, %v693
      %695 = vmatmul.f32.gmra.mxu0 %v369
      %v696 = vpop.f32.mrf.mxu0
      %v697 = vadd.f32 %v337, %v696
      %698 = vmatmul.f32.gmra.mxu0 %v372
      %v699 = vpop.f32.mrf.mxu0
      %v700 = vadd.f32 %v337, %v699
      %701 = vmatmul.f32.gmra.mxu0 %v375
      %v702 = vpop.f32.mrf.mxu0
      %v703 = vadd.f32 %v337, %v702
      %704 = vmatmul.f32.gmra.mxu0 %v378
      %v705 = vpop.f32.mrf.mxu0
      %v706 = vadd.f32 %v337, %v705
      %707 = vmatmul.f32.gmra.mxu0 %v381
      %v708 = vpop.f32.mrf.mxu0
      %v709 = vadd.f32 %v337, %v708
      %710 = vmatmul.f32.gmra.mxu0 %v384
      %v711 = vpop.f32.mrf.mxu0
      %v712 = vadd.f32 %v337, %v711
      %713 = vmatmul.f32.gmra.mxu0 %v387
      %v714 = vpop.f32.mrf.mxu0
      %v715 = vadd.f32 %v337, %v714
      %716 = vmatmul.f32.gmra.mxu0 %v390
      %v717 = vpop.f32.mrf.mxu0
      %v718 = vadd.f32 %v337, %v717
      %719 = vmatmul.f32.gmra.mxu0 %v393
      %v720 = vpop.f32.mrf.mxu0
      %v721 = vadd.f32 %v337, %v720
      %722 = vmatmul.f32.gmra.mxu0 %v396
      %v723 = vpop.f32.mrf.mxu0
      %v724 = vadd.f32 %v337, %v723
      %725 = vmatmul.f32.gmra.mxu0 %v399
      %v726 = vpop.f32.mrf.mxu0
      %v727 = vadd.f32 %v337, %v726
      %728 = vmatmul.f32.gmra.mxu0 %v402
      %v729 = vpop.f32.mrf.mxu0
      %v730 = vadd.f32 %v337, %v729
      %731 = vmatmul.f32.gmra.mxu0 %v405
      %v732 = vpop.f32.mrf.mxu0
      %v733 = vadd.f32 %v337, %v732
      %734 = vmatmul.f32.gmra.mxu0 %v408
      %v735 = vpop.f32.mrf.mxu0
      %v736 = vadd.f32 %v337, %v735
      %737 = vmatmul.f32.gmra.mxu0 %v411
      %v738 = vpop.f32.mrf.mxu0
      %v739 = vadd.f32 %v337, %v738
      %740 = vmatmul.f32.gmra.mxu0 %v414
      %v741 = vpop.f32.mrf.mxu0
      %v742 = vadd.f32 %v337, %v741
      %743 = vmatmul.f32.gmra.mxu0 %v417
      %v744 = vpop.f32.mrf.mxu0
      %v745 = vadd.f32 %v337, %v744
      %746 = vmatmul.f32.gmra.mxu0 %v420
      %v747 = vpop.f32.mrf.mxu0
      %v748 = vadd.f32 %v337, %v747
      %749 = vmatmul.f32.gmra.mxu0 %v423
      %v750 = vpop.f32.mrf.mxu0
      %v751 = vadd.f32 %v337, %v750
      %752 = vmatmul.f32.gmra.mxu0 %v426
      %v753 = vpop.f32.mrf.mxu0
      %v754 = vadd.f32 %v337, %v753
      %755 = vmatmul.f32.gmra.mxu0 %v429
      %v756 = vpop.f32.mrf.mxu0
      %v757 = vadd.f32 %v337, %v756
      %758 = vmatmul.f32.gmra.mxu0 %v432
      %v759 = vpop.f32.mrf.mxu0
      %v760 = vadd.f32 %v337, %v759
      %761 = vmatmul.f32.gmra.mxu0 %v435
      %v762 = vpop.f32.mrf.mxu0
      %v763 = vadd.f32 %v337, %v762
      %764 = vmatmul.f32.gmra.mxu0 %v438
      %v765 = vpop.f32.mrf.mxu0
      %v766 = vadd.f32 %v337, %v765
      %767 = vmatmul.f32.gmra.mxu0 %v441
      %v768 = vpop.f32.mrf.mxu0
      %v769 = vadd.f32 %v337, %v768
      %770 = vmatmul.f32.gmra.mxu0 %v444
      %v771 = vpop.f32.mrf.mxu0
      %v772 = vadd.f32 %v337, %v771
      %773 = vmatmul.f32.gmra.mxu0 %v447
      %v774 = vpop.f32.mrf.mxu0
      %v775 = vadd.f32 %v337, %v774
      %776 = vmatmul.f32.gmra.mxu0 %v450
      %v777 = vpop.f32.mrf.mxu0
      %v778 = vadd.f32 %v337, %v777
      %779 = vmatmul.f32.gmra.mxu0 %v453
      %v780 = vpop.f32.mrf.mxu0
      %v781 = vadd.f32 %v337, %v780
      %782 = vmatmul.f32.gmra.mxu0 %v456
      %v783 = vpop.f32.mrf.mxu0
      %v784 = vadd.f32 %v337, %v783
      %785 = vmatmul.f32.gmra.mxu0 %v459
      %v786 = vpop.f32.mrf.mxu0
      %v787 = vadd.f32 %v337, %v786
      %788 = vmatmul.f32.gmra.mxu0 %v462
      %v789 = vpop.f32.mrf.mxu0
      %v790 = vadd.f32 %v337, %v789
      %791 = vmatmul.f32.gmra.mxu0 %v465
      %v792 = vpop.f32.mrf.mxu0
      %v793 = vadd.f32 %v337, %v792
      %794 = vmatmul.f32.gmra.mxu0 %v468
      %v795 = vpop.f32.mrf.mxu0
      %v796 = vadd.f32 %v337, %v795
      %797 = vmatmul.f32.gmra.mxu0 %v471
      %v798 = vpop.f32.mrf.mxu0
      %v799 = vadd.f32 %v337, %v798
      %800 = vmatmul.f32.gmra.mxu0 %v474
      %v801 = vpop.f32.mrf.mxu0
      %v802 = vadd.f32 %v337, %v801
      %803 = vmatmul.f32.gmra.mxu0 %v477
      %v804 = vpop.f32.mrf.mxu0
      %v805 = vadd.f32 %v337, %v804
      %806 = vmatmul.f32.gmra.mxu0 %v480
      %v807 = vpop.f32.mrf.mxu0
      %v808 = vadd.f32 %v337, %v807
      %809 = vmatmul.f32.gmra.mxu0 %v483
      %v810 = vpop.f32.mrf.mxu0
      %v811 = vadd.f32 %v337, %v810
      %812 = vmatmul.f32.gmra.mxu0 %v486
      %v813 = vpop.f32.mrf.mxu0
      %v814 = vadd.f32 %v337, %v813
      %815 = vdwg.mxu0
      %vm816 = vcmp.ge.f32.partialorder %v506, 0.0
      %vm817 = vcmp.ge.f32.partialorder %v670, 0.0
      %vm818 = vcmp.ge.f32.partialorder %v509, 0.0
      %vm819 = vcmp.ge.f32.partialorder %v673, 0.0
      %vm820 = vcmp.ge.f32.partialorder %v512, 0.0
      %vm821 = vcmp.ge.f32.partialorder %v676, 0.0
      %vm822 = vcmp.ge.f32.partialorder %v515, 0.0
      %vm823 = vcmp.ge.f32.partialorder %v679, 0.0
      %vm824 = vcmp.ge.f32.partialorder %v518, 0.0
      %vm825 = vcmp.ge.f32.partialorder %v682, 0.0
      %vm826 = vcmp.ge.f32.partialorder %v521, 0.0
      %vm827 = vcmp.ge.f32.partialorder %v685, 0.0
      %vm828 = vcmp.ge.f32.partialorder %v524, 0.0
      %vm829 = vcmp.ge.f32.partialorder %v688, 0.0
      %vm830 = vcmp.ge.f32.partialorder %v527, 0.0
      %vm831 = vcmp.ge.f32.partialorder %v691, 0.0
      %vm832 = vcmp.ge.f32.partialorder %v530, 0.0
      %vm833 = vcmp.ge.f32.partialorder %v694, 0.0
      %vm834 = vcmp.ge.f32.partialorder %v533, 0.0
      %vm835 = vcmp.ge.f32.partialorder %v697, 0.0
      %vm836 = vcmp.ge.f32.partialorder %v536, 0.0
      %vm837 = vcmp.ge.f32.partialorder %v700, 0.0
      %vm838 = vcmp.ge.f32.partialorder %v539, 0.0
      %vm839 = vcmp.ge.f32.partialorder %v703, 0.0
      %vm840 = vcmp.ge.f32.partialorder %v542, 0.0
      %vm841 = vcmp.ge.f32.partialorder %v706, 0.0
      %vm842 = vcmp.ge.f32.partialorder %v545, 0.0
      %vm843 = vcmp.ge.f32.partialorder %v709, 0.0
      %vm844 = vcmp.ge.f32.partialorder %v548, 0.0
      %vm845 = vcmp.ge.f32.partialorder %v712, 0.0
      %vm846 = vcmp.ge.f32.partialorder %v551, 0.0
      %vm847 = vcmp.ge.f32.partialorder %v715, 0.0
      %vm848 = vcmp.ge.f32.partialorder %v554, 0.0
      %vm849 = vcmp.ge.f32.partialorder %v718, 0.0
      %vm850 = vcmp.ge.f32.partialorder %v557, 0.0
      %vm851 = vcmp.ge.f32.partialorder %v721, 0.0
      %vm852 = vcmp.ge.f32.partialorder %v560, 0.0
      %vm853 = vcmp.ge.f32.partialorder %v724, 0.0
      %vm854 = vcmp.ge.f32.partialorder %v563, 0.0
      %vm855 = vcmp.ge.f32.partialorder %v727, 0.0
      %vm856 = vcmp.ge.f32.partialorder %v566, 0.0
      %vm857 = vcmp.ge.f32.partialorder %v730, 0.0
      %vm858 = vcmp.ge.f32.partialorder %v569, 0.0
      %vm859 = vcmp.ge.f32.partialorder %v733, 0.0
      %vm860 = vcmp.ge.f32.partialorder %v572, 0.0
      %vm861 = vcmp.ge.f32.partialorder %v736, 0.0
      %vm862 = vcmp.ge.f32.partialorder %v575, 0.0
      %vm863 = vcmp.ge.f32.partialorder %v739, 0.0
      %vm864 = vcmp.ge.f32.partialorder %v578, 0.0
      %vm865 = vcmp.ge.f32.partialorder %v742, 0.0
      %vm866 = vcmp.ge.f32.partialorder %v581, 0.0
      %vm867 = vcmp.ge.f32.partialorder %v745, 0.0
      %vm868 = vcmp.ge.f32.partialorder %v584, 0.0
      %vm869 = vcmp.ge.f32.partialorder %v748, 0.0
      %vm870 = vcmp.ge.f32.partialorder %v587, 0.0
      %vm871 = vcmp.ge.f32.partialorder %v751, 0.0
      %vm872 = vcmp.ge.f32.partialorder %v590, 0.0
      %vm873 = vcmp.ge.f32.partialorder %v754, 0.0
      %vm874 = vcmp.ge.f32.partialorder %v593, 0.0
      %vm875 = vcmp.ge.f32.partialorder %v757, 0.0
      %vm876 = vcmp.ge.f32.partialorder %v596, 0.0
      %vm877 = vcmp.ge.f32.partialorder %v760, 0.0
      %vm878 = vcmp.ge.f32.partialorder %v599, 0.0
      %vm879 = vcmp.ge.f32.partialorder %v763, 0.0
      %vm880 = vcmp.ge.f32.partialorder %v602, 0.0
      %vm881 = vcmp.ge.f32.partialorder %v766, 0.0
      %vm882 = vcmp.ge.f32.partialorder %v605, 0.0
      %vm883 = vcmp.ge.f32.partialorder %v769, 0.0
      %vm884 = vcmp.ge.f32.partialorder %v608, 0.0
      %vm885 = vcmp.ge.f32.partialorder %v772, 0.0
      %vm886 = vcmp.ge.f32.partialorder %v611, 0.0
      %vm887 = vcmp.ge.f32.partialorder %v775, 0.0
      %vm888 = vcmp.ge.f32.partialorder %v614, 0.0
      %vm889 = vcmp.ge.f32.partialorder %v778, 0.0
      %vm890 = vcmp.ge.f32.partialorder %v617, 0.0
      %vm891 = vcmp.ge.f32.partialorder %v781, 0.0
      %vm892 = vcmp.ge.f32.partialorder %v620, 0.0
      %vm893 = vcmp.ge.f32.partialorder %v784, 0.0
      %vm894 = vcmp.ge.f32.partialorder %v623, 0.0
      %vm895 = vcmp.ge.f32.partialorder %v787, 0.0
      %vm896 = vcmp.ge.f32.partialorder %v626, 0.0
      %vm897 = vcmp.ge.f32.partialorder %v790, 0.0
      %vm898 = vcmp.ge.f32.partialorder %v629, 0.0
      %vm899 = vcmp.ge.f32.partialorder %v793, 0.0
      %vm900 = vcmp.ge.f32.partialorder %v632, 0.0
      %vm901 = vcmp.ge.f32.partialorder %v796, 0.0
      %vm902 = vcmp.ge.f32.partialorder %v635, 0.0
      %vm903 = vcmp.ge.f32.partialorder %v799, 0.0
      %vm904 = vcmp.ge.f32.partialorder %v638, 0.0
      %vm905 = vcmp.ge.f32.partialorder %v802, 0.0
      %vm906 = vcmp.ge.f32.partialorder %v641, 0.0
      %vm907 = vcmp.ge.f32.partialorder %v805, 0.0
      %vm908 = vcmp.ge.f32.partialorder %v644, 0.0
      %vm909 = vcmp.ge.f32.partialorder %v808, 0.0
      %vm910 = vcmp.ge.f32.partialorder %v647, 0.0
      %vm911 = vcmp.ge.f32.partialorder %v811, 0.0
      %vm912 = vcmp.ge.f32.partialorder %v650, 0.0
      %vm913 = vcmp.ge.f32.partialorder %v814, 0.0
      %v914 = vmul.f32 %v506, 0.2
      %v915 = vmul.f32 %v670, 0.2
      %v916 = vmul.f32 %v509, 0.2
      %v917 = vmul.f32 %v673, 0.2
      %v918 = vmul.f32 %v512, 0.2
      %v919 = vmul.f32 %v676, 0.2
      %v920 = vmul.f32 %v515, 0.2
      %v921 = vmul.f32 %v679, 0.2
      %v922 = vmul.f32 %v518, 0.2
      %v923 = vmul.f32 %v682, 0.2
      %v924 = vmul.f32 %v521, 0.2
      %v925 = vmul.f32 %v685, 0.2
      %v926 = vmul.f32 %v524, 0.2
      %v927 = vmul.f32 %v688, 0.2
      %v928 = vmul.f32 %v527, 0.2
      %v929 = vmul.f32 %v691, 0.2
      %v930 = vmul.f32 %v530, 0.2
      %v931 = vmul.f32 %v694, 0.2
      %v932 = vmul.f32 %v533, 0.2
      %v933 = vmul.f32 %v697, 0.2
      %v934 = vmul.f32 %v536, 0.2
      %v935 = vmul.f32 %v700, 0.2
      %v936 = vmul.f32 %v539, 0.2
      %v937 = vmul.f32 %v703, 0.2
      %v938 = vmul.f32 %v542, 0.2
      %v939 = vmul.f32 %v706, 0.2
      %v940 = vmul.f32 %v545, 0.2
      %v941 = vmul.f32 %v709, 0.2
      %v942 = vmul.f32 %v548, 0.2
      %v943 = vmul.f32 %v712, 0.2
      %v944 = vmul.f32 %v551, 0.2
      %v945 = vmul.f32 %v715, 0.2
      %v946 = vmul.f32 %v554, 0.2
      %v947 = vmul.f32 %v718, 0.2
      %v948 = vmul.f32 %v557, 0.2
      %v949 = vmul.f32 %v721, 0.2
      %v950 = vmul.f32 %v560, 0.2
      %v951 = vmul.f32 %v724, 0.2
      %v952 = vmul.f32 %v563, 0.2
      %v953 = vmul.f32 %v727, 0.2
      %v954 = vmul.f32 %v566, 0.2
      %v955 = vmul.f32 %v730, 0.2
      %v956 = vmul.f32 %v569, 0.2
      %v957 = vmul.f32 %v733, 0.2
      %v958 = vmul.f32 %v572, 0.2
      %v959 = vmul.f32 %v736, 0.2
      %v960 = vmul.f32 %v575, 0.2
      %v961 = vmul.f32 %v739, 0.2
      %v962 = vmul.f32 %v578, 0.2
      %v963 = vmul.f32 %v742, 0.2
      %v964 = vmul.f32 %v581, 0.2
      %v965 = vmul.f32 %v745, 0.2
      %v966 = vmul.f32 %v584, 0.2
      %v967 = vmul.f32 %v748, 0.2
      %v968 = vmul.f32 %v587, 0.2
      %v969 = vmul.f32 %v751, 0.2
      %v970 = vmul.f32 %v590, 0.2
      %v971 = vmul.f32 %v754, 0.2
      %v972 = vmul.f32 %v593, 0.2
      %v973 = vmul.f32 %v757, 0.2
      %v974 = vmul.f32 %v596, 0.2
      %v975 = vmul.f32 %v760, 0.2
      %v976 = vmul.f32 %v599, 0.2
      %v977 = vmul.f32 %v763, 0.2
      %v978 = vmul.f32 %v602, 0.2
      %v979 = vmul.f32 %v766, 0.2
      %v980 = vmul.f32 %v605, 0.2
      %v981 = vmul.f32 %v769, 0.2
      %v982 = vmul.f32 %v608, 0.2
      %v983 = vmul.f32 %v772, 0.2
      %v984 = vmul.f32 %v611, 0.2
      %v985 = vmul.f32 %v775, 0.2
      %v986 = vmul.f32 %v614, 0.2
      %v987 = vmul.f32 %v778, 0.2
      %v988 = vmul.f32 %v617, 0.2
      %v989 = vmul.f32 %v781, 0.2
      %v990 = vmul.f32 %v620, 0.2
      %v991 = vmul.f32 %v784, 0.2
      %v992 = vmul.f32 %v623, 0.2
      %v993 = vmul.f32 %v787, 0.2
      %v994 = vmul.f32 %v626, 0.2
      %v995 = vmul.f32 %v790, 0.2
      %v996 = vmul.f32 %v629, 0.2
      %v997 = vmul.f32 %v793, 0.2
      %v998 = vmul.f32 %v632, 0.2
      %v999 = vmul.f32 %v796, 0.2
      %v1000 = vmul.f32 %v635, 0.2
      %v1001 = vmul.f32 %v799, 0.2
      %v1002 = vmul.f32 %v638, 0.2
      %v1003 = vmul.f32 %v802, 0.2
      %v1004 = vmul.f32 %v641, 0.2
      %v1005 = vmul.f32 %v805, 0.2
      %v1006 = vmul.f32 %v644, 0.2
      %v1007 = vmul.f32 %v808, 0.2
      %v1008 = vmul.f32 %v647, 0.2
      %v1009 = vmul.f32 %v811, 0.2
      %v1010 = vmul.f32 %v650, 0.2
      %v1011 = vmul.f32 %v814, 0.2
      %v1012 = vsel %vm816, %v506, %v914
      %v1013 = vsel %vm817, %v670, %v915
      %v1014 = vsel %vm818, %v509, %v916
      %v1015 = vsel %vm819, %v673, %v917
      %v1016 = vsel %vm820, %v512, %v918
      %v1017 = vsel %vm821, %v676, %v919
      %v1018 = vsel %vm822, %v515, %v920
      %v1019 = vsel %vm823, %v679, %v921
      %v1020 = vsel %vm824, %v518, %v922
      %v1021 = vsel %vm825, %v682, %v923
      %v1022 = vsel %vm826, %v521, %v924
      %v1023 = vsel %vm827, %v685, %v925
      %v1024 = vsel %vm828, %v524, %v926
      %v1025 = vsel %vm829, %v688, %v927
      %v1026 = vsel %vm830, %v527, %v928
      %v1027 = vsel %vm831, %v691, %v929
      %v1028 = vsel %vm832, %v530, %v930
      %v1029 = vsel %vm833, %v694, %v931
      %v1030 = vsel %vm834, %v533, %v932
      %v1031 = vsel %vm835, %v697, %v933
      %v1032 = vsel %vm836, %v536, %v934
      %v1033 = vsel %vm837, %v700, %v935
      %v1034 = vsel %vm838, %v539, %v936
      %v1035 = vsel %vm839, %v703, %v937
      %v1036 = vsel %vm840, %v542, %v938
      %v1037 = vsel %vm841, %v706, %v939
      %v1038 = vsel %vm842, %v545, %v940
      %v1039 = vsel %vm843, %v709, %v941
      %v1040 = vsel %vm844, %v548, %v942
      %v1041 = vsel %vm845, %v712, %v943
      %v1042 = vsel %vm846, %v551, %v944
      %v1043 = vsel %vm847, %v715, %v945
      %v1044 = vsel %vm848, %v554, %v946
      %v1045 = vsel %vm849, %v718, %v947
      %v1046 = vsel %vm850, %v557, %v948
      %v1047 = vsel %vm851, %v721, %v949
      %v1048 = vsel %vm852, %v560, %v950
      %v1049 = vsel %vm853, %v724, %v951
      %v1050 = vsel %vm854, %v563, %v952
      %v1051 = vsel %vm855, %v727, %v953
      %v1052 = vsel %vm856, %v566, %v954
      %v1053 = vsel %vm857, %v730, %v955
      %v1054 = vsel %vm858, %v569, %v956
      %v1055 = vsel %vm859, %v733, %v957
      %v1056 = vsel %vm860, %v572, %v958
      %v1057 = vsel %vm861, %v736, %v959
      %v1058 = vsel %vm862, %v575, %v960
      %v1059 = vsel %vm863, %v739, %v961
      %v1060 = vsel %vm864, %v578, %v962
      %v1061 = vsel %vm865, %v742, %v963
      %v1062 = vsel %vm866, %v581, %v964
      %v1063 = vsel %vm867, %v745, %v965
      %v1064 = vsel %vm868, %v584, %v966
      %v1065 = vsel %vm869, %v748, %v967
      %v1066 = vsel %vm870, %v587, %v968
      %v1067 = vsel %vm871, %v751, %v969
      %v1068 = vsel %vm872, %v590, %v970
      %v1069 = vsel %vm873, %v754, %v971
      %v1070 = vsel %vm874, %v593, %v972
      %v1071 = vsel %vm875, %v757, %v973
      %v1072 = vsel %vm876, %v596, %v974
      %v1073 = vsel %vm877, %v760, %v975
      %v1074 = vsel %vm878, %v599, %v976
      %v1075 = vsel %vm879, %v763, %v977
      %v1076 = vsel %vm880, %v602, %v978
      %v1077 = vsel %vm881, %v766, %v979
      %v1078 = vsel %vm882, %v605, %v980
      %v1079 = vsel %vm883, %v769, %v981
      %v1080 = vsel %vm884, %v608, %v982
      %v1081 = vsel %vm885, %v772, %v983
      %v1082 = vsel %vm886, %v611, %v984
      %v1083 = vsel %vm887, %v775, %v985
      %v1084 = vsel %vm888, %v614, %v986
      %v1085 = vsel %vm889, %v778, %v987
      %v1086 = vsel %vm890, %v617, %v988
      %v1087 = vsel %vm891, %v781, %v989
      %v1088 = vsel %vm892, %v620, %v990
      %v1089 = vsel %vm893, %v784, %v991
      %v1090 = vsel %vm894, %v623, %v992
      %v1091 = vsel %vm895, %v787, %v993
      %v1092 = vsel %vm896, %v626, %v994
      %v1093 = vsel %vm897, %v790, %v995
      %v1094 = vsel %vm898, %v629, %v996
      %v1095 = vsel %vm899, %v793, %v997
      %v1096 = vsel %vm900, %v632, %v998
      %v1097 = vsel %vm901, %v796, %v999
      %v1098 = vsel %vm902, %v635, %v1000
      %v1099 = vsel %vm903, %v799, %v1001
      %v1100 = vsel %vm904, %v638, %v1002
      %v1101 = vsel %vm905, %v802, %v1003
      %v1102 = vsel %vm906, %v641, %v1004
      %v1103 = vsel %vm907, %v805, %v1005
      %v1104 = vsel %vm908, %v644, %v1006
      %v1105 = vsel %vm909, %v808, %v1007
      %v1106 = vsel %vm910, %v647, %v1008
      %v1107 = vsel %vm911, %v811, %v1009
      %v1108 = vsel %vm912, %v650, %v1010
      %v1109 = vsel %vm913, %v814, %v1011
      %v1110 = vld [vmem:[%s3] sm:$0xff]
      %v1111 = vld [vmem:[%s3 + $0x8] sm:$0xff]
      %v1112 = vld [vmem:[%s3 + $0x10] sm:$0xff]
      %v1113 = vld [vmem:[%s3 + $0x18] sm:$0xff]
      %v1114 = vld [vmem:[%s3 + $0x20] sm:$0xff]
      %v1115 = vld [vmem:[%s3 + $0x28] sm:$0xff]
      %v1116 = vld [vmem:[%s3 + $0x30] sm:$0xff]
      %v1117 = vld [vmem:[%s3 + $0x38] sm:$0xff]
      %v1118 = vld [vmem:[%s3 + $0x40] sm:$0xff]
      %v1119 = vld [vmem:[%s3 + $0x48] sm:$0xff]
      %v1120 = vld [vmem:[%s3 + $0x50] sm:$0xff]
      %v1121 = vld [vmem:[%s3 + $0x58] sm:$0xff]
      %v1122 = vld [vmem:[%s3 + $0x60] sm:$0xff]
      %v1123 = vld [vmem:[%s3 + $0x68] sm:$0xff]
      %v1124 = vld [vmem:[%s3 + $0x70] sm:$0xff]
      %v1125 = vld [vmem:[%s3 + $0x78] sm:$0xff]
      %v1126 = vld [vmem:[%s3 + $0x80] sm:$0xff]
      %v1127 = vld [vmem:[%s3 + $0x88] sm:$0xff]
      %v1128 = vld [vmem:[%s3 + $0x90] sm:$0xff]
      %v1129 = vld [vmem:[%s3 + $0x98] sm:$0xff]
      %v1130 = vld [vmem:[%s3 + $0xa0] sm:$0xff]
      %v1131 = vld [vmem:[%s3 + $0xa8] sm:$0xff]
      %v1132 = vld [vmem:[%s3 + $0xb0] sm:$0xff]
      %v1133 = vld [vmem:[%s3 + $0xb8] sm:$0xff]
      %v1134 = vld [vmem:[%s3 + $0xc0] sm:$0xff]
      %v1135 = vld [vmem:[%s3 + $0xc8] sm:$0xff]
      %v1136 = vld [vmem:[%s3 + $0xd0] sm:$0xff]
      %v1137 = vld [vmem:[%s3 + $0xd8] sm:$0xff]
      %v1138 = vld [vmem:[%s3 + $0xe0] sm:$0xff]
      %v1139 = vld [vmem:[%s3 + $0xe8] sm:$0xff]
      %v1140 = vld [vmem:[%s3 + $0xf0] sm:$0xff]
      %v1141 = vld [vmem:[%s3 + $0xf8] sm:$0xff]
      %v1142 = vld [vmem:[%s4] sm:$0x1]
      %v1144 = vperm.slane %v1142, 0
      %1146 = vmatpush.msra.mxu0 %v1125
      %1147 = vmatpush.msra.mxu0 %v1124
      %1148 = vmatpush.msra.mxu0 %v1123
      %1149 = vmatpush.msra.mxu0 %v1122
      %1150 = vmatpush.msra.mxu0 %v1121
      %1151 = vmatpush.msra.mxu0 %v1120
      %1152 = vmatpush.msra.mxu0 %v1119
      %1153 = vmatpush.msra.mxu0 %v1118
      %1154 = vmatpush.msra.mxu0 %v1117
      %1155 = vmatpush.msra.mxu0 %v1116
      %1156 = vmatpush.msra.mxu0 %v1115
      %1157 = vmatpush.msra.mxu0 %v1114
      %1158 = vmatpush.msra.mxu0 %v1113
      %1159 = vmatpush.msra.mxu0 %v1112
      %1160 = vmatpush.msra.mxu0 %v1111
      %1161 = vmatpush.msra.mxu0 %v1110
      %1162 = vmatmul.f32.gmra.mxu0 %v1012
      %v1163 = vpop.f32.mrf.mxu0
      %v1164 = vadd.f32 %v1144, %v1163
      %1165 = vmatmul.f32.gmra.mxu0 %v1014
      %v1166 = vpop.f32.mrf.mxu0
      %v1167 = vadd.f32 %v1144, %v1166
      %1168 = vmatmul.f32.gmra.mxu0 %v1016
      %v1169 = vpop.f32.mrf.mxu0
      %v1170 = vadd.f32 %v1144, %v1169
      %1171 = vmatmul.f32.gmra.mxu0 %v1018
      %v1172 = vpop.f32.mrf.mxu0
      %v1173 = vadd.f32 %v1144, %v1172
      %1174 = vmatmul.f32.gmra.mxu0 %v1020
      %v1175 = vpop.f32.mrf.mxu0
      %v1176 = vadd.f32 %v1144, %v1175
      %1177 = vmatmul.f32.gmra.mxu0 %v1022
      %v1178 = vpop.f32.mrf.mxu0
      %v1179 = vadd.f32 %v1144, %v1178
      %1180 = vmatmul.f32.gmra.mxu0 %v1024
      %v1181 = vpop.f32.mrf.mxu0
      %v1182 = vadd.f32 %v1144, %v1181
      %1183 = vmatmul.f32.gmra.mxu0 %v1026
      %v1184 = vpop.f32.mrf.mxu0
      %v1185 = vadd.f32 %v1144, %v1184
      %1186 = vmatmul.f32.gmra.mxu0 %v1028
      %v1187 = vpop.f32.mrf.mxu0
      %v1188 = vadd.f32 %v1144, %v1187
      %1189 = vmatmul.f32.gmra.mxu0 %v1030
      %v1190 = vpop.f32.mrf.mxu0
      %v1191 = vadd.f32 %v1144, %v1190
      %1192 = vmatmul.f32.gmra.mxu0 %v1032
      %v1193 = vpop.f32.mrf.mxu0
      %v1194 = vadd.f32 %v1144, %v1193
      %1195 = vmatmul.f32.gmra.mxu0 %v1034
      %v1196 = vpop.f32.mrf.mxu0
      %v1197 = vadd.f32 %v1144, %v1196
      %1198 = vmatmul.f32.gmra.mxu0 %v1036
      %v1199 = vpop.f32.mrf.mxu0
      %v1200 = vadd.f32 %v1144, %v1199
      %1201 = vmatmul.f32.gmra.mxu0 %v1038
      %v1202 = vpop.f32.mrf.mxu0
      %v1203 = vadd.f32 %v1144, %v1202
      %1204 = vmatmul.f32.gmra.mxu0 %v1040
      %v1205 = vpop.f32.mrf.mxu0
      %v1206 = vadd.f32 %v1144, %v1205
      %1207 = vmatmul.f32.gmra.mxu0 %v1042
      %v1208 = vpop.f32.mrf.mxu0
      %v1209 = vadd.f32 %v1144, %v1208
      %1210 = vmatmul.f32.gmra.mxu0 %v1044
      %v1211 = vpop.f32.mrf.mxu0
      %v1212 = vadd.f32 %v1144, %v1211
      %1213 = vmatmul.f32.gmra.mxu0 %v1046
      %v1214 = vpop.f32.mrf.mxu0
      %v1215 = vadd.f32 %v1144, %v1214
      %1216 = vmatmul.f32.gmra.mxu0 %v1048
      %v1217 = vpop.f32.mrf.mxu0
      %v1218 = vadd.f32 %v1144, %v1217
      %1219 = vmatmul.f32.gmra.mxu0 %v1050
      %v1220 = vpop.f32.mrf.mxu0
      %v1221 = vadd.f32 %v1144, %v1220
      %1222 = vmatmul.f32.gmra.mxu0 %v1052
      %v1223 = vpop.f32.mrf.mxu0
      %v1224 = vadd.f32 %v1144, %v1223
      %1225 = vmatmul.f32.gmra.mxu0 %v1054
      %v1226 = vpop.f32.mrf.mxu0
      %v1227 = vadd.f32 %v1144, %v1226
      %1228 = vmatmul.f32.gmra.mxu0 %v1056
      %v1229 = vpop.f32.mrf.mxu0
      %v1230 = vadd.f32 %v1144, %v1229
      %1231 = vmatmul.f32.gmra.mxu0 %v1058
      %v1232 = vpop.f32.mrf.mxu0
      %v1233 = vadd.f32 %v1144, %v1232
      %1234 = vmatmul.f32.gmra.mxu0 %v1060
      %v1235 = vpop.f32.mrf.mxu0
      %v1236 = vadd.f32 %v1144, %v1235
      %1237 = vmatmul.f32.gmra.mxu0 %v1062
      %v1238 = vpop.f32.mrf.mxu0
      %v1239 = vadd.f32 %v1144, %v1238
      %1240 = vmatmul.f32.gmra.mxu0 %v1064
      %v1241 = vpop.f32.mrf.mxu0
      %v1242 = vadd.f32 %v1144, %v1241
      %1243 = vmatmul.f32.gmra.mxu0 %v1066
      %v1244 = vpop.f32.mrf.mxu0
      %v1245 = vadd.f32 %v1144, %v1244
      %1246 = vmatmul.f32.gmra.mxu0 %v1068
      %v1247 = vpop.f32.mrf.mxu0
      %v1248 = vadd.f32 %v1144, %v1247
      %1249 = vmatmul.f32.gmra.mxu0 %v1070
      %v1250 = vpop.f32.mrf.mxu0
      %v1251 = vadd.f32 %v1144, %v1250
      %1252 = vmatmul.f32.gmra.mxu0 %v1072
      %v1253 = vpop.f32.mrf.mxu0
      %v1254 = vadd.f32 %v1144, %v1253
      %1255 = vmatmul.f32.gmra.mxu0 %v1074
      %v1256 = vpop.f32.mrf.mxu0
      %v1257 = vadd.f32 %v1144, %v1256
      %1258 = vmatmul.f32.gmra.mxu0 %v1076
      %v1259 = vpop.f32.mrf.mxu0
      %v1260 = vadd.f32 %v1144, %v1259
      %1261 = vmatmul.f32.gmra.mxu0 %v1078
      %v1262 = vpop.f32.mrf.mxu0
      %v1263 = vadd.f32 %v1144, %v1262
      %1264 = vmatmul.f32.gmra.mxu0 %v1080
      %v1265 = vpop.f32.mrf.mxu0
      %v1266 = vadd.f32 %v1144, %v1265
      %1267 = vmatmul.f32.gmra.mxu0 %v1082
      %v1268 = vpop.f32.mrf.mxu0
      %v1269 = vadd.f32 %v1144, %v1268
      %1270 = vmatmul.f32.gmra.mxu0 %v1084
      %v1271 = vpop.f32.mrf.mxu0
      %v1272 = vadd.f32 %v1144, %v1271
      %1273 = vmatmul.f32.gmra.mxu0 %v1086
      %v1274 = vpop.f32.mrf.mxu0
      %v1275 = vadd.f32 %v1144, %v1274
      %1276 = vmatmul.f32.gmra.mxu0 %v1088
      %v1277 = vpop.f32.mrf.mxu0
      %v1278 = vadd.f32 %v1144, %v1277
      %1279 = vmatmul.f32.gmra.mxu0 %v1090
      %v1280 = vpop.f32.mrf.mxu0
      %v1281 = vadd.f32 %v1144, %v1280
      %1282 = vmatmul.f32.gmra.mxu0 %v1092
      %v1283 = vpop.f32.mrf.mxu0
      %v1284 = vadd.f32 %v1144, %v1283
      %1285 = vmatmul.f32.gmra.mxu0 %v1094
      %v1286 = vpop.f32.mrf.mxu0
      %v1287 = vadd.f32 %v1144, %v1286
      %1288 = vmatmul.f32.gmra.mxu0 %v1096
      %v1289 = vpop.f32.mrf.mxu0
      %v1290 = vadd.f32 %v1144, %v1289
      %1291 = vmatmul.f32.gmra.mxu0 %v1098
      %v1292 = vpop.f32.mrf.mxu0
      %v1293 = vadd.f32 %v1144, %v1292
      %1294 = vmatmul.f32.gmra.mxu0 %v1100
      %v1295 = vpop.f32.mrf.mxu0
      %v1296 = vadd.f32 %v1144, %v1295
      %1297 = vmatmul.f32.gmra.mxu0 %v1102
      %v1298 = vpop.f32.mrf.mxu0
      %v1299 = vadd.f32 %v1144, %v1298
      %1300 = vmatmul.f32.gmra.mxu0 %v1104
      %v1301 = vpop.f32.mrf.mxu0
      %v1302 = vadd.f32 %v1144, %v1301
      %1303 = vmatmul.f32.gmra.mxu0 %v1106
      %v1304 = vpop.f32.mrf.mxu0
      %v1305 = vadd.f32 %v1144, %v1304
      %1306 = vmatmul.f32.gmra.mxu0 %v1108
      %v1307 = vpop.f32.mrf.mxu0
      %v1308 = vadd.f32 %v1144, %v1307
      %1309 = vdwg.mxu0
      %1310 = vmatpush.msra.mxu0 %v1141
      %1311 = vmatpush.msra.mxu0 %v1140
      %1312 = vmatpush.msra.mxu0 %v1139
      %1313 = vmatpush.msra.mxu0 %v1138
      %1314 = vmatpush.msra.mxu0 %v1137
      %1315 = vmatpush.msra.mxu0 %v1136
      %1316 = vmatpush.msra.mxu0 %v1135
      %1317 = vmatpush.msra.mxu0 %v1134
      %1318 = vmatpush.msra.mxu0 %v1133
      %1319 = vmatpush.msra.mxu0 %v1132
      %1320 = vmatpush.msra.mxu0 %v1131
      %1321 = vmatpush.msra.mxu0 %v1130
      %1322 = vmatpush.msra.mxu0 %v1129
      %1323 = vmatpush.msra.mxu0 %v1128
      %1324 = vmatpush.msra.mxu0 %v1127
      %1325 = vmatpush.msra.mxu0 %v1126
      %1326 = vmatmul.f32.gmra.mxu0 %v1013
      %v1327 = vpop.f32.mrf.mxu0
      %v1328 = vadd.f32 %v1164, %v1327
      %1329 = vmatmul.f32.gmra.mxu0 %v1015
      %v1330 = vpop.f32.mrf.mxu0
      %v1331 = vadd.f32 %v1167, %v1330
      %1332 = vmatmul.f32.gmra.mxu0 %v1017
      %v1333 = vpop.f32.mrf.mxu0
      %v1334 = vadd.f32 %v1170, %v1333
      %1335 = vmatmul.f32.gmra.mxu0 %v1019
      %v1336 = vpop.f32.mrf.mxu0
      %v1337 = vadd.f32 %v1173, %v1336
      %1338 = vmatmul.f32.gmra.mxu0 %v1021
      %v1339 = vpop.f32.mrf.mxu0
      %v1340 = vadd.f32 %v1176, %v1339
      %1341 = vmatmul.f32.gmra.mxu0 %v1023
      %v1342 = vpop.f32.mrf.mxu0
      %v1343 = vadd.f32 %v1179, %v1342
      %1344 = vmatmul.f32.gmra.mxu0 %v1025
      %v1345 = vpop.f32.mrf.mxu0
      %v1346 = vadd.f32 %v1182, %v1345
      %1347 = vmatmul.f32.gmra.mxu0 %v1027
      %v1348 = vpop.f32.mrf.mxu0
      %v1349 = vadd.f32 %v1185, %v1348
      %1350 = vmatmul.f32.gmra.mxu0 %v1029
      %v1351 = vpop.f32.mrf.mxu0
      %v1352 = vadd.f32 %v1188, %v1351
      %1353 = vmatmul.f32.gmra.mxu0 %v1031
      %v1354 = vpop.f32.mrf.mxu0
      %v1355 = vadd.f32 %v1191, %v1354
      %1356 = vmatmul.f32.gmra.mxu0 %v1033
      %v1357 = vpop.f32.mrf.mxu0
      %v1358 = vadd.f32 %v1194, %v1357
      %1359 = vmatmul.f32.gmra.mxu0 %v1035
      %v1360 = vpop.f32.mrf.mxu0
      %v1361 = vadd.f32 %v1197, %v1360
      %1362 = vmatmul.f32.gmra.mxu0 %v1037
      %v1363 = vpop.f32.mrf.mxu0
      %v1364 = vadd.f32 %v1200, %v1363
      %1365 = vmatmul.f32.gmra.mxu0 %v1039
      %v1366 = vpop.f32.mrf.mxu0
      %v1367 = vadd.f32 %v1203, %v1366
      %1368 = vmatmul.f32.gmra.mxu0 %v1041
      %v1369 = vpop.f32.mrf.mxu0
      %v1370 = vadd.f32 %v1206, %v1369
      %1371 = vmatmul.f32.gmra.mxu0 %v1043
      %v1372 = vpop.f32.mrf.mxu0
      %v1373 = vadd.f32 %v1209, %v1372
      %1374 = vmatmul.f32.gmra.mxu0 %v1045
      %v1375 = vpop.f32.mrf.mxu0
      %v1376 = vadd.f32 %v1212, %v1375
      %1377 = vmatmul.f32.gmra.mxu0 %v1047
      %v1378 = vpop.f32.mrf.mxu0
      %v1379 = vadd.f32 %v1215, %v1378
      %1380 = vmatmul.f32.gmra.mxu0 %v1049
      %v1381 = vpop.f32.mrf.mxu0
      %v1382 = vadd.f32 %v1218, %v1381
      %1383 = vmatmul.f32.gmra.mxu0 %v1051
      %v1384 = vpop.f32.mrf.mxu0
      %v1385 = vadd.f32 %v1221, %v1384
      %1386 = vmatmul.f32.gmra.mxu0 %v1053
      %v1387 = vpop.f32.mrf.mxu0
      %v1388 = vadd.f32 %v1224, %v1387
      %1389 = vmatmul.f32.gmra.mxu0 %v1055
      %v1390 = vpop.f32.mrf.mxu0
      %v1391 = vadd.f32 %v1227, %v1390
      %1392 = vmatmul.f32.gmra.mxu0 %v1057
      %v1393 = vpop.f32.mrf.mxu0
      %v1394 = vadd.f32 %v1230, %v1393
      %1395 = vmatmul.f32.gmra.mxu0 %v1059
      %v1396 = vpop.f32.mrf.mxu0
      %v1397 = vadd.f32 %v1233, %v1396
      %1398 = vmatmul.f32.gmra.mxu0 %v1061
      %v1399 = vpop.f32.mrf.mxu0
      %v1400 = vadd.f32 %v1236, %v1399
      %1401 = vmatmul.f32.gmra.mxu0 %v1063
      %v1402 = vpop.f32.mrf.mxu0
      %v1403 = vadd.f32 %v1239, %v1402
      %1404 = vmatmul.f32.gmra.mxu0 %v1065
      %v1405 = vpop.f32.mrf.mxu0
      %v1406 = vadd.f32 %v1242, %v1405
      %1407 = vmatmul.f32.gmra.mxu0 %v1067
      %v1408 = vpop.f32.mrf.mxu0
      %v1409 = vadd.f32 %v1245, %v1408
      %1410 = vmatmul.f32.gmra.mxu0 %v1069
      %v1411 = vpop.f32.mrf.mxu0
      %v1412 = vadd.f32 %v1248, %v1411
      %1413 = vmatmul.f32.gmra.mxu0 %v1071
      %v1414 = vpop.f32.mrf.mxu0
      %v1415 = vadd.f32 %v1251, %v1414
      %1416 = vmatmul.f32.gmra.mxu0 %v1073
      %v1417 = vpop.f32.mrf.mxu0
      %v1418 = vadd.f32 %v1254, %v1417
      %1419 = vmatmul.f32.gmra.mxu0 %v1075
      %v1420 = vpop.f32.mrf.mxu0
      %v1421 = vadd.f32 %v1257, %v1420
      %1422 = vmatmul.f32.gmra.mxu0 %v1077
      %v1423 = vpop.f32.mrf.mxu0
      %v1424 = vadd.f32 %v1260, %v1423
      %1425 = vmatmul.f32.gmra.mxu0 %v1079
      %v1426 = vpop.f32.mrf.mxu0
      %v1427 = vadd.f32 %v1263, %v1426
      %1428 = vmatmul.f32.gmra.mxu0 %v1081
      %v1429 = vpop.f32.mrf.mxu0
      %v1430 = vadd.f32 %v1266, %v1429
      %1431 = vmatmul.f32.gmra.mxu0 %v1083
      %v1432 = vpop.f32.mrf.mxu0
      %v1433 = vadd.f32 %v1269, %v1432
      %1434 = vmatmul.f32.gmra.mxu0 %v1085
      %v1435 = vpop.f32.mrf.mxu0
      %v1436 = vadd.f32 %v1272, %v1435
      %1437 = vmatmul.f32.gmra.mxu0 %v1087
      %v1438 = vpop.f32.mrf.mxu0
      %v1439 = vadd.f32 %v1275, %v1438
      %1440 = vmatmul.f32.gmra.mxu0 %v1089
      %v1441 = vpop.f32.mrf.mxu0
      %v1442 = vadd.f32 %v1278, %v1441
      %1443 = vmatmul.f32.gmra.mxu0 %v1091
      %v1444 = vpop.f32.mrf.mxu0
      %v1445 = vadd.f32 %v1281, %v1444
      %1446 = vmatmul.f32.gmra.mxu0 %v1093
      %v1447 = vpop.f32.mrf.mxu0
      %v1448 = vadd.f32 %v1284, %v1447
      %1449 = vmatmul.f32.gmra.mxu0 %v1095
      %v1450 = vpop.f32.mrf.mxu0
      %v1451 = vadd.f32 %v1287, %v1450
      %1452 = vmatmul.f32.gmra.mxu0 %v1097
      %v1453 = vpop.f32.mrf.mxu0
      %v1454 = vadd.f32 %v1290, %v1453
      %1455 = vmatmul.f32.gmra.mxu0 %v1099
      %v1456 = vpop.f32.mrf.mxu0
      %v1457 = vadd.f32 %v1293, %v1456
      %1458 = vmatmul.f32.gmra.mxu0 %v1101
      %v1459 = vpop.f32.mrf.mxu0
      %v1460 = vadd.f32 %v1296, %v1459
      %1461 = vmatmul.f32.gmra.mxu0 %v1103
      %v1462 = vpop.f32.mrf.mxu0
      %v1463 = vadd.f32 %v1299, %v1462
      %1464 = vmatmul.f32.gmra.mxu0 %v1105
      %v1465 = vpop.f32.mrf.mxu0
      %v1466 = vadd.f32 %v1302, %v1465
      %1467 = vmatmul.f32.gmra.mxu0 %v1107
      %v1468 = vpop.f32.mrf.mxu0
      %v1469 = vadd.f32 %v1305, %v1468
      %1470 = vmatmul.f32.gmra.mxu0 %v1109
      %v1471 = vpop.f32.mrf.mxu0
      %v1472 = vadd.f32 %v1308, %v1471
      %1473 = vdwg.mxu0
      %vm1474 = vcmp.ge.f32.partialorder %v1328, 0.0
      %vm1475 = vcmp.ge.f32.partialorder %v1331, 0.0
      %vm1476 = vcmp.ge.f32.partialorder %v1334, 0.0
      %vm1477 = vcmp.ge.f32.partialorder %v1337, 0.0
      %vm1478 = vcmp.ge.f32.partialorder %v1340, 0.0
      %vm1479 = vcmp.ge.f32.partialorder %v1343, 0.0
      %vm1480 = vcmp.ge.f32.partialorder %v1346, 0.0
      %vm1481 = vcmp.ge.f32.partialorder %v1349, 0.0
      %vm1482 = vcmp.ge.f32.partialorder %v1352, 0.0
      %vm1483 = vcmp.ge.f32.partialorder %v1355, 0.0
      %vm1484 = vcmp.ge.f32.partialorder %v1358, 0.0
      %vm1485 = vcmp.ge.f32.partialorder %v1361, 0.0
      %vm1486 = vcmp.ge.f32.partialorder %v1364, 0.0
      %vm1487 = vcmp.ge.f32.partialorder %v1367, 0.0
      %vm1488 = vcmp.ge.f32.partialorder %v1370, 0.0
      %vm1489 = vcmp.ge.f32.partialorder %v1373, 0.0
      %vm1490 = vcmp.ge.f32.partialorder %v1376, 0.0
      %vm1491 = vcmp.ge.f32.partialorder %v1379, 0.0
      %vm1492 = vcmp.ge.f32.partialorder %v1382, 0.0
      %vm1493 = vcmp.ge.f32.partialorder %v1385, 0.0
      %vm1494 = vcmp.ge.f32.partialorder %v1388, 0.0
      %vm1495 = vcmp.ge.f32.partialorder %v1391, 0.0
      %vm1496 = vcmp.ge.f32.partialorder %v1394, 0.0
      %vm1497 = vcmp.ge.f32.partialorder %v1397, 0.0
      %vm1498 = vcmp.ge.f32.partialorder %v1400, 0.0
      %vm1499 = vcmp.ge.f32.partialorder %v1403, 0.0
      %vm1500 = vcmp.ge.f32.partialorder %v1406, 0.0
      %vm1501 = vcmp.ge.f32.partialorder %v1409, 0.0
      %vm1502 = vcmp.ge.f32.partialorder %v1412, 0.0
      %vm1503 = vcmp.ge.f32.partialorder %v1415, 0.0
      %vm1504 = vcmp.ge.f32.partialorder %v1418, 0.0
      %vm1505 = vcmp.ge.f32.partialorder %v1421, 0.0
      %vm1506 = vcmp.ge.f32.partialorder %v1424, 0.0
      %vm1507 = vcmp.ge.f32.partialorder %v1427, 0.0
      %vm1508 = vcmp.ge.f32.partialorder %v1430, 0.0
      %vm1509 = vcmp.ge.f32.partialorder %v1433, 0.0
      %vm1510 = vcmp.ge.f32.partialorder %v1436, 0.0
      %vm1511 = vcmp.ge.f32.partialorder %v1439, 0.0
      %vm1512 = vcmp.ge.f32.partialorder %v1442, 0.0
      %vm1513 = vcmp.ge.f32.partialorder %v1445, 0.0
      %vm1514 = vcmp.ge.f32.partialorder %v1448, 0.0
      %vm1515 = vcmp.ge.f32.partialorder %v1451, 0.0
      %vm1516 = vcmp.ge.f32.partialorder %v1454, 0.0
      %vm1517 = vcmp.ge.f32.partialorder %v1457, 0.0
      %vm1518 = vcmp.ge.f32.partialorder %v1460, 0.0
      %vm1519 = vcmp.ge.f32.partialorder %v1463, 0.0
      %vm1520 = vcmp.ge.f32.partialorder %v1466, 0.0
      %vm1521 = vcmp.ge.f32.partialorder %v1469, 0.0
      %vm1522 = vcmp.ge.f32.partialorder %v1472, 0.0
      %v1523 = vmul.f32 %v1328, 0.2
      %v1524 = vmul.f32 %v1331, 0.2
      %v1525 = vmul.f32 %v1334, 0.2
      %v1526 = vmul.f32 %v1337, 0.2
      %v1527 = vmul.f32 %v1340, 0.2
      %v1528 = vmul.f32 %v1343, 0.2
      %v1529 = vmul.f32 %v1346, 0.2
      %v1530 = vmul.f32 %v1349, 0.2
      %v1531 = vmul.f32 %v1352, 0.2
      %v1532 = vmul.f32 %v1355, 0.2
      %v1533 = vmul.f32 %v1358, 0.2
      %v1534 = vmul.f32 %v1361, 0.2
      %v1535 = vmul.f32 %v1364, 0.2
      %v1536 = vmul.f32 %v1367, 0.2
      %v1537 = vmul.f32 %v1370, 0.2
      %v1538 = vmul.f32 %v1373, 0.2
      %v1539 = vmul.f32 %v1376, 0.2
      %v1540 = vmul.f32 %v1379, 0.2
      %v1541 = vmul.f32 %v1382, 0.2
      %v1542 = vmul.f32 %v1385, 0.2
      %v1543 = vmul.f32 %v1388, 0.2
      %v1544 = vmul.f32 %v1391, 0.2
      %v1545 = vmul.f32 %v1394, 0.2
      %v1546 = vmul.f32 %v1397, 0.2
      %v1547 = vmul.f32 %v1400, 0.2
      %v1548 = vmul.f32 %v1403, 0.2
      %v1549 = vmul.f32 %v1406, 0.2
      %v1550 = vmul.f32 %v1409, 0.2
      %v1551 = vmul.f32 %v1412, 0.2
      %v1552 = vmul.f32 %v1415, 0.2
      %v1553 = vmul.f32 %v1418, 0.2
      %v1554 = vmul.f32 %v1421, 0.2
      %v1555 = vmul.f32 %v1424, 0.2
      %v1556 = vmul.f32 %v1427, 0.2
      %v1557 = vmul.f32 %v1430, 0.2
      %v1558 = vmul.f32 %v1433, 0.2
      %v1559 = vmul.f32 %v1436, 0.2
      %v1560 = vmul.f32 %v1439, 0.2
      %v1561 = vmul.f32 %v1442, 0.2
      %v1562 = vmul.f32 %v1445, 0.2
      %v1563 = vmul.f32 %v1448, 0.2
      %v1564 = vmul.f32 %v1451, 0.2
      %v1565 = vmul.f32 %v1454, 0.2
      %v1566 = vmul.f32 %v1457, 0.2
      %v1567 = vmul.f32 %v1460, 0.2
      %v1568 = vmul.f32 %v1463, 0.2
      %v1569 = vmul.f32 %v1466, 0.2
      %v1570 = vmul.f32 %v1469, 0.2
      %v1571 = vmul.f32 %v1472, 0.2
      %v1572 = vsel %vm1474, %v1328, %v1523
      %v1573 = vsel %vm1475, %v1331, %v1524
      %v1574 = vsel %vm1476, %v1334, %v1525
      %v1575 = vsel %vm1477, %v1337, %v1526
      %v1576 = vsel %vm1478, %v1340, %v1527
      %v1577 = vsel %vm1479, %v1343, %v1528
      %v1578 = vsel %vm1480, %v1346, %v1529
      %v1579 = vsel %vm1481, %v1349, %v1530
      %v1580 = vsel %vm1482, %v1352, %v1531
      %v1581 = vsel %vm1483, %v1355, %v1532
      %v1582 = vsel %vm1484, %v1358, %v1533
      %v1583 = vsel %vm1485, %v1361, %v1534
      %v1584 = vsel %vm1486, %v1364, %v1535
      %v1585 = vsel %vm1487, %v1367, %v1536
      %v1586 = vsel %vm1488, %v1370, %v1537
      %v1587 = vsel %vm1489, %v1373, %v1538
      %v1588 = vsel %vm1490, %v1376, %v1539
      %v1589 = vsel %vm1491, %v1379, %v1540
      %v1590 = vsel %vm1492, %v1382, %v1541
      %v1591 = vsel %vm1493, %v1385, %v1542
      %v1592 = vsel %vm1494, %v1388, %v1543
      %v1593 = vsel %vm1495, %v1391, %v1544
      %v1594 = vsel %vm1496, %v1394, %v1545
      %v1595 = vsel %vm1497, %v1397, %v1546
      %v1596 = vsel %vm1498, %v1400, %v1547
      %v1597 = vsel %vm1499, %v1403, %v1548
      %v1598 = vsel %vm1500, %v1406, %v1549
      %v1599 = vsel %vm1501, %v1409, %v1550
      %v1600 = vsel %vm1502, %v1412, %v1551
      %v1601 = vsel %vm1503, %v1415, %v1552
      %v1602 = vsel %vm1504, %v1418, %v1553
      %v1603 = vsel %vm1505, %v1421, %v1554
      %v1604 = vsel %vm1506, %v1424, %v1555
      %v1605 = vsel %vm1507, %v1427, %v1556
      %v1606 = vsel %vm1508, %v1430, %v1557
      %v1607 = vsel %vm1509, %v1433, %v1558
      %v1608 = vsel %vm1510, %v1436, %v1559
      %v1609 = vsel %vm1511, %v1439, %v1560
      %v1610 = vsel %vm1512, %v1442, %v1561
      %v1611 = vsel %vm1513, %v1445, %v1562
      %v1612 = vsel %vm1514, %v1448, %v1563
      %v1613 = vsel %vm1515, %v1451, %v1564
      %v1614 = vsel %vm1516, %v1454, %v1565
      %v1615 = vsel %vm1517, %v1457, %v1566
      %v1616 = vsel %vm1518, %v1460, %v1567
      %v1617 = vsel %vm1519, %v1463, %v1568
      %v1618 = vsel %vm1520, %v1466, %v1569
      %v1619 = vsel %vm1521, %v1469, %v1570
      %v1620 = vsel %vm1522, %v1472, %v1571
      %v1670 = vrot.slane %v1572, 1
      %v1671 = vrot.slane %v1572, 2
      %v1672 = vrot.slane %v1572, 3
      %v1673 = vrot.slane %v1572, 4
      %v1674 = vrot.slane %v1572, 5
      %v1675 = vrot.slane %v1572, 6
      %v1676 = vrot.slane %v1572, 7
      %v1677 = vrot.slane %v1573, 1
      %v1678 = vrot.slane %v1573, 2
      %v1679 = vrot.slane %v1573, 3
      %v1680 = vrot.slane %v1573, 4
      %v1681 = vrot.slane %v1573, 5
      %v1682 = vrot.slane %v1573, 6
      %v1683 = vrot.slane %v1573, 7
      %v1684 = vrot.slane %v1574, 1
      %v1685 = vrot.slane %v1574, 2
      %v1686 = vrot.slane %v1574, 3
      %v1687 = vrot.slane %v1574, 4
      %v1688 = vrot.slane %v1574, 5
      %v1689 = vrot.slane %v1574, 6
      %v1690 = vrot.slane %v1574, 7
      %v1691 = vrot.slane %v1575, 1
      %v1692 = vrot.slane %v1575, 2
      %v1693 = vrot.slane %v1575, 3
      %v1694 = vrot.slane %v1575, 4
      %v1695 = vrot.slane %v1575, 5
      %v1696 = vrot.slane %v1575, 6
      %v1697 = vrot.slane %v1575, 7
      %v1698 = vrot.slane %v1576, 1
      %v1699 = vrot.slane %v1576, 2
      %v1700 = vrot.slane %v1576, 3
      %v1701 = vrot.slane %v1576, 4
      %v1702 = vrot.slane %v1576, 5
      %v1703 = vrot.slane %v1576, 6
      %v1704 = vrot.slane %v1576, 7
      %v1705 = vrot.slane %v1577, 1
      %v1706 = vrot.slane %v1577, 2
      %v1707 = vrot.slane %v1577, 3
      %v1708 = vrot.slane %v1577, 4
      %v1709 = vrot.slane %v1577, 5
      %v1710 = vrot.slane %v1577, 6
      %v1711 = vrot.slane %v1577, 7
      %v1712 = vrot.slane %v1578, 1
      %v1713 = vrot.slane %v1578, 2
      %v1714 = vrot.slane %v1578, 3
      %v1715 = vrot.slane %v1578, 4
      %v1716 = vrot.slane %v1578, 5
      %v1717 = vrot.slane %v1578, 6
      %v1718 = vrot.slane %v1578, 7
      %v1719 = vrot.slane %v1579, 1
      %v1720 = vrot.slane %v1579, 2
      %v1721 = vrot.slane %v1579, 3
      %v1722 = vrot.slane %v1579, 4
      %v1723 = vrot.slane %v1579, 5
      %v1724 = vrot.slane %v1579, 6
      %v1725 = vrot.slane %v1579, 7
      %v1726 = vrot.slane %v1580, 1
      %v1727 = vrot.slane %v1580, 2
      %v1728 = vrot.slane %v1580, 3
      %v1729 = vrot.slane %v1580, 4
      %v1730 = vrot.slane %v1580, 5
      %v1731 = vrot.slane %v1580, 6
      %v1732 = vrot.slane %v1580, 7
      %v1733 = vrot.slane %v1581, 1
      %v1734 = vrot.slane %v1581, 2
      %v1735 = vrot.slane %v1581, 3
      %v1736 = vrot.slane %v1581, 4
      %v1737 = vrot.slane %v1581, 5
      %v1738 = vrot.slane %v1581, 6
      %v1739 = vrot.slane %v1581, 7
      %v1740 = vrot.slane %v1582, 1
      %v1741 = vrot.slane %v1582, 2
      %v1742 = vrot.slane %v1582, 3
      %v1743 = vrot.slane %v1582, 4
      %v1744 = vrot.slane %v1582, 5
      %v1745 = vrot.slane %v1582, 6
      %v1746 = vrot.slane %v1582, 7
      %v1747 = vrot.slane %v1583, 1
      %v1748 = vrot.slane %v1583, 2
      %v1749 = vrot.slane %v1583, 3
      %v1750 = vrot.slane %v1583, 4
      %v1751 = vrot.slane %v1583, 5
      %v1752 = vrot.slane %v1583, 6
      %v1753 = vrot.slane %v1583, 7
      %v1754 = vrot.slane %v1584, 1
      %v1755 = vrot.slane %v1584, 2
      %v1756 = vrot.slane %v1584, 3
      %v1757 = vrot.slane %v1584, 4
      %v1758 = vrot.slane %v1584, 5
      %v1759 = vrot.slane %v1584, 6
      %v1760 = vrot.slane %v1584, 7
      %v1761 = vrot.slane %v1585, 1
      %v1762 = vrot.slane %v1585, 2
      %v1763 = vrot.slane %v1585, 3
      %v1764 = vrot.slane %v1585, 4
      %v1765 = vrot.slane %v1585, 5
      %v1766 = vrot.slane %v1585, 6
      %v1767 = vrot.slane %v1585, 7
      %v1768 = vrot.slane %v1586, 1
      %v1769 = vrot.slane %v1586, 2
      %v1770 = vrot.slane %v1586, 3
      %v1771 = vrot.slane %v1586, 4
      %v1772 = vrot.slane %v1586, 5
      %v1773 = vrot.slane %v1586, 6
      %v1774 = vrot.slane %v1586, 7
      %v1775 = vrot.slane %v1587, 1
      %v1776 = vrot.slane %v1587, 2
      %v1777 = vrot.slane %v1587, 3
      %v1778 = vrot.slane %v1587, 4
      %v1779 = vrot.slane %v1587, 5
      %v1780 = vrot.slane %v1587, 6
      %v1781 = vrot.slane %v1587, 7
      %v1782 = vrot.slane %v1588, 1
      %v1783 = vrot.slane %v1588, 2
      %v1784 = vrot.slane %v1588, 3
      %v1785 = vrot.slane %v1588, 4
      %v1786 = vrot.slane %v1588, 5
      %v1787 = vrot.slane %v1588, 6
      %v1788 = vrot.slane %v1588, 7
      %v1789 = vrot.slane %v1589, 1
      %v1790 = vrot.slane %v1589, 2
      %v1791 = vrot.slane %v1589, 3
      %v1792 = vrot.slane %v1589, 4
      %v1793 = vrot.slane %v1589, 5
      %v1794 = vrot.slane %v1589, 6
      %v1795 = vrot.slane %v1589, 7
      %v1796 = vrot.slane %v1590, 1
      %v1797 = vrot.slane %v1590, 2
      %v1798 = vrot.slane %v1590, 3
      %v1799 = vrot.slane %v1590, 4
      %v1800 = vrot.slane %v1590, 5
      %v1801 = vrot.slane %v1590, 6
      %v1802 = vrot.slane %v1590, 7
      %v1803 = vrot.slane %v1591, 1
      %v1804 = vrot.slane %v1591, 2
      %v1805 = vrot.slane %v1591, 3
      %v1806 = vrot.slane %v1591, 4
      %v1807 = vrot.slane %v1591, 5
      %v1808 = vrot.slane %v1591, 6
      %v1809 = vrot.slane %v1591, 7
      %v1810 = vrot.slane %v1592, 1
      %v1811 = vrot.slane %v1592, 2
      %v1812 = vrot.slane %v1592, 3
      %v1813 = vrot.slane %v1592, 4
      %v1814 = vrot.slane %v1592, 5
      %v1815 = vrot.slane %v1592, 6
      %v1816 = vrot.slane %v1592, 7
      %v1817 = vrot.slane %v1593, 1
      %v1818 = vrot.slane %v1593, 2
      %v1819 = vrot.slane %v1593, 3
      %v1820 = vrot.slane %v1593, 4
      %v1821 = vrot.slane %v1593, 5
      %v1822 = vrot.slane %v1593, 6
      %v1823 = vrot.slane %v1593, 7
      %v1824 = vrot.slane %v1594, 1
      %v1825 = vrot.slane %v1594, 2
      %v1826 = vrot.slane %v1594, 3
      %v1827 = vrot.slane %v1594, 4
      %v1828 = vrot.slane %v1594, 5
      %v1829 = vrot.slane %v1594, 6
      %v1830 = vrot.slane %v1594, 7
      %v1831 = vrot.slane %v1595, 1
      %v1832 = vrot.slane %v1595, 2
      %v1833 = vrot.slane %v1595, 3
      %v1834 = vrot.slane %v1595, 4
      %v1835 = vrot.slane %v1595, 5
      %v1836 = vrot.slane %v1595, 6
      %v1837 = vrot.slane %v1595, 7
      %v1838 = vrot.slane %v1596, 1
      %v1839 = vrot.slane %v1596, 2
      %v1840 = vrot.slane %v1596, 3
      %v1841 = vrot.slane %v1596, 4
      %v1842 = vrot.slane %v1596, 5
      %v1843 = vrot.slane %v1596, 6
      %v1844 = vrot.slane %v1596, 7
      %v1845 = vrot.slane %v1597, 1
      %v1846 = vrot.slane %v1597, 2
      %v1847 = vrot.slane %v1597, 3
      %v1848 = vrot.slane %v1597, 4
      %v1849 = vrot.slane %v1597, 5
      %v1850 = vrot.slane %v1597, 6
      %v1851 = vrot.slane %v1597, 7
      %v1852 = vrot.slane %v1598, 1
      %v1853 = vrot.slane %v1598, 2
      %v1854 = vrot.slane %v1598, 3
      %v1855 = vrot.slane %v1598, 4
      %v1856 = vrot.slane %v1598, 5
      %v1857 = vrot.slane %v1598, 6
      %v1858 = vrot.slane %v1598, 7
      %v1859 = vrot.slane %v1599, 1
      %v1860 = vrot.slane %v1599, 2
      %v1861 = vrot.slane %v1599, 3
      %v1862 = vrot.slane %v1599, 4
      %v1863 = vrot.slane %v1599, 5
      %v1864 = vrot.slane %v1599, 6
      %v1865 = vrot.slane %v1599, 7
      %v1866 = vrot.slane %v1600, 1
      %v1867 = vrot.slane %v1600, 2
      %v1868 = vrot.slane %v1600, 3
      %v1869 = vrot.slane %v1600, 4
      %v1870 = vrot.slane %v1600, 5
      %v1871 = vrot.slane %v1600, 6
      %v1872 = vrot.slane %v1600, 7
      %v1873 = vrot.slane %v1601, 1
      %v1874 = vrot.slane %v1601, 2
      %v1875 = vrot.slane %v1601, 3
      %v1876 = vrot.slane %v1601, 4
      %v1877 = vrot.slane %v1601, 5
      %v1878 = vrot.slane %v1601, 6
      %v1879 = vrot.slane %v1601, 7
      %v1880 = vrot.slane %v1602, 1
      %v1881 = vrot.slane %v1602, 2
      %v1882 = vrot.slane %v1602, 3
      %v1883 = vrot.slane %v1602, 4
      %v1884 = vrot.slane %v1602, 5
      %v1885 = vrot.slane %v1602, 6
      %v1886 = vrot.slane %v1602, 7
      %v1887 = vrot.slane %v1603, 1
      %v1888 = vrot.slane %v1603, 2
      %v1889 = vrot.slane %v1603, 3
      %v1890 = vrot.slane %v1603, 4
      %v1891 = vrot.slane %v1603, 5
      %v1892 = vrot.slane %v1603, 6
      %v1893 = vrot.slane %v1603, 7
      %v1894 = vrot.slane %v1604, 1
      %v1895 = vrot.slane %v1604, 2
      %v1896 = vrot.slane %v1604, 3
      %v1897 = vrot.slane %v1604, 4
      %v1898 = vrot.slane %v1604, 5
      %v1899 = vrot.slane %v1604, 6
      %v1900 = vrot.slane %v1604, 7
      %v1901 = vrot.slane %v1605, 1
      %v1902 = vrot.slane %v1605, 2
      %v1903 = vrot.slane %v1605, 3
      %v1904 = vrot.slane %v1605, 4
      %v1905 = vrot.slane %v1605, 5
      %v1906 = vrot.slane %v1605, 6
      %v1907 = vrot.slane %v1605, 7
      %v1908 = vrot.slane %v1606, 1
      %v1909 = vrot.slane %v1606, 2
      %v1910 = vrot.slane %v1606, 3
      %v1911 = vrot.slane %v1606, 4
      %v1912 = vrot.slane %v1606, 5
      %v1913 = vrot.slane %v1606, 6
      %v1914 = vrot.slane %v1606, 7
      %v1915 = vrot.slane %v1607, 1
      %v1916 = vrot.slane %v1607, 2
      %v1917 = vrot.slane %v1607, 3
      %v1918 = vrot.slane %v1607, 4
      %v1919 = vrot.slane %v1607, 5
      %v1920 = vrot.slane %v1607, 6
      %v1921 = vrot.slane %v1607, 7
      %v1922 = vrot.slane %v1608, 1
      %v1923 = vrot.slane %v1608, 2
      %v1924 = vrot.slane %v1608, 3
      %v1925 = vrot.slane %v1608, 4
      %v1926 = vrot.slane %v1608, 5
      %v1927 = vrot.slane %v1608, 6
      %v1928 = vrot.slane %v1608, 7
      %v1929 = vrot.slane %v1609, 1
      %v1930 = vrot.slane %v1609, 2
      %v1931 = vrot.slane %v1609, 3
      %v1932 = vrot.slane %v1609, 4
      %v1933 = vrot.slane %v1609, 5
      %v1934 = vrot.slane %v1609, 6
      %v1935 = vrot.slane %v1609, 7
      %v1936 = vrot.slane %v1610, 1
      %v1937 = vrot.slane %v1610, 2
      %v1938 = vrot.slane %v1610, 3
      %v1939 = vrot.slane %v1610, 4
      %v1940 = vrot.slane %v1610, 5
      %v1941 = vrot.slane %v1610, 6
      %v1942 = vrot.slane %v1610, 7
      %v1943 = vrot.slane %v1611, 1
      %v1944 = vrot.slane %v1611, 2
      %v1945 = vrot.slane %v1611, 3
      %v1946 = vrot.slane %v1611, 4
      %v1947 = vrot.slane %v1611, 5
      %v1948 = vrot.slane %v1611, 6
      %v1949 = vrot.slane %v1611, 7
      %v1950 = vrot.slane %v1612, 1
      %v1951 = vrot.slane %v1612, 2
      %v1952 = vrot.slane %v1612, 3
      %v1953 = vrot.slane %v1612, 4
      %v1954 = vrot.slane %v1612, 5
      %v1955 = vrot.slane %v1612, 6
      %v1956 = vrot.slane %v1612, 7
      %v1957 = vrot.slane %v1613, 1
      %v1958 = vrot.slane %v1613, 2
      %v1959 = vrot.slane %v1613, 3
      %v1960 = vrot.slane %v1613, 4
      %v1961 = vrot.slane %v1613, 5
      %v1962 = vrot.slane %v1613, 6
      %v1963 = vrot.slane %v1613, 7
      %v1964 = vrot.slane %v1614, 1
      %v1965 = vrot.slane %v1614, 2
      %v1966 = vrot.slane %v1614, 3
      %v1967 = vrot.slane %v1614, 4
      %v1968 = vrot.slane %v1614, 5
      %v1969 = vrot.slane %v1614, 6
      %v1970 = vrot.slane %v1614, 7
      %v1971 = vrot.slane %v1615, 1
      %v1972 = vrot.slane %v1615, 2
      %v1973 = vrot.slane %v1615, 3
      %v1974 = vrot.slane %v1615, 4
      %v1975 = vrot.slane %v1615, 5
      %v1976 = vrot.slane %v1615, 6
      %v1977 = vrot.slane %v1615, 7
      %v1978 = vrot.slane %v1616, 1
      %v1979 = vrot.slane %v1616, 2
      %v1980 = vrot.slane %v1616, 3
      %v1981 = vrot.slane %v1616, 4
      %v1982 = vrot.slane %v1616, 5
      %v1983 = vrot.slane %v1616, 6
      %v1984 = vrot.slane %v1616, 7
      %v1985 = vrot.slane %v1617, 1
      %v1986 = vrot.slane %v1617, 2
      %v1987 = vrot.slane %v1617, 3
      %v1988 = vrot.slane %v1617, 4
      %v1989 = vrot.slane %v1617, 5
      %v1990 = vrot.slane %v1617, 6
      %v1991 = vrot.slane %v1617, 7
      %v1992 = vrot.slane %v1618, 1
      %v1993 = vrot.slane %v1618, 2
      %v1994 = vrot.slane %v1618, 3
      %v1995 = vrot.slane %v1618, 4
      %v1996 = vrot.slane %v1618, 5
      %v1997 = vrot.slane %v1618, 6
      %v1998 = vrot.slane %v1618, 7
      %v1999 = vrot.slane %v1619, 1
      %v2000 = vrot.slane %v1619, 2
      %v2001 = vrot.slane %v1619, 3
      %v2002 = vrot.slane %v1619, 4
      %v2003 = vrot.slane %v1619, 5
      %v2004 = vrot.slane %v1619, 6
      %v2005 = vrot.slane %v1619, 7
      %v2006 = vrot.slane %v1620, 1
      %v2007 = vrot.slane %v1620, 2
      %v2008 = vrot.slane %v1620, 3
      %v2009 = vrot.slane %v1620, 4
      %v2010 = vrot.slane %v1620, 5
      %v2011 = vrot.slane %v1620, 6
      %v2012 = vrot.slane %v1620, 7
      %v2356 = vmax.f32 %v1572, %v1670
      %v2357 = vmax.f32 %v1676, %v1573
      %v2358 = vmax.f32 %v1682, %v1683
      %v2359 = vmax.f32 %v1688, %v1689
      %v2360 = vmax.f32 %v1694, %v1695
      %v2361 = vmax.f32 %v1700, %v1701
      %v2362 = vmax.f32 %v1706, %v1707
      %v2363 = vmax.f32 %v1712, %v1713
      %v2364 = vmax.f32 %v1579, %v1719
      %v2365 = vmax.f32 %v1725, %v1580
      %v2366 = vmax.f32 %v1731, %v1732
      %v2367 = vmax.f32 %v1737, %v1738
      %v2368 = vmax.f32 %v1743, %v1744
      %v2369 = vmax.f32 %v1749, %v1750
      %v2370 = vmax.f32 %v1755, %v1756
      %v2371 = vmax.f32 %v1761, %v1762
      %v2372 = vmax.f32 %v1586, %v1768
      %v2373 = vmax.f32 %v1774, %v1587
      %v2374 = vmax.f32 %v1780, %v1781
      %v2375 = vmax.f32 %v1786, %v1787
      %v2376 = vmax.f32 %v1792, %v1793
      %v2377 = vmax.f32 %v1798, %v1799
      %v2378 = vmax.f32 %v1804, %v1805
      %v2379 = vmax.f32 %v1810, %v1811
      %v2380 = vmax.f32 %v1593, %v1817
      %v2381 = vmax.f32 %v1823, %v1594
      %v2382 = vmax.f32 %v1829, %v1830
      %v2383 = vmax.f32 %v1835, %v1836
      %v2384 = vmax.f32 %v1841, %v1842
      %v2385 = vmax.f32 %v1847, %v1848
      %v2386 = vmax.f32 %v1853, %v1854
      %v2387 = vmax.f32 %v1859, %v1860
      %v2388 = vmax.f32 %v1600, %v1866
      %v2389 = vmax.f32 %v1872, %v1601
      %v2390 = vmax.f32 %v1878, %v1879
      %v2391 = vmax.f32 %v1884, %v1885
      %v2392 = vmax.f32 %v1890, %v1891
      %v2393 = vmax.f32 %v1896, %v1897
      %v2394 = vmax.f32 %v1902, %v1903
      %v2395 = vmax.f32 %v1908, %v1909
      %v2396 = vmax.f32 %v1607, %v1915
      %v2397 = vmax.f32 %v1921, %v1608
      %v2398 = vmax.f32 %v1927, %v1928
      %v2399 = vmax.f32 %v1933, %v1934
      %v2400 = vmax.f32 %v1939, %v1940
      %v2401 = vmax.f32 %v1945, %v1946
      %v2402 = vmax.f32 %v1951, %v1952
      %v2403 = vmax.f32 %v1957, %v1958
      %v2404 = vmax.f32 %v1614, %v1964
      %v2405 = vmax.f32 %v1970, %v1615
      %v2406 = vmax.f32 %v1976, %v1977
      %v2407 = vmax.f32 %v1982, %v1983
      %v2408 = vmax.f32 %v1988, %v1989
      %v2409 = vmax.f32 %v1994, %v1995
      %v2410 = vmax.f32 %v2000, %v2001
      %v2411 = vmax.f32 %v2006, %v2007
      %v2412 = vmax.f32 %v2356, %v1671
      %v2413 = vmax.f32 %v2357, %v1677
      %v2414 = vmax.f32 %v2358, %v1574
      %v2415 = vmax.f32 %v2359, %v1690
      %v2416 = vmax.f32 %v2360, %v1696
      %v2417 = vmax.f32 %v2361, %v1702
      %v2418 = vmax.f32 %v2362, %v1708
      %v2419 = vmax.f32 %v2363, %v1714
      %v2420 = vmax.f32 %v2364, %v1720
      %v2421 = vmax.f32 %v2365, %v1726
      %v2422 = vmax.f32 %v2366, %v1581
      %v2423 = vmax.f32 %v2367, %v1739
      %v2424 = vmax.f32 %v2368, %v1745
      %v2425 = vmax.f32 %v2369, %v1751
      %v2426 = vmax.f32 %v2370, %v1757
      %v2427 = vmax.f32 %v2371, %v1763
      %v2428 = vmax.f32 %v2372, %v1769
      %v2429 = vmax.f32 %v2373, %v1775
      %v2430 = vmax.f32 %v2374, %v1588
      %v2431 = vmax.f32 %v2375, %v1788
      %v2432 = vmax.f32 %v2376, %v1794
      %v2433 = vmax.f32 %v2377, %v1800
      %v2434 = vmax.f32 %v2378, %v1806
      %v2435 = vmax.f32 %v2379, %v1812
      %v2436 = vmax.f32 %v2380, %v1818
      %v2437 = vmax.f32 %v2381, %v1824
      %v2438 = vmax.f32 %v2382, %v1595
      %v2439 = vmax.f32 %v2383, %v1837
      %v2440 = vmax.f32 %v2384, %v1843
      %v2441 = vmax.f32 %v2385, %v1849
      %v2442 = vmax.f32 %v2386, %v1855
      %v2443 = vmax.f32 %v2387, %v1861
      %v2444 = vmax.f32 %v2388, %v1867
      %v2445 = vmax.f32 %v2389, %v1873
      %v2446 = vmax.f32 %v2390, %v1602
      %v2447 = vmax.f32 %v2391, %v1886
      %v2448 = vmax.f32 %v2392, %v1892
      %v2449 = vmax.f32 %v2393, %v1898
      %v2450 = vmax.f32 %v2394, %v1904
      %v2451 = vmax.f32 %v2395, %v1910
      %v2452 = vmax.f32 %v2396, %v1916
      %v2453 = vmax.f32 %v2397, %v1922
      %v2454 = vmax.f32 %v2398, %v1609
      %v2455 = vmax.f32 %v2399, %v1935
      %v2456 = vmax.f32 %v2400, %v1941
      %v2457 = vmax.f32 %v2401, %v1947
      %v2458 = vmax.f32 %v2402, %v1953
      %v2459 = vmax.f32 %v2403, %v1959
      %v2460 = vmax.f32 %v2404, %v1965
      %v2461 = vmax.f32 %v2405, %v1971
      %v2462 = vmax.f32 %v2406, %v1616
      %v2463 = vmax.f32 %v2407, %v1984
      %v2464 = vmax.f32 %v2408, %v1990
      %v2465 = vmax.f32 %v2409, %v1996
      %v2466 = vmax.f32 %v2410, %v2002
      %v2467 = vmax.f32 %v2411, %v2008
      %v2468 = vmax.f32 %v1671, %v1672
      %v2469 = vmax.f32 %v1677, %v1678
      %v2470 = vmax.f32 %v1574, %v1684
      %v2471 = vmax.f32 %v1690, %v1575
      %v2472 = vmax.f32 %v1696, %v1697
      %v2473 = vmax.f32 %v1702, %v1703
      %v2474 = vmax.f32 %v1708, %v1709
      %v2475 = vmax.f32 %v1714, %v1715
      %v2476 = vmax.f32 %v1720, %v1721
      %v2477 = vmax.f32 %v1726, %v1727
      %v2478 = vmax.f32 %v1581, %v1733
      %v2479 = vmax.f32 %v1739, %v1582
      %v2480 = vmax.f32 %v1745, %v1746
      %v2481 = vmax.f32 %v1751, %v1752
      %v2482 = vmax.f32 %v1757, %v1758
      %v2483 = vmax.f32 %v1763, %v1764
      %v2484 = vmax.f32 %v1769, %v1770
      %v2485 = vmax.f32 %v1775, %v1776
      %v2486 = vmax.f32 %v1588, %v1782
      %v2487 = vmax.f32 %v1788, %v1589
      %v2488 = vmax.f32 %v1794, %v1795
      %v2489 = vmax.f32 %v1800, %v1801
      %v2490 = vmax.f32 %v1806, %v1807
      %v2491 = vmax.f32 %v1812, %v1813
      %v2492 = vmax.f32 %v1818, %v1819
      %v2493 = vmax.f32 %v1824, %v1825
      %v2494 = vmax.f32 %v1595, %v1831
      %v2495 = vmax.f32 %v1837, %v1596
      %v2496 = vmax.f32 %v1843, %v1844
      %v2497 = vmax.f32 %v1849, %v1850
      %v2498 = vmax.f32 %v1855, %v1856
      %v2499 = vmax.f32 %v1861, %v1862
      %v2500 = vmax.f32 %v1867, %v1868
      %v2501 = vmax.f32 %v1873, %v1874
      %v2502 = vmax.f32 %v1602, %v1880
      %v2503 = vmax.f32 %v1886, %v1603
      %v2504 = vmax.f32 %v1892, %v1893
      %v2505 = vmax.f32 %v1898, %v1899
      %v2506 = vmax.f32 %v1904, %v1905
      %v2507 = vmax.f32 %v1910, %v1911
      %v2508 = vmax.f32 %v1916, %v1917
      %v2509 = vmax.f32 %v1922, %v1923
      %v2510 = vmax.f32 %v1609, %v1929
      %v2511 = vmax.f32 %v1935, %v1610
      %v2512 = vmax.f32 %v1941, %v1942
      %v2513 = vmax.f32 %v1947, %v1948
      %v2514 = vmax.f32 %v1953, %v1954
      %v2515 = vmax.f32 %v1959, %v1960
      %v2516 = vmax.f32 %v1965, %v1966
      %v2517 = vmax.f32 %v1971, %v1972
      %v2518 = vmax.f32 %v1616, %v1978
      %v2519 = vmax.f32 %v1984, %v1617
      %v2520 = vmax.f32 %v1990, %v1991
      %v2521 = vmax.f32 %v1996, %v1997
      %v2522 = vmax.f32 %v2002, %v2003
      %v2523 = vmax.f32 %v2008, %v2009
      %v2524 = vmax.f32 %v2468, %v1673
      %v2525 = vmax.f32 %v2469, %v1679
      %v2526 = vmax.f32 %v2470, %v1685
      %v2527 = vmax.f32 %v2471, %v1691
      %v2528 = vmax.f32 %v2472, %v1576
      %v2529 = vmax.f32 %v2473, %v1704
      %v2530 = vmax.f32 %v2474, %v1710
      %v2531 = vmax.f32 %v2475, %v1716
      %v2532 = vmax.f32 %v2476, %v1722
      %v2533 = vmax.f32 %v2477, %v1728
      %v2534 = vmax.f32 %v2478, %v1734
      %v2535 = vmax.f32 %v2479, %v1740
      %v2536 = vmax.f32 %v2480, %v1583
      %v2537 = vmax.f32 %v2481, %v1753
      %v2538 = vmax.f32 %v2482, %v1759
      %v2539 = vmax.f32 %v2483, %v1765
      %v2540 = vmax.f32 %v2484, %v1771
      %v2541 = vmax.f32 %v2485, %v1777
      %v2542 = vmax.f32 %v2486, %v1783
      %v2543 = vmax.f32 %v2487, %v1789
      %v2544 = vmax.f32 %v2488, %v1590
      %v2545 = vmax.f32 %v2489, %v1802
      %v2546 = vmax.f32 %v2490, %v1808
      %v2547 = vmax.f32 %v2491, %v1814
      %v2548 = vmax.f32 %v2492, %v1820
      %v2549 = vmax.f32 %v2493, %v1826
      %v2550 = vmax.f32 %v2494, %v1832
      %v2551 = vmax.f32 %v2495, %v1838
      %v2552 = vmax.f32 %v2496, %v1597
      %v2553 = vmax.f32 %v2497, %v1851
      %v2554 = vmax.f32 %v2498, %v1857
      %v2555 = vmax.f32 %v2499, %v1863
      %v2556 = vmax.f32 %v2500, %v1869
      %v2557 = vmax.f32 %v2501, %v1875
      %v2558 = vmax.f32 %v2502, %v1881
      %v2559 = vmax.f32 %v2503, %v1887
      %v2560 = vmax.f32 %v2504, %v1604
      %v2561 = vmax.f32 %v2505, %v1900
      %v2562 = vmax.f32 %v2506, %v1906
      %v2563 = vmax.f32 %v2507, %v1912
      %v2564 = vmax.f32 %v2508, %v1918
      %v2565 = vmax.f32 %v2509, %v1924
      %v2566 = vmax.f32 %v2510, %v1930
      %v2567 = vmax.f32 %v2511, %v1936
      %v2568 = vmax.f32 %v2512, %v1611
      %v2569 = vmax.f32 %v2513, %v1949
      %v2570 = vmax.f32 %v2514, %v1955
      %v2571 = vmax.f32 %v2515, %v1961
      %v2572 = vmax.f32 %v2516, %v1967
      %v2573 = vmax.f32 %v2517, %v1973
      %v2574 = vmax.f32 %v2518, %v1979
      %v2575 = vmax.f32 %v2519, %v1985
      %v2576 = vmax.f32 %v2520, %v1618
      %v2577 = vmax.f32 %v2521, %v1998
      %v2578 = vmax.f32 %v2522, %v2004
      %v2579 = vmax.f32 %v2523, %v2010
      %v2580 = vmax.f32 %v1673, %v1674
      %v2581 = vmax.f32 %v1679, %v1680
      %v2582 = vmax.f32 %v1685, %v1686
      %v2583 = vmax.f32 %v1691, %v1692
      %v2584 = vmax.f32 %v1576, %v1698
      %v2585 = vmax.f32 %v1704, %v1577
      %v2586 = vmax.f32 %v1710, %v1711
      %v2587 = vmax.f32 %v1716, %v1717
      %v2588 = vmax.f32 %v1722, %v1723
      %v2589 = vmax.f32 %v1728, %v1729
      %v2590 = vmax.f32 %v1734, %v1735
      %v2591 = vmax.f32 %v1740, %v1741
      %v2592 = vmax.f32 %v1583, %v1747
      %v2593 = vmax.f32 %v1753, %v1584
      %v2594 = vmax.f32 %v1759, %v1760
      %v2595 = vmax.f32 %v1765, %v1766
      %v2596 = vmax.f32 %v1771, %v1772
      %v2597 = vmax.f32 %v1777, %v1778
      %v2598 = vmax.f32 %v1783, %v1784
      %v2599 = vmax.f32 %v1789, %v1790
      %v2600 = vmax.f32 %v1590, %v1796
      %v2601 = vmax.f32 %v1802, %v1591
      %v2602 = vmax.f32 %v1808, %v1809
      %v2603 = vmax.f32 %v1814, %v1815
      %v2604 = vmax.f32 %v1820, %v1821
      %v2605 = vmax.f32 %v1826, %v1827
      %v2606 = vmax.f32 %v1832, %v1833
      %v2607 = vmax.f32 %v1838, %v1839
      %v2608 = vmax.f32 %v1597, %v1845
      %v2609 = vmax.f32 %v1851, %v1598
      %v2610 = vmax.f32 %v1857, %v1858
      %v2611 = vmax.f32 %v1863, %v1864
      %v2612 = vmax.f32 %v1869, %v1870
      %v2613 = vmax.f32 %v1875, %v1876
      %v2614 = vmax.f32 %v1881, %v1882
      %v2615 = vmax.f32 %v1887, %v1888
      %v2616 = vmax.f32 %v1604, %v1894
      %v2617 = vmax.f32 %v1900, %v1605
      %v2618 = vmax.f32 %v1906, %v1907
      %v2619 = vmax.f32 %v1912, %v1913
      %v2620 = vmax.f32 %v1918, %v1919
      %v2621 = vmax.f32 %v1924, %v1925
      %v2622 = vmax.f32 %v1930, %v1931
      %v2623 = vmax.f32 %v1936, %v1937
      %v2624 = vmax.f32 %v1611, %v1943
      %v2625 = vmax.f32 %v1949, %v1612
      %v2626 = vmax.f32 %v1955, %v1956
      %v2627 = vmax.f32 %v1961, %v1962
      %v2628 = vmax.f32 %v1967, %v1968
      %v2629 = vmax.f32 %v1973, %v1974
      %v2630 = vmax.f32 %v1979, %v1980
      %v2631 = vmax.f32 %v1985, %v1986
      %v2632 = vmax.f32 %v1618, %v1992
      %v2633 = vmax.f32 %v1998, %v1619
      %v2634 = vmax.f32 %v2004, %v2005
      %v2635 = vmax.f32 %v2010, %v2011
      %v2636 = vmax.f32 %v2580, %v1675
      %v2637 = vmax.f32 %v2581, %v1681
      %v2638 = vmax.f32 %v2582, %v1687
      %v2639 = vmax.f32 %v2583, %v1693
      %v2640 = vmax.f32 %v2584, %v1699
      %v2641 = vmax.f32 %v2585, %v1705
      %v2642 = vmax.f32 %v2586, %v1578
      %v2643 = vmax.f32 %v2587, %v1718
      %v2644 = vmax.f32 %v2588, %v1724
      %v2645 = vmax.f32 %v2589, %v1730
      %v2646 = vmax.f32 %v2590, %v1736
      %v2647 = vmax.f32 %v2591, %v1742
      %v2648 = vmax.f32 %v2592, %v1748
      %v2649 = vmax.f32 %v2593, %v1754
      %v2650 = vmax.f32 %v2594, %v1585
      %v2651 = vmax.f32 %v2595, %v1767
      %v2652 = vmax.f32 %v2596, %v1773
      %v2653 = vmax.f32 %v2597, %v1779
      %v2654 = vmax.f32 %v2598, %v1785
      %v2655 = vmax.f32 %v2599, %v1791
      %v2656 = vmax.f32 %v2600, %v1797
      %v2657 = vmax.f32 %v2601, %v1803
      %v2658 = vmax.f32 %v2602, %v1592
      %v2659 = vmax.f32 %v2603, %v1816
      %v2660 = vmax.f32 %v2604, %v1822
      %v2661 = vmax.f32 %v2605, %v1828
      %v2662 = vmax.f32 %v2606, %v1834
      %v2663 = vmax.f32 %v2607, %v1840
      %v2664 = vmax.f32 %v2608, %v1846
      %v2665 = vmax.f32 %v2609, %v1852
      %v2666 = vmax.f32 %v2610, %v1599
      %v2667 = vmax.f32 %v2611, %v1865
      %v2668 = vmax.f32 %v2612, %v1871
      %v2669 = vmax.f32 %v2613, %v1877
      %v2670 = vmax.f32 %v2614, %v1883
      %v2671 = vmax.f32 %v2615, %v1889
      %v2672 = vmax.f32 %v2616, %v1895
      %v2673 = vmax.f32 %v2617, %v1901
      %v2674 = vmax.f32 %v2618, %v1606
      %v2675 = vmax.f32 %v2619, %v1914
      %v2676 = vmax.f32 %v2620, %v1920
      %v2677 = vmax.f32 %v2621, %v1926
      %v2678 = vmax.f32 %v2622, %v1932
      %v2679 = vmax.f32 %v2623, %v1938
      %v2680 = vmax.f32 %v2624, %v1944
      %v2681 = vmax.f32 %v2625, %v1950
      %v2682 = vmax.f32 %v2626, %v1613
      %v2683 = vmax.f32 %v2627, %v1963
      %v2684 = vmax.f32 %v2628, %v1969
      %v2685 = vmax.f32 %v2629, %v1975
      %v2686 = vmax.f32 %v2630, %v1981
      %v2687 = vmax.f32 %v2631, %v1987
      %v2688 = vmax.f32 %v2632, %v1993
      %v2689 = vmax.f32 %v2633, %v1999
      %v2690 = vmax.f32 %v2634, %v1620
      %v2691 = vmax.f32 %v2635, %v2012
      %v2692 = vmax.f32 %v2412, %v2413
      %v2693 = vmax.f32 %v2419, %v2420
      %v2694 = vmax.f32 %v2426, %v2427
      %v2695 = vmax.f32 %v2433, %v2434
      %v2696 = vmax.f32 %v2440, %v2441
      %v2697 = vmax.f32 %v2447, %v2448
      %v2698 = vmax.f32 %v2454, %v2455
      %v2699 = vmax.f32 %v2461, %v2462
      %v2700 = vmax.f32 %v2692, %v2414
      %v2701 = vmax.f32 %v2693, %v2421
      %v2702 = vmax.f32 %v2694, %v2428
      %v2703 = vmax.f32 %v2695, %v2435
      %v2704 = vmax.f32 %v2696, %v2442
      %v2705 = vmax.f32 %v2697, %v2449
      %v2706 = vmax.f32 %v2698, %v2456
      %v2707 = vmax.f32 %v2699, %v2463
      %v2708 = vmax.f32 %v2524, %v2525
      %v2709 = vmax.f32 %v2531, %v2532
      %v2710 = vmax.f32 %v2538, %v2539
      %v2711 = vmax.f32 %v2545, %v2546
      %v2712 = vmax.f32 %v2552, %v2553
      %v2713 = vmax.f32 %v2559, %v2560
      %v2714 = vmax.f32 %v2566, %v2567
      %v2715 = vmax.f32 %v2573, %v2574
      %v2716 = vmax.f32 %v2708, %v2526
      %v2717 = vmax.f32 %v2709, %v2533
      %v2718 = vmax.f32 %v2710, %v2540
      %v2719 = vmax.f32 %v2711, %v2547
      %v2720 = vmax.f32 %v2712, %v2554
      %v2721 = vmax.f32 %v2713, %v2561
      %v2722 = vmax.f32 %v2714, %v2568
      %v2723 = vmax.f32 %v2715, %v2575
      %v2724 = vmax.f32 %v2636, %v2637
      %v2725 = vmax.f32 %v2643, %v2644
      %v2726 = vmax.f32 %v2650, %v2651
      %v2727 = vmax.f32 %v2657, %v2658
      %v2728 = vmax.f32 %v2664, %v2665
      %v2729 = vmax.f32 %v2671, %v2672
      %v2730 = vmax.f32 %v2678, %v2679
      %v2731 = vmax.f32 %v2685, %v2686
      %v2732 = vmax.f32 %v2724, %v2638
      %v2733 = vmax.f32 %v2725, %v2645
      %v2734 = vmax.f32 %v2726, %v2652
      %v2735 = vmax.f32 %v2727, %v2659
      %v2736 = vmax.f32 %v2728, %v2666
      %v2737 = vmax.f32 %v2729, %v2673
      %v2738 = vmax.f32 %v2730, %v2680
      %v2739 = vmax.f32 %v2731, %v2687
      %v2740 = vmax.f32 %v2414, %v2415
      %v2741 = vmax.f32 %v2421, %v2422
      %v2742 = vmax.f32 %v2428, %v2429
      %v2743 = vmax.f32 %v2435, %v2436
      %v2744 = vmax.f32 %v2442, %v2443
      %v2745 = vmax.f32 %v2449, %v2450
      %v2746 = vmax.f32 %v2456, %v2457
      %v2747 = vmax.f32 %v2463, %v2464
      %v2748 = vmax.f32 %v2740, %v2416
      %v2749 = vmax.f32 %v2741, %v2423
      %v2750 = vmax.f32 %v2742, %v2430
      %v2751 = vmax.f32 %v2743, %v2437
      %v2752 = vmax.f32 %v2744, %v2444
      %v2753 = vmax.f32 %v2745, %v2451
      %v2754 = vmax.f32 %v2746, %v2458
      %v2755 = vmax.f32 %v2747, %v2465
      %v2756 = vmax.f32 %v2526, %v2527
      %v2757 = vmax.f32 %v2533, %v2534
      %v2758 = vmax.f32 %v2540, %v2541
      %v2759 = vmax.f32 %v2547, %v2548
      %v2760 = vmax.f32 %v2554, %v2555
      %v2761 = vmax.f32 %v2561, %v2562
      %v2762 = vmax.f32 %v2568, %v2569
      %v2763 = vmax.f32 %v2575, %v2576
      %v2764 = vmax.f32 %v2756, %v2528
      %v2765 = vmax.f32 %v2757, %v2535
      %v2766 = vmax.f32 %v2758, %v2542
      %v2767 = vmax.f32 %v2759, %v2549
      %v2768 = vmax.f32 %v2760, %v2556
      %v2769 = vmax.f32 %v2761, %v2563
      %v2770 = vmax.f32 %v2762, %v2570
      %v2771 = vmax.f32 %v2763, %v2577
      %v2772 = vmax.f32 %v2638, %v2639
      %v2773 = vmax.f32 %v2645, %v2646
      %v2774 = vmax.f32 %v2652, %v2653
      %v2775 = vmax.f32 %v2659, %v2660
      %v2776 = vmax.f32 %v2666, %v2667
      %v2777 = vmax.f32 %v2673, %v2674
      %v2778 = vmax.f32 %v2680, %v2681
      %v2779 = vmax.f32 %v2687, %v2688
      %v2780 = vmax.f32 %v2772, %v2640
      %v2781 = vmax.f32 %v2773, %v2647
      %v2782 = vmax.f32 %v2774, %v2654
      %v2783 = vmax.f32 %v2775, %v2661
      %v2784 = vmax.f32 %v2776, %v2668
      %v2785 = vmax.f32 %v2777, %v2675
      %v2786 = vmax.f32 %v2778, %v2682
      %v2787 = vmax.f32 %v2779, %v2689
      %v2788 = vmax.f32 %v2416, %v2417
      %v2789 = vmax.f32 %v2423, %v2424
      %v2790 = vmax.f32 %v2430, %v2431
      %v2791 = vmax.f32 %v2437, %v2438
      %v2792 = vmax.f32 %v2444, %v2445
      %v2793 = vmax.f32 %v2451, %v2452
      %v2794 = vmax.f32 %v2458, %v2459
      %v2795 = vmax.f32 %v2465, %v2466
      %v2796 = vmax.f32 %v2788, %v2418
      %v2797 = vmax.f32 %v2789, %v2425
      %v2798 = vmax.f32 %v2790, %v2432
      %v2799 = vmax.f32 %v2791, %v2439
      %v2800 = vmax.f32 %v2792, %v2446
      %v2801 = vmax.f32 %v2793, %v2453
      %v2802 = vmax.f32 %v2794, %v2460
      %v2803 = vmax.f32 %v2795, %v2467
      %v2804 = vmax.f32 %v2528, %v2529
      %v2805 = vmax.f32 %v2535, %v2536
      %v2806 = vmax.f32 %v2542, %v2543
      %v2807 = vmax.f32 %v2549, %v2550
      %v2808 = vmax.f32 %v2556, %v2557
      %v2809 = vmax.f32 %v2563, %v2564
      %v2810 = vmax.f32 %v2570, %v2571
      %v2811 = vmax.f32 %v2577, %v2578
      %v2812 = vmax.f32 %v2804, %v2530
      %v2813 = vmax.f32 %v2805, %v2537
      %v2814 = vmax.f32 %v2806, %v2544
      %v2815 = vmax.f32 %v2807, %v2551
      %v2816 = vmax.f32 %v2808, %v2558
      %v2817 = vmax.f32 %v2809, %v2565
      %v2818 = vmax.f32 %v2810, %v2572
      %v2819 = vmax.f32 %v2811, %v2579
      %v2820 = vmax.f32 %v2640, %v2641
      %v2821 = vmax.f32 %v2647, %v2648
      %v2822 = vmax.f32 %v2654, %v2655
      %v2823 = vmax.f32 %v2661, %v2662
      %v2824 = vmax.f32 %v2668, %v2669
      %v2825 = vmax.f32 %v2675, %v2676
      %v2826 = vmax.f32 %v2682, %v2683
      %v2827 = vmax.f32 %v2689, %v2690
      %v2828 = vmax.f32 %v2820, %v2642
      %v2829 = vmax.f32 %v2821, %v2649
      %v2830 = vmax.f32 %v2822, %v2656
      %v2831 = vmax.f32 %v2823, %v2663
      %v2832 = vmax.f32 %v2824, %v2670
      %v2833 = vmax.f32 %v2825, %v2677
      %v2834 = vmax.f32 %v2826, %v2684
      %v2835 = vmax.f32 %v2827, %v2691
      %2844 = vst [vmem:[#allocation1] ss:$9 sm:$0xff] %v2700
      %s2845 = scalar_lea.vmem [#allocation1], 1
      %2846 = vst [vmem:[%s2845] ss:$9 sm:$0xff] %v2701
      %s2847 = scalar_lea.vmem [#allocation1], 2
      %2848 = vst [vmem:[%s2847] ss:$9 sm:$0xff] %v2702
      %s2849 = scalar_lea.vmem [#allocation1], 3
      %2850 = vst [vmem:[%s2849] ss:$9 sm:$0xff] %v2703
      %s2851 = scalar_lea.vmem [#allocation1], 4
      %2852 = vst [vmem:[%s2851] ss:$9 sm:$0xff] %v2704
      %s2853 = scalar_lea.vmem [#allocation1], 5
      %2854 = vst [vmem:[%s2853] ss:$9 sm:$0xff] %v2705
      %s2855 = scalar_lea.vmem [#allocation1], 6
      %2856 = vst [vmem:[%s2855] ss:$9 sm:$0xff] %v2706
      %s2857 = scalar_lea.vmem [#allocation1], 7
      %2858 = vst [vmem:[%s2857] ss:$9 sm:$0xff] %v2707
      %v2859 = vld [vmem:[#allocation1] sm:$0xff]
      %2869 = vst [vmem:[#allocation1] ss:$9 sm:$0xff] %v2716
      %s2870 = scalar_lea.vmem [#allocation1], 1
      %2871 = vst [vmem:[%s2870] ss:$9 sm:$0xff] %v2717
      %s2872 = scalar_lea.vmem [#allocation1], 2
      %2873 = vst [vmem:[%s2872] ss:$9 sm:$0xff] %v2718
      %s2874 = scalar_lea.vmem [#allocation1], 3
      %2875 = vst [vmem:[%s2874] ss:$9 sm:$0xff] %v2719
      %s2876 = scalar_lea.vmem [#allocation1], 4
      %2877 = vst [vmem:[%s2876] ss:$9 sm:$0xff] %v2720
      %s2878 = scalar_lea.vmem [#allocation1], 5
      %2879 = vst [vmem:[%s2878] ss:$9 sm:$0xff] %v2721
      %s2880 = scalar_lea.vmem [#allocation1], 6
      %2881 = vst [vmem:[%s2880] ss:$9 sm:$0xff] %v2722
      %s2882 = scalar_lea.vmem [#allocation1], 7
      %2883 = vst [vmem:[%s2882] ss:$9 sm:$0xff] %v2723
      %v2884 = vld [vmem:[#allocation1] sm:$0xff]
      %2894 = vst [vmem:[#allocation1] ss:$9 sm:$0xff] %v2732
      %s2895 = scalar_lea.vmem [#allocation1], 1
      %2896 = vst [vmem:[%s2895] ss:$9 sm:$0xff] %v2733
      %s2897 = scalar_lea.vmem [#allocation1], 2
      %2898 = vst [vmem:[%s2897] ss:$9 sm:$0xff] %v2734
      %s2899 = scalar_lea.vmem [#allocation1], 3
      %2900 = vst [vmem:[%s2899] ss:$9 sm:$0xff] %v2735
      %s2901 = scalar_lea.vmem [#allocation1], 4
      %2902 = vst [vmem:[%s2901] ss:$9 sm:$0xff] %v2736
      %s2903 = scalar_lea.vmem [#allocation1], 5
      %2904 = vst [vmem:[%s2903] ss:$9 sm:$0xff] %v2737
      %s2905 = scalar_lea.vmem [#allocation1], 6
      %2906 = vst [vmem:[%s2905] ss:$9 sm:$0xff] %v2738
      %s2907 = scalar_lea.vmem [#allocation1], 7
      %2908 = vst [vmem:[%s2907] ss:$9 sm:$0xff] %v2739
      %v2909 = vld [vmem:[#allocation1] sm:$0xff]
      %2919 = vst [vmem:[#allocation1] ss:$9 sm:$0xff] %v2748
      %s2920 = scalar_lea.vmem [#allocation1], 1
      %2921 = vst [vmem:[%s2920] ss:$9 sm:$0xff] %v2749
      %s2922 = scalar_lea.vmem [#allocation1], 2
      %2923 = vst [vmem:[%s2922] ss:$9 sm:$0xff] %v2750
      %s2924 = scalar_lea.vmem [#allocation1], 3
      %2925 = vst [vmem:[%s2924] ss:$9 sm:$0xff] %v2751
      %s2926 = scalar_lea.vmem [#allocation1], 4
      %2927 = vst [vmem:[%s2926] ss:$9 sm:$0xff] %v2752
      %s2928 = scalar_lea.vmem [#allocation1], 5
      %2929 = vst [vmem:[%s2928] ss:$9 sm:$0xff] %v2753
      %s2930 = scalar_lea.vmem [#allocation1], 6
      %2931 = vst [vmem:[%s2930] ss:$9 sm:$0xff] %v2754
      %s2932 = scalar_lea.vmem [#allocation1], 7
      %2933 = vst [vmem:[%s2932] ss:$9 sm:$0xff] %v2755
      %v2934 = vld [vmem:[#allocation1] sm:$0xff]
      %2944 = vst [vmem:[#allocation1] ss:$9 sm:$0xff] %v2764
      %s2945 = scalar_lea.vmem [#allocation1], 1
      %2946 = vst [vmem:[%s2945] ss:$9 sm:$0xff] %v2765
      %s2947 = scalar_lea.vmem [#allocation1], 2
      %2948 = vst [vmem:[%s2947] ss:$9 sm:$0xff] %v2766
      %s2949 = scalar_lea.vmem [#allocation1], 3
      %2950 = vst [vmem:[%s2949] ss:$9 sm:$0xff] %v2767
      %s2951 = scalar_lea.vmem [#allocation1], 4
      %2952 = vst [vmem:[%s2951] ss:$9 sm:$0xff] %v2768
      %s2953 = scalar_lea.vmem [#allocation1], 5
      %2954 = vst [vmem:[%s2953] ss:$9 sm:$0xff] %v2769
      %s2955 = scalar_lea.vmem [#allocation1], 6
      %2956 = vst [vmem:[%s2955] ss:$9 sm:$0xff] %v2770
      %s2957 = scalar_lea.vmem [#allocation1], 7
      %2958 = vst [vmem:[%s2957] ss:$9 sm:$0xff] %v2771
      %v2959 = vld [vmem:[#allocation1] sm:$0xff]
      %2969 = vst [vmem:[#allocation1] ss:$9 sm:$0xff] %v2780
      %s2970 = scalar_lea.vmem [#allocation1], 1
      %2971 = vst [vmem:[%s2970] ss:$9 sm:$0xff] %v2781
      %s2972 = scalar_lea.vmem [#allocation1], 2
      %2973 = vst [vmem:[%s2972] ss:$9 sm:$0xff] %v2782
      %s2974 = scalar_lea.vmem [#allocation1], 3
      %2975 = vst [vmem:[%s2974] ss:$9 sm:$0xff] %v2783
      %s2976 = scalar_lea.vmem [#allocation1], 4
      %2977 = vst [vmem:[%s2976] ss:$9 sm:$0xff] %v2784
      %s2978 = scalar_lea.vmem [#allocation1], 5
      %2979 = vst [vmem:[%s2978] ss:$9 sm:$0xff] %v2785
      %s2980 = scalar_lea.vmem [#allocation1], 6
      %2981 = vst [vmem:[%s2980] ss:$9 sm:$0xff] %v2786
      %s2982 = scalar_lea.vmem [#allocation1], 7
      %2983 = vst [vmem:[%s2982] ss:$9 sm:$0xff] %v2787
      %v2984 = vld [vmem:[#allocation1] sm:$0xff]
      %2994 = vst [vmem:[#allocation1] ss:$9 sm:$0xff] %v2796
      %s2995 = scalar_lea.vmem [#allocation1], 1
      %2996 = vst [vmem:[%s2995] ss:$9 sm:$0xff] %v2797
      %s2997 = scalar_lea.vmem [#allocation1], 2
      %2998 = vst [vmem:[%s2997] ss:$9 sm:$0xff] %v2798
      %s2999 = scalar_lea.vmem [#allocation1], 3
      %3000 = vst [vmem:[%s2999] ss:$9 sm:$0xff] %v2799
      %s3001 = scalar_lea.vmem [#allocation1], 4
      %3002 = vst [vmem:[%s3001] ss:$9 sm:$0xff] %v2800
      %s3003 = scalar_lea.vmem [#allocation1], 5
      %3004 = vst [vmem:[%s3003] ss:$9 sm:$0xff] %v2801
      %s3005 = scalar_lea.vmem [#allocation1], 6
      %3006 = vst [vmem:[%s3005] ss:$9 sm:$0xff] %v2802
      %s3007 = scalar_lea.vmem [#allocation1], 7
      %3008 = vst [vmem:[%s3007] ss:$9 sm:$0xff] %v2803
      %v3009 = vld [vmem:[#allocation1] sm:$0xff]
      %3019 = vst [vmem:[#allocation1] ss:$9 sm:$0xff] %v2812
      %s3020 = scalar_lea.vmem [#allocation1], 1
      %3021 = vst [vmem:[%s3020] ss:$9 sm:$0xff] %v2813
      %s3022 = scalar_lea.vmem [#allocation1], 2
      %3023 = vst [vmem:[%s3022] ss:$9 sm:$0xff] %v2814
      %s3024 = scalar_lea.vmem [#allocation1], 3
      %3025 = vst [vmem:[%s3024] ss:$9 sm:$0xff] %v2815
      %s3026 = scalar_lea.vmem [#allocation1], 4
      %3027 = vst [vmem:[%s3026] ss:$9 sm:$0xff] %v2816
      %s3028 = scalar_lea.vmem [#allocation1], 5
      %3029 = vst [vmem:[%s3028] ss:$9 sm:$0xff] %v2817
      %s3030 = scalar_lea.vmem [#allocation1], 6
      %3031 = vst [vmem:[%s3030] ss:$9 sm:$0xff] %v2818
      %s3032 = scalar_lea.vmem [#allocation1], 7
      %3033 = vst [vmem:[%s3032] ss:$9 sm:$0xff] %v2819
      %v3034 = vld [vmem:[#allocation1] sm:$0xff]
      %3044 = vst [vmem:[#allocation1] ss:$9 sm:$0xff] %v2828
      %s3045 = scalar_lea.vmem [#allocation1], 1
      %3046 = vst [vmem:[%s3045] ss:$9 sm:$0xff] %v2829
      %s3047 = scalar_lea.vmem [#allocation1], 2
      %3048 = vst [vmem:[%s3047] ss:$9 sm:$0xff] %v2830
      %s3049 = scalar_lea.vmem [#allocation1], 3
      %3050 = vst [vmem:[%s3049] ss:$9 sm:$0xff] %v2831
      %s3051 = scalar_lea.vmem [#allocation1], 4
      %3052 = vst [vmem:[%s3051] ss:$9 sm:$0xff] %v2832
      %s3053 = scalar_lea.vmem [#allocation1], 5
      %3054 = vst [vmem:[%s3053] ss:$9 sm:$0xff] %v2833
      %s3055 = scalar_lea.vmem [#allocation1], 6
      %3056 = vst [vmem:[%s3055] ss:$9 sm:$0xff] %v2834
      %s3057 = scalar_lea.vmem [#allocation1], 7
      %3058 = vst [vmem:[%s3057] ss:$9 sm:$0xff] %v2835
      %v3059 = vld [vmem:[#allocation1] sm:$0xff]
      %v3061 = vld [vmem:[%s5] sm:$0xff]
      %v3062 = vld [vmem:[%s5 + $0x8] sm:$0xff]
      %v3063 = vld [vmem:[%s5 + $0x10] sm:$0xff]
      %v3064 = vld [vmem:[%s5 + $0x18] sm:$0xff]
      %v3065 = vld [vmem:[%s5 + $0x20] sm:$0xff]
      %v3066 = vld [vmem:[%s5 + $0x28] sm:$0xff]
      %v3067 = vld [vmem:[%s5 + $0x30] sm:$0xff]
      %v3068 = vld [vmem:[%s5 + $0x38] sm:$0xff]
      %v3069 = vld [vmem:[%s5 + $0x40] sm:$0xff]
      %v3070 = vld [vmem:[%s5 + $0x48] sm:$0xff]
      %v3071 = vld [vmem:[%s5 + $0x50] sm:$0xff]
      %v3072 = vld [vmem:[%s5 + $0x58] sm:$0xff]
      %v3073 = vld [vmem:[%s5 + $0x60] sm:$0xff]
      %v3074 = vld [vmem:[%s5 + $0x68] sm:$0xff]
      %v3075 = vld [vmem:[%s5 + $0x70] sm:$0xff]
      %v3076 = vld [vmem:[%s5 + $0x78] sm:$0xff]
      %v3077 = vld [vmem:[%s5 + $0x80] sm:$0xff]
      %v3078 = vld [vmem:[%s5 + $0x88] sm:$0xff]
      %v3079 = vld [vmem:[%s5 + $0x90] sm:$0xff]
      %v3080 = vld [vmem:[%s5 + $0x98] sm:$0xff]
      %v3081 = vld [vmem:[%s5 + $0xa0] sm:$0xff]
      %v3082 = vld [vmem:[%s5 + $0xa8] sm:$0xff]
      %v3083 = vld [vmem:[%s5 + $0xb0] sm:$0xff]
      %v3084 = vld [vmem:[%s5 + $0xb8] sm:$0xff]
      %v3085 = vld [vmem:[%s5 + $0xc0] sm:$0xff]
      %v3086 = vld [vmem:[%s5 + $0xc8] sm:$0xff]
      %v3087 = vld [vmem:[%s5 + $0xd0] sm:$0xff]
      %v3088 = vld [vmem:[%s5 + $0xd8] sm:$0xff]
      %v3089 = vld [vmem:[%s5 + $0xe0] sm:$0xff]
      %v3090 = vld [vmem:[%s5 + $0xe8] sm:$0xff]
      %v3091 = vld [vmem:[%s5 + $0xf0] sm:$0xff]
      %v3092 = vld [vmem:[%s5 + $0xf8] sm:$0xff]
      %v3093 = vld [vmem:[%s5 + $0x100] sm:$0xff]
      %v3094 = vld [vmem:[%s5 + $0x108] sm:$0xff]
      %v3095 = vld [vmem:[%s5 + $0x110] sm:$0xff]
      %v3096 = vld [vmem:[%s5 + $0x118] sm:$0xff]
      %v3097 = vld [vmem:[%s5 + $0x120] sm:$0xff]
      %v3098 = vld [vmem:[%s5 + $0x128] sm:$0xff]
      %v3099 = vld [vmem:[%s5 + $0x130] sm:$0xff]
      %v3100 = vld [vmem:[%s5 + $0x138] sm:$0xff]
      %v3101 = vld [vmem:[%s5 + $0x140] sm:$0xff]
      %v3102 = vld [vmem:[%s5 + $0x148] sm:$0xff]
      %v3103 = vld [vmem:[%s5 + $0x150] sm:$0xff]
      %v3104 = vld [vmem:[%s5 + $0x158] sm:$0xff]
      %v3105 = vld [vmem:[%s5 + $0x160] sm:$0xff]
      %v3106 = vld [vmem:[%s5 + $0x168] sm:$0xff]
      %v3107 = vld [vmem:[%s5 + $0x170] sm:$0xff]
      %v3108 = vld [vmem:[%s5 + $0x178] sm:$0xff]
      %v3109 = vld [vmem:[%s5 + $0x180] sm:$0xff]
      %v3110 = vld [vmem:[%s5 + $0x188] sm:$0xff]
      %v3111 = vld [vmem:[%s5 + $0x190] sm:$0xff]
      %v3112 = vld [vmem:[%s5 + $0x198] sm:$0xff]
      %v3113 = vld [vmem:[%s5 + $0x1a0] sm:$0xff]
      %v3114 = vld [vmem:[%s5 + $0x1a8] sm:$0xff]
      %v3115 = vld [vmem:[%s5 + $0x1b0] sm:$0xff]
      %v3116 = vld [vmem:[%s5 + $0x1b8] sm:$0xff]
      %v3117 = vld [vmem:[%s5 + $0x1c0] sm:$0xff]
      %v3118 = vld [vmem:[%s5 + $0x1c8] sm:$0xff]
      %v3119 = vld [vmem:[%s5 + $0x1d0] sm:$0xff]
      %v3120 = vld [vmem:[%s5 + $0x1d8] sm:$0xff]
      %v3121 = vld [vmem:[%s5 + $0x1e0] sm:$0xff]
      %v3122 = vld [vmem:[%s5 + $0x1e8] sm:$0xff]
      %v3123 = vld [vmem:[%s5 + $0x1f0] sm:$0xff]
      %v3124 = vld [vmem:[%s5 + $0x1f8] sm:$0xff]
      %v3125 = vld [vmem:[%s5 + $0x200] sm:$0xff]
      %v3126 = vld [vmem:[%s5 + $0x208] sm:$0xff]
      %v3127 = vld [vmem:[%s5 + $0x210] sm:$0xff]
      %v3128 = vld [vmem:[%s5 + $0x218] sm:$0xff]
      %v3129 = vld [vmem:[%s5 + $0x220] sm:$0xff]
      %v3130 = vld [vmem:[%s5 + $0x228] sm:$0xff]
      %v3131 = vld [vmem:[%s5 + $0x230] sm:$0xff]
      %v3132 = vld [vmem:[%s5 + $0x238] sm:$0xff]
      %v3133 = vld [vmem:[%s5 + $0x240] sm:$0xff]
      %v3134 = vld [vmem:[%s5 + $0x248] sm:$0xff]
      %v3135 = vld [vmem:[%s5 + $0x250] sm:$0xff]
      %v3136 = vld [vmem:[%s5 + $0x258] sm:$0xff]
      %v3137 = vld [vmem:[%s5 + $0x260] sm:$0xff]
      %v3138 = vld [vmem:[%s5 + $0x268] sm:$0xff]
      %v3139 = vld [vmem:[%s5 + $0x270] sm:$0xff]
      %v3140 = vld [vmem:[%s5 + $0x278] sm:$0xff]
      %v3141 = vld [vmem:[%s5 + $0x280] sm:$0xff]
      %v3142 = vld [vmem:[%s5 + $0x288] sm:$0xff]
      %v3143 = vld [vmem:[%s5 + $0x290] sm:$0xff]
      %v3144 = vld [vmem:[%s5 + $0x298] sm:$0xff]
      %v3145 = vld [vmem:[%s5 + $0x2a0] sm:$0xff]
      %v3146 = vld [vmem:[%s5 + $0x2a8] sm:$0xff]
      %v3147 = vld [vmem:[%s5 + $0x2b0] sm:$0xff]
      %v3148 = vld [vmem:[%s5 + $0x2b8] sm:$0xff]
      %v3149 = vld [vmem:[%s5 + $0x2c0] sm:$0xff]
      %v3150 = vld [vmem:[%s5 + $0x2c8] sm:$0xff]
      %v3151 = vld [vmem:[%s5 + $0x2d0] sm:$0xff]
      %v3152 = vld [vmem:[%s5 + $0x2d8] sm:$0xff]
      %v3153 = vld [vmem:[%s5 + $0x2e0] sm:$0xff]
      %v3154 = vld [vmem:[%s5 + $0x2e8] sm:$0xff]
      %v3155 = vld [vmem:[%s5 + $0x2f0] sm:$0xff]
      %v3156 = vld [vmem:[%s5 + $0x2f8] sm:$0xff]
      %v3157 = vld [vmem:[%s5 + $0x300] sm:$0xff]
      %v3158 = vld [vmem:[%s5 + $0x308] sm:$0xff]
      %v3159 = vld [vmem:[%s5 + $0x310] sm:$0xff]
      %v3160 = vld [vmem:[%s5 + $0x318] sm:$0xff]
      %v3161 = vld [vmem:[%s5 + $0x320] sm:$0xff]
      %v3162 = vld [vmem:[%s5 + $0x328] sm:$0xff]
      %v3163 = vld [vmem:[%s5 + $0x330] sm:$0xff]
      %v3164 = vld [vmem:[%s5 + $0x338] sm:$0xff]
      %v3165 = vld [vmem:[%s5 + $0x340] sm:$0xff]
      %v3166 = vld [vmem:[%s5 + $0x348] sm:$0xff]
      %v3167 = vld [vmem:[%s5 + $0x350] sm:$0xff]
      %v3168 = vld [vmem:[%s5 + $0x358] sm:$0xff]
      %v3169 = vld [vmem:[%s5 + $0x360] sm:$0xff]
      %v3170 = vld [vmem:[%s5 + $0x368] sm:$0xff]
      %v3171 = vld [vmem:[%s5 + $0x370] sm:$0xff]
      %v3172 = vld [vmem:[%s5 + $0x378] sm:$0xff]
      %v3173 = vld [vmem:[%s5 + $0x380] sm:$0xff]
      %v3174 = vld [vmem:[%s5 + $0x388] sm:$0xff]
      %v3175 = vld [vmem:[%s5 + $0x390] sm:$0xff]
      %v3176 = vld [vmem:[%s5 + $0x398] sm:$0xff]
      %v3177 = vld [vmem:[%s5 + $0x3a0] sm:$0xff]
      %v3178 = vld [vmem:[%s5 + $0x3a8] sm:$0xff]
      %v3179 = vld [vmem:[%s5 + $0x3b0] sm:$0xff]
      %v3180 = vld [vmem:[%s5 + $0x3b8] sm:$0xff]
      %v3181 = vld [vmem:[%s5 + $0x3c0] sm:$0xff]
      %v3182 = vld [vmem:[%s5 + $0x3c8] sm:$0xff]
      %v3183 = vld [vmem:[%s5 + $0x3d0] sm:$0xff]
      %v3184 = vld [vmem:[%s5 + $0x3d8] sm:$0xff]
      %v3185 = vld [vmem:[%s5 + $0x3e0] sm:$0xff]
      %v3186 = vld [vmem:[%s5 + $0x3e8] sm:$0xff]
      %v3187 = vld [vmem:[%s5 + $0x3f0] sm:$0xff]
      %v3188 = vld [vmem:[%s5 + $0x3f8] sm:$0xff]
      %v3189 = vld [vmem:[%s5 + $0x400] sm:$0xff]
      %v3190 = vld [vmem:[%s5 + $0x408] sm:$0xff]
      %v3191 = vld [vmem:[%s5 + $0x410] sm:$0xff]
      %v3192 = vld [vmem:[%s5 + $0x418] sm:$0xff]
      %v3193 = vld [vmem:[%s5 + $0x420] sm:$0xff]
      %v3194 = vld [vmem:[%s5 + $0x428] sm:$0xff]
      %v3195 = vld [vmem:[%s5 + $0x430] sm:$0xff]
      %v3196 = vld [vmem:[%s5 + $0x438] sm:$0xff]
      %v3197 = vld [vmem:[%s5 + $0x440] sm:$0xff]
      %v3198 = vld [vmem:[%s5 + $0x448] sm:$0xff]
      %v3199 = vld [vmem:[%s5 + $0x450] sm:$0xff]
      %v3200 = vld [vmem:[%s5 + $0x458] sm:$0xff]
      %v3201 = vld [vmem:[%s5 + $0x460] sm:$0xff]
      %v3202 = vld [vmem:[%s5 + $0x468] sm:$0xff]
      %v3203 = vld [vmem:[%s5 + $0x470] sm:$0xff]
      %v3204 = vld [vmem:[%s5 + $0x478] sm:$0xff]
      %v3205 = vld [vmem:[#allocation2] sm:$0x1]
      %v3207 = vperm.slane %v3205, 0
      %3209 = vmatpush.msra.mxu0 %v3076
      %3210 = vmatpush.msra.mxu0 %v3075
      %3211 = vmatpush.msra.mxu0 %v3074
      %3212 = vmatpush.msra.mxu0 %v3073
      %3213 = vmatpush.msra.mxu0 %v3072
      %3214 = vmatpush.msra.mxu0 %v3071
      %3215 = vmatpush.msra.mxu0 %v3070
      %3216 = vmatpush.msra.mxu0 %v3069
      %3217 = vmatpush.msra.mxu0 %v3068
      %3218 = vmatpush.msra.mxu0 %v3067
      %3219 = vmatpush.msra.mxu0 %v3066
      %3220 = vmatpush.msra.mxu0 %v3065
      %3221 = vmatpush.msra.mxu0 %v3064
      %3222 = vmatpush.msra.mxu0 %v3063
      %3223 = vmatpush.msra.mxu0 %v3062
      %3224 = vmatpush.msra.mxu0 %v3061
      %3225 = vmatmul.f32.gmra.mxu0 %v2859
      %v3226 = vpop.f32.mrf.mxu0
      %v3227 = vadd.f32 %v3207, %v3226
      %3228 = vdwg.mxu0
      %3229 = vmatpush.msra.mxu0 %v3092
      %3230 = vmatpush.msra.mxu0 %v3091
      %3231 = vmatpush.msra.mxu0 %v3090
      %3232 = vmatpush.msra.mxu0 %v3089
      %3233 = vmatpush.msra.mxu0 %v3088
      %3234 = vmatpush.msra.mxu0 %v3087
      %3235 = vmatpush.msra.mxu0 %v3086
      %3236 = vmatpush.msra.mxu0 %v3085
      %3237 = vmatpush.msra.mxu0 %v3084
      %3238 = vmatpush.msra.mxu0 %v3083
      %3239 = vmatpush.msra.mxu0 %v3082
      %3240 = vmatpush.msra.mxu0 %v3081
      %3241 = vmatpush.msra.mxu0 %v3080
      %3242 = vmatpush.msra.mxu0 %v3079
      %3243 = vmatpush.msra.mxu0 %v3078
      %3244 = vmatpush.msra.mxu0 %v3077
      %3245 = vmatmul.f32.gmra.mxu0 %v2884
      %v3246 = vpop.f32.mrf.mxu0
      %v3247 = vadd.f32 %v3227, %v3246
      %3248 = vdwg.mxu0
      %3249 = vmatpush.msra.mxu0 %v3108
      %3250 = vmatpush.msra.mxu0 %v3107
      %3251 = vmatpush.msra.mxu0 %v3106
      %3252 = vmatpush.msra.mxu0 %v3105
      %3253 = vmatpush.msra.mxu0 %v3104
      %3254 = vmatpush.msra.mxu0 %v3103
      %3255 = vmatpush.msra.mxu0 %v3102
      %3256 = vmatpush.msra.mxu0 %v3101
      %3257 = vmatpush.msra.mxu0 %v3100
      %3258 = vmatpush.msra.mxu0 %v3099
      %3259 = vmatpush.msra.mxu0 %v3098
      %3260 = vmatpush.msra.mxu0 %v3097
      %3261 = vmatpush.msra.mxu0 %v3096
      %3262 = vmatpush.msra.mxu0 %v3095
      %3263 = vmatpush.msra.mxu0 %v3094
      %3264 = vmatpush.msra.mxu0 %v3093
      %3265 = vmatmul.f32.gmra.mxu0 %v2909
      %v3266 = vpop.f32.mrf.mxu0
      %v3267 = vadd.f32 %v3247, %v3266
      %3268 = vdwg.mxu0
      %3269 = vmatpush.msra.mxu0 %v3124
      %3270 = vmatpush.msra.mxu0 %v3123
      %3271 = vmatpush.msra.mxu0 %v3122
      %3272 = vmatpush.msra.mxu0 %v3121
      %3273 = vmatpush.msra.mxu0 %v3120
      %3274 = vmatpush.msra.mxu0 %v3119
      %3275 = vmatpush.msra.mxu0 %v3118
      %3276 = vmatpush.msra.mxu0 %v3117
      %3277 = vmatpush.msra.mxu0 %v3116
      %3278 = vmatpush.msra.mxu0 %v3115
      %3279 = vmatpush.msra.mxu0 %v3114
      %3280 = vmatpush.msra.mxu0 %v3113
      %3281 = vmatpush.msra.mxu0 %v3112
      %3282 = vmatpush.msra.mxu0 %v3111
      %3283 = vmatpush.msra.mxu0 %v3110
      %3284 = vmatpush.msra.mxu0 %v3109
      %3285 = vmatmul.f32.gmra.mxu0 %v2934
      %v3286 = vpop.f32.mrf.mxu0
      %v3287 = vadd.f32 %v3267, %v3286
      %3288 = vdwg.mxu0
      %3289 = vmatpush.msra.mxu0 %v3140
      %3290 = vmatpush.msra.mxu0 %v3139
      %3291 = vmatpush.msra.mxu0 %v3138
      %3292 = vmatpush.msra.mxu0 %v3137
      %3293 = vmatpush.msra.mxu0 %v3136
      %3294 = vmatpush.msra.mxu0 %v3135
      %3295 = vmatpush.msra.mxu0 %v3134
      %3296 = vmatpush.msra.mxu0 %v3133
      %3297 = vmatpush.msra.mxu0 %v3132
      %3298 = vmatpush.msra.mxu0 %v3131
      %3299 = vmatpush.msra.mxu0 %v3130
      %3300 = vmatpush.msra.mxu0 %v3129
      %3301 = vmatpush.msra.mxu0 %v3128
      %3302 = vmatpush.msra.mxu0 %v3127
      %3303 = vmatpush.msra.mxu0 %v3126
      %3304 = vmatpush.msra.mxu0 %v3125
      %3305 = vmatmul.f32.gmra.mxu0 %v2959
      %v3306 = vpop.f32.mrf.mxu0
      %v3307 = vadd.f32 %v3287, %v3306
      %3308 = vdwg.mxu0
      %3309 = vmatpush.msra.mxu0 %v3156
      %3310 = vmatpush.msra.mxu0 %v3155
      %3311 = vmatpush.msra.mxu0 %v3154
      %3312 = vmatpush.msra.mxu0 %v3153
      %3313 = vmatpush.msra.mxu0 %v3152
      %3314 = vmatpush.msra.mxu0 %v3151
      %3315 = vmatpush.msra.mxu0 %v3150
      %3316 = vmatpush.msra.mxu0 %v3149
      %3317 = vmatpush.msra.mxu0 %v3148
      %3318 = vmatpush.msra.mxu0 %v3147
      %3319 = vmatpush.msra.mxu0 %v3146
      %3320 = vmatpush.msra.mxu0 %v3145
      %3321 = vmatpush.msra.mxu0 %v3144
      %3322 = vmatpush.msra.mxu0 %v3143
      %3323 = vmatpush.msra.mxu0 %v3142
      %3324 = vmatpush.msra.mxu0 %v3141
      %3325 = vmatmul.f32.gmra.mxu0 %v2984
      %v3326 = vpop.f32.mrf.mxu0
      %v3327 = vadd.f32 %v3307, %v3326
      %3328 = vdwg.mxu0
      %3329 = vmatpush.msra.mxu0 %v3172
      %3330 = vmatpush.msra.mxu0 %v3171
      %3331 = vmatpush.msra.mxu0 %v3170
      %3332 = vmatpush.msra.mxu0 %v3169
      %3333 = vmatpush.msra.mxu0 %v3168
      %3334 = vmatpush.msra.mxu0 %v3167
      %3335 = vmatpush.msra.mxu0 %v3166
      %3336 = vmatpush.msra.mxu0 %v3165
      %3337 = vmatpush.msra.mxu0 %v3164
      %3338 = vmatpush.msra.mxu0 %v3163
      %3339 = vmatpush.msra.mxu0 %v3162
      %3340 = vmatpush.msra.mxu0 %v3161
      %3341 = vmatpush.msra.mxu0 %v3160
      %3342 = vmatpush.msra.mxu0 %v3159
      %3343 = vmatpush.msra.mxu0 %v3158
      %3344 = vmatpush.msra.mxu0 %v3157
      %3345 = vmatmul.f32.gmra.mxu0 %v3009
      %v3346 = vpop.f32.mrf.mxu0
      %v3347 = vadd.f32 %v3327, %v3346
      %3348 = vdwg.mxu0
      %3349 = vmatpush.msra.mxu0 %v3188
      %3350 = vmatpush.msra.mxu0 %v3187
      %3351 = vmatpush.msra.mxu0 %v3186
      %3352 = vmatpush.msra.mxu0 %v3185
      %3353 = vmatpush.msra.mxu0 %v3184
      %3354 = vmatpush.msra.mxu0 %v3183
      %3355 = vmatpush.msra.mxu0 %v3182
      %3356 = vmatpush.msra.mxu0 %v3181
      %3357 = vmatpush.msra.mxu0 %v3180
      %3358 = vmatpush.msra.mxu0 %v3179
      %3359 = vmatpush.msra.mxu0 %v3178
      %3360 = vmatpush.msra.mxu0 %v3177
      %3361 = vmatpush.msra.mxu0 %v3176
      %3362 = vmatpush.msra.mxu0 %v3175
      %3363 = vmatpush.msra.mxu0 %v3174
      %3364 = vmatpush.msra.mxu0 %v3173
      %3365 = vmatmul.f32.gmra.mxu0 %v3034
      %v3366 = vpop.f32.mrf.mxu0
      %v3367 = vadd.f32 %v3347, %v3366
      %3368 = vdwg.mxu0
      %3369 = vmatpush.msra.mxu0 %v3204
      %3370 = vmatpush.msra.mxu0 %v3203
      %3371 = vmatpush.msra.mxu0 %v3202
      %3372 = vmatpush.msra.mxu0 %v3201
      %3373 = vmatpush.msra.mxu0 %v3200
      %3374 = vmatpush.msra.mxu0 %v3199
      %3375 = vmatpush.msra.mxu0 %v3198
      %3376 = vmatpush.msra.mxu0 %v3197
      %3377 = vmatpush.msra.mxu0 %v3196
      %3378 = vmatpush.msra.mxu0 %v3195
      %3379 = vmatpush.msra.mxu0 %v3194
      %3380 = vmatpush.msra.mxu0 %v3193
      %3381 = vmatpush.msra.mxu0 %v3192
      %3382 = vmatpush.msra.mxu0 %v3191
      %3383 = vmatpush.msra.mxu0 %v3190
      %3384 = vmatpush.msra.mxu0 %v3189
      %3385 = vmatmul.f32.gmra.mxu0 %v3059
      %v3386 = vpop.f32.mrf.mxu0
      %v3387 = vadd.f32 %v3367, %v3386
      %3388 = vdwg.mxu0
      %v3389 = vsub.f32 0.0, %v3387
      %v3390 = vmul.f32 %v3389, 1.442695
      %v3391 = vpow.pop %v3390
      %v3392 = vadd.f32 %v3391, 1.0
      %v3393 = vrcp.pop %v3392
      %v3394 = vmul.f32 %v3392, %v3393
      %v3395 = vsub.f32 1.0, %v3394
      %v3396 = vmul.f32 %v3393, %v3395
      %v3397 = vadd.f32 %v3393, %v3396
      %vm3398 = vweird.f32 %v3392
      %vm3399 = vweird.f32 %v3393
      %vm3400 = vmor %vm3398, %vm3399
      %v3401 = vsel %vm3400, %v3393, %v3397
      %v3402 = vand.u32 2147483647, %v3392
      %vm3403 = vcmp.eq.f32.partialorder %v3402, 8.507059e+37
      %v3404 = vand.u32 %v3392, 2147483648
      %v3405 = vor.u32 1.1754944e-38, %v3404
      %v3406 = vsel %vm3403, %v3405, %v3401
      %v3407 = vmul.f32 1.0, %v3406
      %vm3408 = vcmask 7168
      %3409 = vst.msk [vmem:[%s280] sm:$0xff] %vm3408, %v3407
      %p3410 = scmp.lt.s32.totalorder %s20, 1
      %s3411 = scalar_select %p3410, %s20, 1
      %s3412 = smul.addr %s3411, 8
      %s3413 = scalar_lea.vmem %s7, %s3412
      // Predicated region
      $region49: #{discriminator_forward.1} parent=47 // pred_check
        %p3414 = pneg %p190
      $region50: #{discriminator_forward.1} parent=47 // pred_check_branch
        %3416 = sbr.rel (%p3414) target = $region52
      $region51: #{discriminator_forward.1} parent=47 // pred_region
        _
      $region52: #{discriminator_forward.1} parent=47 // pred_fallthru
        _
    $region48: #{discriminator_forward.1} parent=5 // pred_fallthru
      _
    %p3417 = scmp.le.s32.totalorder 2, %s15
    // Predicated region
    $region53: #{discriminator_forward.1} parent=5 // pred_check
      %p3418 = pneg %p3417
    $region54: #{discriminator_forward.1} parent=5 // pred_check_branch
      %3420 = sbr.rel (%p3418) target = $region56
    $region55: #{discriminator_forward.1} parent=5 // pred_region
      %s3421 = ssub.s32 %s15, 2
      // Predicated region
      $region57: #{discriminator_forward.1} parent=55 // pred_check
        %p3422 = pneg %p196
      $region58: #{discriminator_forward.1} parent=55 // pred_check_branch
        %3424 = sbr.rel (%p3422) target = $region60
      $region59: #{discriminator_forward.1} parent=55 // pred_region
        %p3425 = scmp.lt.s32.totalorder %s21, 1
        %s3426 = scalar_select %p3425, %s21, 1
        %s3427 = smul.addr %s3426, 8
        %s3428 = scalar_lea.vmem %s7, %s3427
      $region60: #{discriminator_forward.1} parent=55 // pred_fallthru
        _
    $region56: #{discriminator_forward.1} parent=5 // pred_fallthru
      _
  $region6: #{discriminator_forward.1} parent=0 // loop_footer
    %s19 = sadd.s32 1, %s15
  $region7: #{discriminator_forward.1} parent=0 // loop_footer_branch
    %14 = sbr.rel target = $region3
  $region8: #{discriminator_forward.1} parent=0 // loop_exit
    _

</llo_original>
